<compile_context>
chip_gen: v6e
topology: v6e:2x2x1
jax: 0.10.0
libtpu: 0.0.40
codegen_flags: <defaults>
</compile_context>

<pallas_src>
import jax
import jax.numpy as jnp
from jax.experimental import pallas as pl
from jax.experimental.pallas import tpu as pltpu

EPS = 1e-5


# --------------------------------------------------------------------------
# Generation-aware VMEM budget
# --------------------------------------------------------------------------
def _pick_vmem_limit():
    cap = 64 * 1024 * 1024                      # conservative fallback (v7x per-TC)
    try:
        cap = int(pltpu.get_tpu_info().vmem_capacity_bytes)
    except Exception:
        pass
    # ~25% headroom for double-buffering / compiler scratch; never above 100 MiB.
    return min((cap * 3) // 4, 100 * 1024 * 1024)


_VMEM_LIMIT_BYTES = _pick_vmem_limit()


# --------------------------------------------------------------------------
# In-kernel helpers
# --------------------------------------------------------------------------
def _conv3x3_acc(pad_ref, w_ref, Hp, Wp):
    """3x3 'SAME' conv as 9 accumulating K=C matmuls over a zero-padded scratch.

    pad_ref: (Hp+2, Wp+2, C) bf16 VMEM scratch (halo already zeroed, center
    holds the activation).  w_ref: (9*C, Cout) bf16, tap-major (kh, kw, cin).
    Returns a (Hp*Wp, Cout) f32 accumulator.
    """
    C = pad_ref.shape[-1]
    cout = w_ref.shape[-1]
    acc = jnp.zeros((Hp * Wp, cout), jnp.float32)
    for t in range(9):
        di, dj = t // 3, t % 3
        tap = pad_ref[di:di + Hp, dj:dj + Wp, :].reshape(Hp * Wp, C)
        acc = acc + jnp.dot(tap, w_ref[t * C:(t + 1) * C, :],
                            preferred_element_type=jnp.float32)
    return acc


def _write_out_and_stats(acc, o_ref, stats_ref, Hp, Wp):
    """Store the pre-BN conv output (bf16) + per-sample channel sum / sumsq (f32)."""
    o_ref[0] = acc.reshape(Hp, Wp, -1).astype(o_ref.dtype)
    stats_ref[0] = jnp.concatenate(
        [jnp.sum(acc, axis=0, keepdims=True),
         jnp.sum(acc * acc, axis=0, keepdims=True)], axis=0)       # (2, Cout) f32


# --------------------------------------------------------------------------
# Kernels
# --------------------------------------------------------------------------
def _pool_conv_kernel(x_ref, w_ref, o_ref, stats_ref, pad_ref):
    # x_ref: (1, Hp, 2, Wp, 2*Cin) f32 — pool rows on dim 2, pool cols folded in lanes.
    _, Hp, _, Wp, C2 = x_ref.shape
    cin = C2 // 2
    xv = x_ref[0]                                          # (Hp, 2, Wp, 2*Cin)
    xm = jnp.maximum(xv[:, 0], xv[:, 1])                   # max over pool rows
    pooled = jnp.maximum(xm[..., :cin], xm[..., cin:])     # max over pool cols
    pad_ref[...] = jnp.zeros_like(pad_ref)                 # re-zero halo each step
    pad_ref[1:Hp + 1, 1:Wp + 1, :] = pooled.astype(pad_ref.dtype)
    acc = _conv3x3_acc(pad_ref, w_ref, Hp, Wp)
    _write_out_and_stats(acc, o_ref, stats_ref, Hp, Wp)


def _bnrelu_conv_kernel(y_ref, scale_ref, shift_ref, w_ref, o_ref, stats_ref, pad_ref):
    # y_ref: (1, Hp, Wp, Cmid) bf16 pre-BN conv1 output; scale/shift: (1, Cmid) f32.
    _, Hp, Wp, _ = y_ref.shape
    h = jnp.maximum(y_ref[0].astype(jnp.float32) * scale_ref[...] + shift_ref[...], 0.0)
    pad_ref[...] = jnp.zeros_like(pad_ref)
    pad_ref[1:Hp + 1, 1:Wp + 1, :] = h.astype(pad_ref.dtype)
    acc = _conv3x3_acc(pad_ref, w_ref, Hp, Wp)
    _write_out_and_stats(acc, o_ref, stats_ref, Hp, Wp)


# --------------------------------------------------------------------------
# Host-side glue
# --------------------------------------------------------------------------
def _bn_affine(stats, gamma, beta, count):
    """Fold per-sample (sum, sumsq) into per-channel BN scale/shift (training mode).

    NOTE: var = E[x^2] - E[x]^2 in f32 can cancel badly when |mean| >> std;
    fine here because conv outputs are near zero-mean (zero-mean weights).
    """
    s = jnp.sum(stats, axis=0)                       # (2, C) f32
    mean = s[0] / count
    var = s[1] / count - mean * mean                 # biased variance
    scale = gamma.reshape(-1) * jax.lax.rsqrt(var + EPS)
    shift = beta.reshape(-1) - mean * scale
    return scale.reshape(1, -1), shift.reshape(1, -1)


@jax.jit
def down_forward(x_nchw, params):
    """Down.forward.  x_nchw: (N, Cin, H, W) f32 -> (N, Cout, H//2, W//2) f32."""
    w1, b1, g1, be1, w2, b2, g2, be2 = params
    del b1, b2           # per-channel bias before training-mode BN cancels exactly
    N, Cin, H, W = x_nchw.shape
    assert H % 2 == 0 and W % 2 == 0, "MaxPool2d(2) path assumes even H, W"
    Hp, Wp = H // 2, W // 2
    Cmid, Cout = w1.shape[-1], w2.shape[-1]
    count = N * Hp * Wp

    # NCHW -> NHWC once (channels on lanes), then a free contiguous reshape
    # exposing the 2x2 pool window (no 6-D transpose).
    x = jnp.transpose(x_nchw, (0, 2, 3, 1))
    xw = x.reshape(N, Hp, 2, Wp, 2 * Cin)

    # bf16 matmul operands (MXU-native); accumulation stays f32.
    w1f = w1.reshape(9 * Cin, Cmid).astype(jnp.bfloat16)
    w2f = w2.reshape(9 * Cmid, Cout).astype(jnp.bfloat16)

    cparams = pltpu.CompilerParams(
        dimension_semantics=("parallel",),
        vmem_limit_bytes=_VMEM_LIMIT_BYTES)

    # ---- pass 1: maxpool + conv1 + BN1 partial stats ----
    y1, st1 = pl.pallas_call(
        _pool_conv_kernel,
        grid=(N,),
        in_specs=[
            pl.BlockSpec((1, Hp, 2, Wp, 2 * Cin), lambda n: (n, 0, 0, 0, 0)),
            pl.BlockSpec((9 * Cin, Cmid), lambda n: (0, 0)),
        ],
        out_specs=(
            pl.BlockSpec((1, Hp, Wp, Cmid), lambda n: (n, 0, 0, 0)),
            pl.BlockSpec((1, 2, Cmid), lambda n: (n, 0, 0)),
        ),
        out_shape=(
            jax.ShapeDtypeStruct((N, Hp, Wp, Cmid), jnp.bfloat16),
            jax.ShapeDtypeStruct((N, 2, Cmid), jnp.float32),
        ),
        scratch_shapes=[pltpu.VMEM((Hp + 2, Wp + 2, Cin), jnp.bfloat16)],
        compiler_params=cparams,
        cost_estimate=pl.CostEstimate(
            flops=2 * count * 9 * Cin * Cmid,
            transcendentals=0,
            bytes_accessed=(4 * N * H * W * Cin + 2 * 9 * Cin * Cmid
                            + 2 * count * Cmid + 4 * N * 2 * Cmid)),
    )(xw, w1f)

    sc1, sh1 = _bn_affine(st1, g1, be1, count)

    # ---- pass 2: BN1 + ReLU + conv2 + BN2 partial stats ----
    y2, st2 = pl.pallas_call(
        _bnrelu_conv_kernel,
        grid=(N,),
        in_specs=[
            pl.BlockSpec((1, Hp, Wp, Cmid), lambda n: (n, 0, 0, 0)),
            pl.BlockSpec((1, Cmid), lambda n: (0, 0)),
            pl.BlockSpec((1, Cmid), lambda n: (0, 0)),
            pl.BlockSpec((9 * Cmid, Cout), lambda n: (0, 0)),
        ],
        out_specs=(
            pl.BlockSpec((1, Hp, Wp, Cout), lambda n: (n, 0, 0, 0)),
            pl.BlockSpec((1, 2, Cout), lambda n: (n, 0, 0)),
        ),
        out_shape=(
            jax.ShapeDtypeStruct((N, Hp, Wp, Cout), jnp.bfloat16),
            jax.ShapeDtypeStruct((N, 2, Cout), jnp.float32),
        ),
        scratch_shapes=[pltpu.VMEM((Hp + 2, Wp + 2, Cmid), jnp.bfloat16)],
        compiler_params=cparams,
        cost_estimate=pl.CostEstimate(
            flops=2 * count * 9 * Cmid * Cout,
            transcendentals=0,
            bytes_accessed=(2 * count * Cmid + 2 * 9 * Cmid * Cout
                            + 2 * count * Cout + 4 * N * 2 * Cout)),
    )(y1, sc1, sh1, w2f)

    sc2, sh2 = _bn_affine(st2, g2, be2, count)

    # ---- pass 3: BN2 affine + ReLU, fused by XLA with the NHWC->NCHW output
    #      transpose (single bf16 read of y2, single f32 NCHW write).
    out = jnp.maximum(y2.astype(jnp.float32) * sc2.reshape(1, 1, 1, -1)
                      + sh2.reshape(1, 1, 1, -1), 0.0)
    return jnp.transpose(out, (0, 3, 1, 2))


# --------------------------------------------------------------------------
# Parameters + pure-JAX reference
# --------------------------------------------------------------------------
def init_params(key, cin, cout):
    """Deterministic synthetic parameters (shapes match Down(cin, cout))."""
    ks = jax.random.split(key, 8)
    w1 = 0.1 * jax.random.normal(ks[0], (3, 3, cin, cout), jnp.float32)   # HWIO
    b1 = 0.1 * jax.random.normal(ks[1], (1, cout), jnp.float32)
    g1 = 1.0 + 0.05 * jax.random.normal(ks[2], (1, cout), jnp.float32)    # BN weight
    be1 = 0.05 * jax.random.normal(ks[3], (1, cout), jnp.float32)         # BN bias
    w2 = 0.1 * jax.random.normal(ks[4], (3, 3, cout, cout), jnp.float32)
    b2 = 0.1 * jax.random.normal(ks[5], (1, cout), jnp.float32)
    g2 = 1.0 + 0.05 * jax.random.normal(ks[6], (1, cout), jnp.float32)
    be2 = 0.05 * jax.random.normal(ks[7], (1, cout), jnp.float32)
    return (w1, b1, g1, be1, w2, b2, g2, be2)


def ref_forward(x_nchw, params):
    """Pure-JAX f32 reference of Down.forward (training-mode BN, with conv biases)."""
    w1, b1, g1, be1, w2, b2, g2, be2 = params
    x = jnp.transpose(x_nchw, (0, 2, 3, 1))
    p = jax.lax.reduce_window(x, -jnp.inf, jax.lax.max,
                              (1, 2, 2, 1), (1, 2, 2, 1), 'VALID')

    def block(h, w, b, g, be):
        y = jax.lax.conv_general_dilated(
            h, w, (1, 1), 'SAME',
            dimension_numbers=('NHWC', 'HWIO', 'NHWC'),
            precision=jax.lax.Precision.HIGHEST)
        y = y + b.reshape(1, 1, 1, -1)
        mean = jnp.mean(y, axis=(0, 1, 2), keepdims=True)
        var = jnp.mean((y - mean) ** 2, axis=(0, 1, 2), keepdims=True)
        y = (y - mean) * jax.lax.rsqrt(var + EPS)
        y = y * g.reshape(1, 1, 1, -1) + be.reshape(1, 1, 1, -1)
        return jnp.maximum(y, 0.0)

    h = block(p, w1, b1, g1, be1)
    y = block(h, w2, b2, g2, be2)
    return jnp.transpose(y, (0, 3, 1, 2))


if __name__ == "__main__":
    key = jax.random.PRNGKey(0)
    kx, kp = jax.random.split(key)

    N, Cin, H, W = 2, 4, 16, 16
    Cout = 8

    x = jax.random.normal(kx, (N, Cin, H, W), jnp.float32)
    params = init_params(kp, Cin, Cout)

    out = jax.block_until_ready(down_forward(x, params))
    ref = ref_forward(x, params)

    assert out.shape == (N, Cout, H // 2, W // 2), out.shape
    max_err = float(jnp.max(jnp.abs(out - ref)))
    # bf16 matmul operands + bf16 inter-pass activations vs the f32 HIGHEST
    # reference: tolerance relaxed accordingly (typical max err ~1e-2 here).
    assert jnp.allclose(out, ref, atol=5e-2, rtol=5e-2), max_err

    print("KERNEL_OK")
</pallas_src>

<mosaic_0001>
module attributes {stable_mosaic.version = 11 : i64} {
  func.func @_bnrelu_conv_kernel(%arg0: i32, %arg1: memref<1x8x8x8xbf16, #tpu.memory_space<vmem>>, %arg2: memref<1x8xf32, #tpu.memory_space<vmem>>, %arg3: memref<1x8xf32, #tpu.memory_space<vmem>>, %arg4: memref<72x8xbf16, #tpu.memory_space<vmem>>, %arg5: memref<1x8x8x8xbf16, #tpu.memory_space<vmem>>, %arg6: memref<1x2x8xf32, #tpu.memory_space<vmem>>, %arg7: memref<10x10x8xbf16, #tpu.memory_space<vmem>>) attributes {dimension_semantics = [#tpu.dimension_semantics<parallel>], iteration_bounds = array<i64: 2>, scalar_prefetch = 0 : i64, scratch_operands = 1 : i64, tpu.core_type = #tpu.core_type<tc>, window_params = [{transform_indices = @transform_0, window_bounds = array<i64: 1, 8, 8, 8>}, {pipeline_mode = #tpu.pipeline_mode<synchronous>, transform_indices = @transform_1, window_bounds = array<i64: 1, 8>}, {pipeline_mode = #tpu.pipeline_mode<synchronous>, transform_indices = @transform_2, window_bounds = array<i64: 1, 8>}, {pipeline_mode = #tpu.pipeline_mode<synchronous>, transform_indices = @transform_3, window_bounds = array<i64: 72, 8>}, {transform_indices = @transform_4, window_bounds = array<i64: 1, 8, 8, 8>}, {transform_indices = @transform_5, window_bounds = array<i64: 1, 2, 8>}]} {
    %c0 = arith.constant 0 : index
    %c0_0 = arith.constant 0 : index
    %c0_1 = arith.constant 0 : index
    %c0_2 = arith.constant 0 : index
    %0 = vector.load %arg1[%c0, %c0_0, %c0_1, %c0_2] : memref<1x8x8x8xbf16, #tpu.memory_space<vmem>>, vector<1x8x8x8xbf16>
    %1 = vector.shape_cast %0 : vector<1x8x8x8xbf16> to vector<8x8x8xbf16>
    %2 = arith.extf %1 : vector<8x8x8xbf16> to vector<8x8x8xf32>
    %c0_3 = arith.constant 0 : index
    %c0_4 = arith.constant 0 : index
    %3 = vector.load %arg2[%c0_3, %c0_4] : memref<1x8xf32, #tpu.memory_space<vmem>>, vector<1x8xf32>
    %4 = vector.shape_cast %3 : vector<1x8xf32> to vector<1x1x8xf32>
    %5 = vector.broadcast %4 : vector<1x1x8xf32> to vector<8x8x8xf32>
    %6 = arith.mulf %2, %5 : vector<8x8x8xf32>
    %c0_5 = arith.constant 0 : index
    %c0_6 = arith.constant 0 : index
    %7 = vector.load %arg3[%c0_5, %c0_6] : memref<1x8xf32, #tpu.memory_space<vmem>>, vector<1x8xf32>
    %8 = vector.shape_cast %7 : vector<1x8xf32> to vector<1x1x8xf32>
    %9 = vector.broadcast %8 : vector<1x1x8xf32> to vector<8x8x8xf32>
    %10 = arith.addf %6, %9 : vector<8x8x8xf32>
    %cst = arith.constant 0.000000e+00 : f32
    %11 = vector.broadcast %cst : f32 to vector<8x8x8xf32>
    %12 = arith.maximumf %10, %11 : vector<8x8x8xf32>
    %cst_7 = arith.constant 0.000000e+00 : bf16
    %13 = vector.broadcast %cst_7 : bf16 to vector<10x10x8xbf16>
    %c0_8 = arith.constant 0 : index
    %c0_9 = arith.constant 0 : index
    %c0_10 = arith.constant 0 : index
    %14 = vector.load %arg7[%c0_8, %c0_9, %c0_10] : memref<10x10x8xbf16, #tpu.memory_space<vmem>>, vector<10x10x8xbf16>
    tpu.vector_store %arg7[%c0_8, %c0_9, %c0_10], %13 {strides = array<i32>} : memref<10x10x8xbf16, #tpu.memory_space<vmem>>, vector<10x10x8xbf16>,
    %15 = arith.truncf %12 : vector<8x8x8xf32> to vector<8x8x8xbf16>
    %c1 = arith.constant 1 : index
    %c1_11 = arith.constant 1 : index
    %c0_12 = arith.constant 0 : index
    %16 = vector.load %arg7[%c1, %c1_11, %c0_12] : memref<10x10x8xbf16, #tpu.memory_space<vmem>>, vector<8x8x8xbf16>
    tpu.vector_store %arg7[%c1, %c1_11, %c0_12], %15 {strides = array<i32>} : memref<10x10x8xbf16, #tpu.memory_space<vmem>>, vector<8x8x8xbf16>,
    %cst_13 = arith.constant 0.000000e+00 : f32
    %17 = vector.broadcast %cst_13 : f32 to vector<64x8xf32>
    %c0_14 = arith.constant 0 : index
    %c0_15 = arith.constant 0 : index
    %c0_16 = arith.constant 0 : index
    %18 = vector.load %arg7[%c0_14, %c0_15, %c0_16] : memref<10x10x8xbf16, #tpu.memory_space<vmem>>, vector<8x8x8xbf16>
    %19 = vector.shape_cast %18 : vector<8x8x8xbf16> to vector<64x8xbf16>
    %c0_17 = arith.constant 0 : index
    %c0_18 = arith.constant 0 : index
    %20 = vector.load %arg4[%c0_17, %c0_18] : memref<72x8xbf16, #tpu.memory_space<vmem>>, vector<8x8xbf16>
    %cst_19 = arith.constant dense<0.000000e+00> : vector<64x8xf32>
    %21 = tpu.matmul %19, %20, %cst_19 {dimension_numbers = #tpu.dot_dimension_numbers<[1], [0], [0], [1], [0, 0, 1, 1], [], []>} : vector<64x8xbf16>, vector<8x8xbf16>, vector<64x8xf32> -> vector<64x8xf32>
    %22 = arith.addf %17, %21 : vector<64x8xf32>
    %c0_20 = arith.constant 0 : index
    %c1_21 = arith.constant 1 : index
    %c0_22 = arith.constant 0 : index
    %23 = vector.load %arg7[%c0_20, %c1_21, %c0_22] : memref<10x10x8xbf16, #tpu.memory_space<vmem>>, vector<8x8x8xbf16>
    %24 = vector.shape_cast %23 : vector<8x8x8xbf16> to vector<64x8xbf16>
    %c8 = arith.constant 8 : index
    %c0_23 = arith.constant 0 : index
    %25 = vector.load %arg4[%c8, %c0_23] : memref<72x8xbf16, #tpu.memory_space<vmem>>, vector<8x8xbf16>
    %cst_24 = arith.constant dense<0.000000e+00> : vector<64x8xf32>
    %26 = tpu.matmul %24, %25, %cst_24 {dimension_numbers = #tpu.dot_dimension_numbers<[1], [0], [0], [1], [0, 0, 1, 1], [], []>} : vector<64x8xbf16>, vector<8x8xbf16>, vector<64x8xf32> -> vector<64x8xf32>
    %27 = arith.addf %22, %26 : vector<64x8xf32>
    %c0_25 = arith.constant 0 : index
    %c2 = arith.constant 2 : index
    %c0_26 = arith.constant 0 : index
    %28 = vector.load %arg7[%c0_25, %c2, %c0_26] : memref<10x10x8xbf16, #tpu.memory_space<vmem>>, vector<8x8x8xbf16>
    %29 = vector.shape_cast %28 : vector<8x8x8xbf16> to vector<64x8xbf16>
    %c16 = arith.constant 16 : index
    %c0_27 = arith.constant 0 : index
    %30 = vector.load %arg4[%c16, %c0_27] : memref<72x8xbf16, #tpu.memory_space<vmem>>, vector<8x8xbf16>
    %cst_28 = arith.constant dense<0.000000e+00> : vector<64x8xf32>
    %31 = tpu.matmul %29, %30, %cst_28 {dimension_numbers = #tpu.dot_dimension_numbers<[1], [0], [0], [1], [0, 0, 1, 1], [], []>} : vector<64x8xbf16>, vector<8x8xbf16>, vector<64x8xf32> -> vector<64x8xf32>
    %32 = arith.addf %27, %31 : vector<64x8xf32>
    %c1_29 = arith.constant 1 : index
    %c0_30 = arith.constant 0 : index
    %c0_31 = arith.constant 0 : index
    %33 = vector.load %arg7[%c1_29, %c0_30, %c0_31] : memref<10x10x8xbf16, #tpu.memory_space<vmem>>, vector<8x8x8xbf16>
    %34 = vector.shape_cast %33 : vector<8x8x8xbf16> to vector<64x8xbf16>
    %c24 = arith.constant 24 : index
    %c0_32 = arith.constant 0 : index
    %35 = vector.load %arg4[%c24, %c0_32] : memref<72x8xbf16, #tpu.memory_space<vmem>>, vector<8x8xbf16>
    %cst_33 = arith.constant dense<0.000000e+00> : vector<64x8xf32>
    %36 = tpu.matmul %34, %35, %cst_33 {dimension_numbers = #tpu.dot_dimension_numbers<[1], [0], [0], [1], [0, 0, 1, 1], [], []>} : vector<64x8xbf16>, vector<8x8xbf16>, vector<64x8xf32> -> vector<64x8xf32>
    %37 = arith.addf %32, %36 : vector<64x8xf32>
    %c1_34 = arith.constant 1 : index
    %c1_35 = arith.constant 1 : index
    %c0_36 = arith.constant 0 : index
    %38 = vector.load %arg7[%c1_34, %c1_35, %c0_36] : memref<10x10x8xbf16, #tpu.memory_space<vmem>>, vector<8x8x8xbf16>
    %39 = vector.shape_cast %38 : vector<8x8x8xbf16> to vector<64x8xbf16>
    %c32 = arith.constant 32 : index
    %c0_37 = arith.constant 0 : index
    %40 = vector.load %arg4[%c32, %c0_37] : memref<72x8xbf16, #tpu.memory_space<vmem>>, vector<8x8xbf16>
    %cst_38 = arith.constant dense<0.000000e+00> : vector<64x8xf32>
    %41 = tpu.matmul %39, %40, %cst_38 {dimension_numbers = #tpu.dot_dimension_numbers<[1], [0], [0], [1], [0, 0, 1, 1], [], []>} : vector<64x8xbf16>, vector<8x8xbf16>, vector<64x8xf32> -> vector<64x8xf32>
    %42 = arith.addf %37, %41 : vector<64x8xf32>
    %c1_39 = arith.constant 1 : index
    %c2_40 = arith.constant 2 : index
    %c0_41 = arith.constant 0 : index
    %43 = vector.load %arg7[%c1_39, %c2_40, %c0_41] : memref<10x10x8xbf16, #tpu.memory_space<vmem>>, vector<8x8x8xbf16>
    %44 = vector.shape_cast %43 : vector<8x8x8xbf16> to vector<64x8xbf16>
    %c40 = arith.constant 40 : index
    %c0_42 = arith.constant 0 : index
    %45 = vector.load %arg4[%c40, %c0_42] : memref<72x8xbf16, #tpu.memory_space<vmem>>, vector<8x8xbf16>
    %cst_43 = arith.constant dense<0.000000e+00> : vector<64x8xf32>
    %46 = tpu.matmul %44, %45, %cst_43 {dimension_numbers = #tpu.dot_dimension_numbers<[1], [0], [0], [1], [0, 0, 1, 1], [], []>} : vector<64x8xbf16>, vector<8x8xbf16>, vector<64x8xf32> -> vector<64x8xf32>
    %47 = arith.addf %42, %46 : vector<64x8xf32>
    %c2_44 = arith.constant 2 : index
    %c0_45 = arith.constant 0 : index
    %c0_46 = arith.constant 0 : index
    %48 = vector.load %arg7[%c2_44, %c0_45, %c0_46] : memref<10x10x8xbf16, #tpu.memory_space<vmem>>, vector<8x8x8xbf16>
    %49 = vector.shape_cast %48 : vector<8x8x8xbf16> to vector<64x8xbf16>
    %c48 = arith.constant 48 : index
    %c0_47 = arith.constant 0 : index
    %50 = vector.load %arg4[%c48, %c0_47] : memref<72x8xbf16, #tpu.memory_space<vmem>>, vector<8x8xbf16>
    %cst_48 = arith.constant dense<0.000000e+00> : vector<64x8xf32>
    %51 = tpu.matmul %49, %50, %cst_48 {dimension_numbers = #tpu.dot_dimension_numbers<[1], [0], [0], [1], [0, 0, 1, 1], [], []>} : vector<64x8xbf16>, vector<8x8xbf16>, vector<64x8xf32> -> vector<64x8xf32>
    %52 = arith.addf %47, %51 : vector<64x8xf32>
    %c2_49 = arith.constant 2 : index
    %c1_50 = arith.constant 1 : index
    %c0_51 = arith.constant 0 : index
    %53 = vector.load %arg7[%c2_49, %c1_50, %c0_51] : memref<10x10x8xbf16, #tpu.memory_space<vmem>>, vector<8x8x8xbf16>
    %54 = vector.shape_cast %53 : vector<8x8x8xbf16> to vector<64x8xbf16>
    %c56 = arith.constant 56 : index
    %c0_52 = arith.constant 0 : index
    %55 = vector.load %arg4[%c56, %c0_52] : memref<72x8xbf16, #tpu.memory_space<vmem>>, vector<8x8xbf16>
    %cst_53 = arith.constant dense<0.000000e+00> : vector<64x8xf32>
    %56 = tpu.matmul %54, %55, %cst_53 {dimension_numbers = #tpu.dot_dimension_numbers<[1], [0], [0], [1], [0, 0, 1, 1], [], []>} : vector<64x8xbf16>, vector<8x8xbf16>, vector<64x8xf32> -> vector<64x8xf32>
    %57 = arith.addf %52, %56 : vector<64x8xf32>
    %c2_54 = arith.constant 2 : index
    %c2_55 = arith.constant 2 : index
    %c0_56 = arith.constant 0 : index
    %58 = vector.load %arg7[%c2_54, %c2_55, %c0_56] : memref<10x10x8xbf16, #tpu.memory_space<vmem>>, vector<8x8x8xbf16>
    %59 = vector.shape_cast %58 : vector<8x8x8xbf16> to vector<64x8xbf16>
    %c64 = arith.constant 64 : index
    %c0_57 = arith.constant 0 : index
    %60 = vector.load %arg4[%c64, %c0_57] : memref<72x8xbf16, #tpu.memory_space<vmem>>, vector<8x8xbf16>
    %cst_58 = arith.constant dense<0.000000e+00> : vector<64x8xf32>
    %61 = tpu.matmul %59, %60, %cst_58 {dimension_numbers = #tpu.dot_dimension_numbers<[1], [0], [0], [1], [0, 0, 1, 1], [], []>} : vector<64x8xbf16>, vector<8x8xbf16>, vector<64x8xf32> -> vector<64x8xf32>
    %62 = arith.addf %57, %61 : vector<64x8xf32>
    %63 = vector.shape_cast %62 : vector<64x8xf32> to vector<8x8x8xf32>
    %64 = arith.truncf %63 : vector<8x8x8xf32> to vector<8x8x8xbf16>
    %c0_59 = arith.constant 0 : index
    %c0_60 = arith.constant 0 : index
    %c0_61 = arith.constant 0 : index
    %c0_62 = arith.constant 0 : index
    %65 = vector.load %arg5[%c0_59, %c0_60, %c0_61, %c0_62] : memref<1x8x8x8xbf16, #tpu.memory_space<vmem>>, vector<1x8x8x8xbf16>
    %66 = vector.shape_cast %65 : vector<1x8x8x8xbf16> to vector<8x8x8xbf16>
    %67 = vector.shape_cast %64 : vector<8x8x8xbf16> to vector<1x8x8x8xbf16>
    tpu.vector_store %arg5[%c0_59, %c0_60, %c0_61, %c0_62], %67 {strides = array<i32>} : memref<1x8x8x8xbf16, #tpu.memory_space<vmem>>, vector<1x8x8x8xbf16>,
    %cst_63 = arith.constant dense<0.000000e+00> : vector<8xf32>
    %68 = vector.multi_reduction <add>, %62, %cst_63 [0] : vector<64x8xf32> to vector<8xf32>
    %69 = vector.shape_cast %68 : vector<8xf32> to vector<1x8xf32>
    %70 = arith.mulf %62, %62 : vector<64x8xf32>
    %cst_64 = arith.constant dense<0.000000e+00> : vector<8xf32>
    %71 = vector.multi_reduction <add>, %70, %cst_64 [0] : vector<64x8xf32> to vector<8xf32>
    %72 = vector.shape_cast %71 : vector<8xf32> to vector<1x8xf32>
    %73 = tpu.concatenate %69, %72 in 0 : vector<1x8xf32>, vector<1x8xf32> -> vector<2x8xf32>
    %c0_65 = arith.constant 0 : index
    %c0_66 = arith.constant 0 : index
    %c0_67 = arith.constant 0 : index
    %74 = vector.load %arg6[%c0_65, %c0_66, %c0_67] : memref<1x2x8xf32, #tpu.memory_space<vmem>>, vector<1x2x8xf32>
    %75 = vector.shape_cast %74 : vector<1x2x8xf32> to vector<2x8xf32>
    %76 = vector.shape_cast %73 : vector<2x8xf32> to vector<1x2x8xf32>
    tpu.vector_store %arg6[%c0_65, %c0_66, %c0_67], %76 {strides = array<i32>} : memref<1x2x8xf32, #tpu.memory_space<vmem>>, vector<1x2x8xf32>,
    return
  }
  func.func @transform_0(%arg0: i32) -> (i32, i32, i32, i32) {
    %c0_i32 = arith.constant 0 : i32
    %c0_i32_0 = arith.constant 0 : i32
    %c0_i32_1 = arith.constant 0 : i32
    %c0_i32_2 = arith.constant 0 : i32
    return %arg0, %c0_i32, %c0_i32_0, %c0_i32_1 : i32, i32, i32, i32
  }
  func.func @transform_1(%arg0: i32) -> (i32, i32) {
    %c0_i32 = arith.constant 0 : i32
    %c0_i32_0 = arith.constant 0 : i32
    %c0_i32_1 = arith.constant 0 : i32
    return %c0_i32, %c0_i32_0 : i32, i32
  }
  func.func @transform_2(%arg0: i32) -> (i32, i32) {
    %c0_i32 = arith.constant 0 : i32
    %c0_i32_0 = arith.constant 0 : i32
    %c0_i32_1 = arith.constant 0 : i32
    return %c0_i32, %c0_i32_0 : i32, i32
  }
  func.func @transform_3(%arg0: i32) -> (i32, i32) {
    %c0_i32 = arith.constant 0 : i32
    %c0_i32_0 = arith.constant 0 : i32
    %c0_i32_1 = arith.constant 0 : i32
    return %c0_i32, %c0_i32_0 : i32, i32
  }
  func.func @transform_4(%arg0: i32) -> (i32, i32, i32, i32) {
    %c0_i32 = arith.constant 0 : i32
    %c0_i32_0 = arith.constant 0 : i32
    %c0_i32_1 = arith.constant 0 : i32
    %c0_i32_2 = arith.constant 0 : i32
    return %arg0, %c0_i32, %c0_i32_0, %c0_i32_1 : i32, i32, i32, i32
  }
  func.func @transform_5(%arg0: i32) -> (i32, i32, i32) {
    %c0_i32 = arith.constant 0 : i32
    %c0_i32_0 = arith.constant 0 : i32
    %c0_i32_1 = arith.constant 0 : i32
    return %arg0, %c0_i32, %c0_i32_0 : i32, i32, i32
  }
}

module attributes {stable_mosaic.version = 11 : i64} {
  func.func @_pool_conv_kernel(%arg0: i32, %arg1: memref<1x8x2x8x8xf32, #tpu.memory_space<vmem>>, %arg2: memref<36x8xbf16, #tpu.memory_space<vmem>>, %arg3: memref<1x8x8x8xbf16, #tpu.memory_space<vmem>>, %arg4: memref<1x2x8xf32, #tpu.memory_space<vmem>>, %arg5: memref<10x10x4xbf16, #tpu.memory_space<vmem>>) attributes {dimension_semantics = [#tpu.dimension_semantics<parallel>], iteration_bounds = array<i64: 2>, scalar_prefetch = 0 : i64, scratch_operands = 1 : i64, tpu.core_type = #tpu.core_type<tc>, window_params = [{transform_indices = @transform_0, window_bounds = array<i64: 1, 8, 2, 8, 8>}, {pipeline_mode = #tpu.pipeline_mode<synchronous>, transform_indices = @transform_1, window_bounds = array<i64: 36, 8>}, {transform_indices = @transform_2, window_bounds = array<i64: 1, 8, 8, 8>}, {transform_indices = @transform_3, window_bounds = array<i64: 1, 2, 8>}]} {
    %c0 = arith.constant 0 : index
    %c0_0 = arith.constant 0 : index
    %c0_1 = arith.constant 0 : index
    %c0_2 = arith.constant 0 : index
    %c0_3 = arith.constant 0 : index
    %0 = vector.load %arg1[%c0, %c0_0, %c0_1, %c0_2, %c0_3] : memref<1x8x2x8x8xf32, #tpu.memory_space<vmem>>, vector<1x8x2x8x8xf32>
    %1 = vector.shape_cast %0 : vector<1x8x2x8x8xf32> to vector<8x2x8x8xf32>
    %2 = vector.extract_strided_slice %1 {offsets = [0, 0, 0, 0], sizes = [8, 1, 8, 8], strides = [1, 1, 1, 1]} : vector<8x2x8x8xf32> to vector<8x1x8x8xf32>
    %3 = vector.shape_cast %2 : vector<8x1x8x8xf32> to vector<8x8x8xf32>
    %4 = vector.extract_strided_slice %1 {offsets = [0, 1, 0, 0], sizes = [8, 1, 8, 8], strides = [1, 1, 1, 1]} : vector<8x2x8x8xf32> to vector<8x1x8x8xf32>
    %5 = vector.shape_cast %4 : vector<8x1x8x8xf32> to vector<8x8x8xf32>
    %6 = arith.maximumf %3, %5 : vector<8x8x8xf32>
    %7 = vector.extract_strided_slice %6 {offsets = [0, 0, 0], sizes = [8, 8, 4], strides = [1, 1, 1]} : vector<8x8x8xf32> to vector<8x8x4xf32>
    %8 = vector.extract_strided_slice %6 {offsets = [0, 0, 4], sizes = [8, 8, 4], strides = [1, 1, 1]} : vector<8x8x8xf32> to vector<8x8x4xf32>
    %9 = arith.maximumf %7, %8 : vector<8x8x4xf32>
    %cst = arith.constant 0.000000e+00 : bf16
    %10 = vector.broadcast %cst : bf16 to vector<10x10x4xbf16>
    %c0_4 = arith.constant 0 : index
    %c0_5 = arith.constant 0 : index
    %c0_6 = arith.constant 0 : index
    %11 = vector.load %arg5[%c0_4, %c0_5, %c0_6] : memref<10x10x4xbf16, #tpu.memory_space<vmem>>, vector<10x10x4xbf16>
    tpu.vector_store %arg5[%c0_4, %c0_5, %c0_6], %10 {strides = array<i32>} : memref<10x10x4xbf16, #tpu.memory_space<vmem>>, vector<10x10x4xbf16>,
    %12 = arith.truncf %9 : vector<8x8x4xf32> to vector<8x8x4xbf16>
    %c1 = arith.constant 1 : index
    %c1_7 = arith.constant 1 : index
    %c0_8 = arith.constant 0 : index
    %13 = vector.load %arg5[%c1, %c1_7, %c0_8] : memref<10x10x4xbf16, #tpu.memory_space<vmem>>, vector<8x8x4xbf16>
    tpu.vector_store %arg5[%c1, %c1_7, %c0_8], %12 {strides = array<i32>} : memref<10x10x4xbf16, #tpu.memory_space<vmem>>, vector<8x8x4xbf16>,
    %cst_9 = arith.constant 0.000000e+00 : f32
    %14 = vector.broadcast %cst_9 : f32 to vector<64x8xf32>
    %c0_10 = arith.constant 0 : index
    %c0_11 = arith.constant 0 : index
    %c0_12 = arith.constant 0 : index
    %15 = vector.load %arg5[%c0_10, %c0_11, %c0_12] : memref<10x10x4xbf16, #tpu.memory_space<vmem>>, vector<8x8x4xbf16>
    %16 = vector.shape_cast %15 : vector<8x8x4xbf16> to vector<64x4xbf16>
    %c0_13 = arith.constant 0 : index
    %c0_14 = arith.constant 0 : index
    %17 = vector.load %arg2[%c0_13, %c0_14] : memref<36x8xbf16, #tpu.memory_space<vmem>>, vector<4x8xbf16>
    %cst_15 = arith.constant dense<0.000000e+00> : vector<64x8xf32>
    %18 = tpu.matmul %16, %17, %cst_15 {dimension_numbers = #tpu.dot_dimension_numbers<[1], [0], [0], [1], [0, 0, 1, 1], [], []>} : vector<64x4xbf16>, vector<4x8xbf16>, vector<64x8xf32> -> vector<64x8xf32>
    %19 = arith.addf %14, %18 : vector<64x8xf32>
    %c0_16 = arith.constant 0 : index
    %c1_17 = arith.constant 1 : index
    %c0_18 = arith.constant 0 : index
    %20 = vector.load %arg5[%c0_16, %c1_17, %c0_18] : memref<10x10x4xbf16, #tpu.memory_space<vmem>>, vector<8x8x4xbf16>
    %21 = vector.shape_cast %20 : vector<8x8x4xbf16> to vector<64x4xbf16>
    %c4 = arith.constant 4 : index
    %c0_19 = arith.constant 0 : index
    %22 = vector.load %arg2[%c4, %c0_19] : memref<36x8xbf16, #tpu.memory_space<vmem>>, vector<4x8xbf16>
    %cst_20 = arith.constant dense<0.000000e+00> : vector<64x8xf32>
    %23 = tpu.matmul %21, %22, %cst_20 {dimension_numbers = #tpu.dot_dimension_numbers<[1], [0], [0], [1], [0, 0, 1, 1], [], []>} : vector<64x4xbf16>, vector<4x8xbf16>, vector<64x8xf32> -> vector<64x8xf32>
    %24 = arith.addf %19, %23 : vector<64x8xf32>
    %c0_21 = arith.constant 0 : index
    %c2 = arith.constant 2 : index
    %c0_22 = arith.constant 0 : index
    %25 = vector.load %arg5[%c0_21, %c2, %c0_22] : memref<10x10x4xbf16, #tpu.memory_space<vmem>>, vector<8x8x4xbf16>
    %26 = vector.shape_cast %25 : vector<8x8x4xbf16> to vector<64x4xbf16>
    %c8 = arith.constant 8 : index
    %c0_23 = arith.constant 0 : index
    %27 = vector.load %arg2[%c8, %c0_23] : memref<36x8xbf16, #tpu.memory_space<vmem>>, vector<4x8xbf16>
    %cst_24 = arith.constant dense<0.000000e+00> : vector<64x8xf32>
    %28 = tpu.matmul %26, %27, %cst_24 {dimension_numbers = #tpu.dot_dimension_numbers<[1], [0], [0], [1], [0, 0, 1, 1], [], []>} : vector<64x4xbf16>, vector<4x8xbf16>, vector<64x8xf32> -> vector<64x8xf32>
    %29 = arith.addf %24, %28 : vector<64x8xf32>
    %c1_25 = arith.constant 1 : index
    %c0_26 = arith.constant 0 : index
    %c0_27 = arith.constant 0 : index
    %30 = vector.load %arg5[%c1_25, %c0_26, %c0_27] : memref<10x10x4xbf16, #tpu.memory_space<vmem>>, vector<8x8x4xbf16>
    %31 = vector.shape_cast %30 : vector<8x8x4xbf16> to vector<64x4xbf16>
    %c12 = arith.constant 12 : index
    %c0_28 = arith.constant 0 : index
    %32 = vector.load %arg2[%c12, %c0_28] : memref<36x8xbf16, #tpu.memory_space<vmem>>, vector<4x8xbf16>
    %cst_29 = arith.constant dense<0.000000e+00> : vector<64x8xf32>
    %33 = tpu.matmul %31, %32, %cst_29 {dimension_numbers = #tpu.dot_dimension_numbers<[1], [0], [0], [1], [0, 0, 1, 1], [], []>} : vector<64x4xbf16>, vector<4x8xbf16>, vector<64x8xf32> -> vector<64x8xf32>
    %34 = arith.addf %29, %33 : vector<64x8xf32>
    %c1_30 = arith.constant 1 : index
    %c1_31 = arith.constant 1 : index
    %c0_32 = arith.constant 0 : index
    %35 = vector.load %arg5[%c1_30, %c1_31, %c0_32] : memref<10x10x4xbf16, #tpu.memory_space<vmem>>, vector<8x8x4xbf16>
    %36 = vector.shape_cast %35 : vector<8x8x4xbf16> to vector<64x4xbf16>
    %c16 = arith.constant 16 : index
    %c0_33 = arith.constant 0 : index
    %37 = vector.load %arg2[%c16, %c0_33] : memref<36x8xbf16, #tpu.memory_space<vmem>>, vector<4x8xbf16>
    %cst_34 = arith.constant dense<0.000000e+00> : vector<64x8xf32>
    %38 = tpu.matmul %36, %37, %cst_34 {dimension_numbers = #tpu.dot_dimension_numbers<[1], [0], [0], [1], [0, 0, 1, 1], [], []>} : vector<64x4xbf16>, vector<4x8xbf16>, vector<64x8xf32> -> vector<64x8xf32>
    %39 = arith.addf %34, %38 : vector<64x8xf32>
    %c1_35 = arith.constant 1 : index
    %c2_36 = arith.constant 2 : index
    %c0_37 = arith.constant 0 : index
    %40 = vector.load %arg5[%c1_35, %c2_36, %c0_37] : memref<10x10x4xbf16, #tpu.memory_space<vmem>>, vector<8x8x4xbf16>
    %41 = vector.shape_cast %40 : vector<8x8x4xbf16> to vector<64x4xbf16>
    %c20 = arith.constant 20 : index
    %c0_38 = arith.constant 0 : index
    %42 = vector.load %arg2[%c20, %c0_38] : memref<36x8xbf16, #tpu.memory_space<vmem>>, vector<4x8xbf16>
    %cst_39 = arith.constant dense<0.000000e+00> : vector<64x8xf32>
    %43 = tpu.matmul %41, %42, %cst_39 {dimension_numbers = #tpu.dot_dimension_numbers<[1], [0], [0], [1], [0, 0, 1, 1], [], []>} : vector<64x4xbf16>, vector<4x8xbf16>, vector<64x8xf32> -> vector<64x8xf32>
    %44 = arith.addf %39, %43 : vector<64x8xf32>
    %c2_40 = arith.constant 2 : index
    %c0_41 = arith.constant 0 : index
    %c0_42 = arith.constant 0 : index
    %45 = vector.load %arg5[%c2_40, %c0_41, %c0_42] : memref<10x10x4xbf16, #tpu.memory_space<vmem>>, vector<8x8x4xbf16>
    %46 = vector.shape_cast %45 : vector<8x8x4xbf16> to vector<64x4xbf16>
    %c24 = arith.constant 24 : index
    %c0_43 = arith.constant 0 : index
    %47 = vector.load %arg2[%c24, %c0_43] : memref<36x8xbf16, #tpu.memory_space<vmem>>, vector<4x8xbf16>
    %cst_44 = arith.constant dense<0.000000e+00> : vector<64x8xf32>
    %48 = tpu.matmul %46, %47, %cst_44 {dimension_numbers = #tpu.dot_dimension_numbers<[1], [0], [0], [1], [0, 0, 1, 1], [], []>} : vector<64x4xbf16>, vector<4x8xbf16>, vector<64x8xf32> -> vector<64x8xf32>
    %49 = arith.addf %44, %48 : vector<64x8xf32>
    %c2_45 = arith.constant 2 : index
    %c1_46 = arith.constant 1 : index
    %c0_47 = arith.constant 0 : index
    %50 = vector.load %arg5[%c2_45, %c1_46, %c0_47] : memref<10x10x4xbf16, #tpu.memory_space<vmem>>, vector<8x8x4xbf16>
    %51 = vector.shape_cast %50 : vector<8x8x4xbf16> to vector<64x4xbf16>
    %c28 = arith.constant 28 : index
    %c0_48 = arith.constant 0 : index
    %52 = vector.load %arg2[%c28, %c0_48] : memref<36x8xbf16, #tpu.memory_space<vmem>>, vector<4x8xbf16>
    %cst_49 = arith.constant dense<0.000000e+00> : vector<64x8xf32>
    %53 = tpu.matmul %51, %52, %cst_49 {dimension_numbers = #tpu.dot_dimension_numbers<[1], [0], [0], [1], [0, 0, 1, 1], [], []>} : vector<64x4xbf16>, vector<4x8xbf16>, vector<64x8xf32> -> vector<64x8xf32>
    %54 = arith.addf %49, %53 : vector<64x8xf32>
    %c2_50 = arith.constant 2 : index
    %c2_51 = arith.constant 2 : index
    %c0_52 = arith.constant 0 : index
    %55 = vector.load %arg5[%c2_50, %c2_51, %c0_52] : memref<10x10x4xbf16, #tpu.memory_space<vmem>>, vector<8x8x4xbf16>
    %56 = vector.shape_cast %55 : vector<8x8x4xbf16> to vector<64x4xbf16>
    %c32 = arith.constant 32 : index
    %c0_53 = arith.constant 0 : index
    %57 = vector.load %arg2[%c32, %c0_53] : memref<36x8xbf16, #tpu.memory_space<vmem>>, vector<4x8xbf16>
    %cst_54 = arith.constant dense<0.000000e+00> : vector<64x8xf32>
    %58 = tpu.matmul %56, %57, %cst_54 {dimension_numbers = #tpu.dot_dimension_numbers<[1], [0], [0], [1], [0, 0, 1, 1], [], []>} : vector<64x4xbf16>, vector<4x8xbf16>, vector<64x8xf32> -> vector<64x8xf32>
    %59 = arith.addf %54, %58 : vector<64x8xf32>
    %60 = vector.shape_cast %59 : vector<64x8xf32> to vector<8x8x8xf32>
    %61 = arith.truncf %60 : vector<8x8x8xf32> to vector<8x8x8xbf16>
    %c0_55 = arith.constant 0 : index
    %c0_56 = arith.constant 0 : index
    %c0_57 = arith.constant 0 : index
    %c0_58 = arith.constant 0 : index
    %62 = vector.load %arg3[%c0_55, %c0_56, %c0_57, %c0_58] : memref<1x8x8x8xbf16, #tpu.memory_space<vmem>>, vector<1x8x8x8xbf16>
    %63 = vector.shape_cast %62 : vector<1x8x8x8xbf16> to vector<8x8x8xbf16>
    %64 = vector.shape_cast %61 : vector<8x8x8xbf16> to vector<1x8x8x8xbf16>
    tpu.vector_store %arg3[%c0_55, %c0_56, %c0_57, %c0_58], %64 {strides = array<i32>} : memref<1x8x8x8xbf16, #tpu.memory_space<vmem>>, vector<1x8x8x8xbf16>,
    %cst_59 = arith.constant dense<0.000000e+00> : vector<8xf32>
    %65 = vector.multi_reduction <add>, %59, %cst_59 [0] : vector<64x8xf32> to vector<8xf32>
    %66 = vector.shape_cast %65 : vector<8xf32> to vector<1x8xf32>
    %67 = arith.mulf %59, %59 : vector<64x8xf32>
    %cst_60 = arith.constant dense<0.000000e+00> : vector<8xf32>
    %68 = vector.multi_reduction <add>, %67, %cst_60 [0] : vector<64x8xf32> to vector<8xf32>
    %69 = vector.shape_cast %68 : vector<8xf32> to vector<1x8xf32>
    %70 = tpu.concatenate %66, %69 in 0 : vector<1x8xf32>, vector<1x8xf32> -> vector<2x8xf32>
    %c0_61 = arith.constant 0 : index
    %c0_62 = arith.constant 0 : index
    %c0_63 = arith.constant 0 : index
    %71 = vector.load %arg4[%c0_61, %c0_62, %c0_63] : memref<1x2x8xf32, #tpu.memory_space<vmem>>, vector<1x2x8xf32>
    %72 = vector.shape_cast %71 : vector<1x2x8xf32> to vector<2x8xf32>
    %73 = vector.shape_cast %70 : vector<2x8xf32> to vector<1x2x8xf32>
    tpu.vector_store %arg4[%c0_61, %c0_62, %c0_63], %73 {strides = array<i32>} : memref<1x2x8xf32, #tpu.memory_space<vmem>>, vector<1x2x8xf32>,
    return
  }
  func.func @transform_0(%arg0: i32) -> (i32, i32, i32, i32, i32) {
    %c0_i32 = arith.constant 0 : i32
    %c0_i32_0 = arith.constant 0 : i32
    %c0_i32_1 = arith.constant 0 : i32
    %c0_i32_2 = arith.constant 0 : i32
    %c0_i32_3 = arith.constant 0 : i32
    return %arg0, %c0_i32, %c0_i32_0, %c0_i32_1, %c0_i32_2 : i32, i32, i32, i32, i32
  }
  func.func @transform_1(%arg0: i32) -> (i32, i32) {
    %c0_i32 = arith.constant 0 : i32
    %c0_i32_0 = arith.constant 0 : i32
    %c0_i32_1 = arith.constant 0 : i32
    return %c0_i32, %c0_i32_0 : i32, i32
  }
  func.func @transform_2(%arg0: i32) -> (i32, i32, i32, i32) {
    %c0_i32 = arith.constant 0 : i32
    %c0_i32_0 = arith.constant 0 : i32
    %c0_i32_1 = arith.constant 0 : i32
    %c0_i32_2 = arith.constant 0 : i32
    return %arg0, %c0_i32, %c0_i32_0, %c0_i32_1 : i32, i32, i32, i32
  }
  func.func @transform_3(%arg0: i32) -> (i32, i32, i32) {
    %c0_i32 = arith.constant 0 : i32
    %c0_i32_0 = arith.constant 0 : i32
    %c0_i32_1 = arith.constant 0 : i32
    return %arg0, %c0_i32, %c0_i32_0 : i32, i32, i32
  }
}

</mosaic_0001>

<llo_original>
// kernel: down_forward.2
$region0: #{down_forward.2}
  #allocation0 [shape = 'u32[]', space=smem, size = 0x4, offset = 0x4, fixed_abs, tag = 'smem constant byte address 0x4 - core index']
  #allocation1 [shape = 'u32[144,128]{1,0:T(1,128)}', space=vmem, size = 0x12000, scoped, tag = 'internal scratch']
  #allocation2 [shape = 'bf16[10,10,4]{2,1,0:T(8,128)(2,1)}', space=vmem, size = 0xa000, scoped, tag = 'scratch operand']
  %s0 = inlined_call_operand.vmem [shape: f32[2,8,2,8,8], index: 0, kind: input, shape index: {}]
  %s1 = inlined_call_operand.vmem [shape: bf16[36,8], index: 1, kind: input, shape index: {}]
  %s2 = inlined_call_operand.vmem [shape: bf16[2,8,8,8], index: 2, kind: output, shape index: {0}]
  %s3 = inlined_call_operand.vmem [shape: f32[2,2,8], index: 3, kind: output, shape index: {1}]
  %4 = xla_tuple %s2, %s3
  %s5 = sld [smem:[#allocation0]]
  $region49: #{down_forward.2} parent=0
    _
  %s7 = ssub.s32 1, %s5
  %s8 = scalar_select 0, %s7, %s5
  loop: start=0, step=1, limit=4
  $region2: #{down_forward.2} parent=0 // loop_pre_header
    _
  $region3: #{down_forward.2} parent=0 // loop_header
    %s10 = sphi 0, %s14
    %p11 = scmp.ge.s32.totalorder %s10, 4
    %s20 = sphi 0, %s22
    %s23 = sphi 0, %s20
    %s24 = sphi 0, %s23
    %s40 = sphi 0, %s24
    %s44 = sphi 0, %s44
    %s46 = sphi 0, %s44
    %s47 = sphi 0, %s46
    %s61 = sphi 0, %s47
    %s67 = sphi 0, %s69
    %s70 = sphi 0, %s67
    %s71 = sphi 0, %s70
    %s87 = sphi 0, %s71
    %s93 = sphi 0, %s95
    %s96 = sphi 0, %s93
    %s97 = sphi 0, %s96
    %s113 = sphi 0, %s97
  $region4: #{down_forward.2} parent=0 // loop_header_branch
    %13 = sbr.rel (%p11) target = $region8
  $region5: #{down_forward.2} parent=0 // loop_body
    %s15 = ssub.s32 %s10, 1
    %s16 = ssub.s32 %s10, 2
    %s17 = sadd.s32 %s10, 1
    %s18 = ssub.s32 %s10, %s17
    %p19 = scmp.eq.s32.totalorder %s18, 0
    %s21 = sadd.s32 %s20, 1
    %s22 = scalar_select %p19, %s20, %s21
    %p25 = pneg %p19
    %p26 = scmp.eq.s32.totalorder %s10, 1
    %p27 = por %p25, %p26
    %p28 = scmp.ne.s32.totalorder %s20, %s23
    %p29 = scmp.eq.s32.totalorder %s10, 0
    %p30 = por %p28, %p29
    %p31 = scmp.ne.s32.totalorder %s20, %s23
    %p32 = scmp.eq.s32.totalorder %s15, 1
    %p33 = por %p31, %p32
    %p34 = scmp.ne.s32.totalorder %s23, %s24
    %p35 = scmp.eq.s32.totalorder %s15, 0
    %p36 = por %p34, %p35
    %p37 = scmp.ne.s32.totalorder %s23, %s24
    %p38 = scmp.eq.s32.totalorder %s16, 1
    %p39 = por %p37, %p38
    %p41 = scmp.ne.s32.totalorder %s24, %s40
    %p42 = scmp.eq.s32.totalorder %s16, 0
    %p43 = por %p41, %p42
    %s45 = sadd.s32 %s44, 1
    %p48 = scmp.eq.s32.totalorder %s10, 1
    %p49 = scmp.ne.s32.totalorder %s44, %s46
    %p50 = scmp.eq.s32.totalorder %s10, 0
    %p51 = por %p49, %p50
    %p52 = scmp.ne.s32.totalorder %s44, %s46
    %p53 = scmp.eq.s32.totalorder %s15, 1
    %p54 = por %p52, %p53
    %p55 = scmp.ne.s32.totalorder %s46, %s47
    %p56 = scmp.eq.s32.totalorder %s15, 0
    %p57 = por %p55, %p56
    %p58 = scmp.ne.s32.totalorder %s46, %s47
    %p59 = scmp.eq.s32.totalorder %s16, 1
    %p60 = por %p58, %p59
    %p62 = scmp.ne.s32.totalorder %s47, %s61
    %p63 = scmp.eq.s32.totalorder %s16, 0
    %p64 = por %p62, %p63
    %s65 = ssub.s32 %s10, %s17
    %p66 = scmp.eq.s32.totalorder %s65, 0
    %s68 = sadd.s32 %s67, 1
    %s69 = scalar_select %p66, %s67, %s68
    %p72 = pneg %p66
    %p73 = scmp.eq.s32.totalorder %s10, 1
    %p74 = por %p72, %p73
    %p75 = scmp.ne.s32.totalorder %s67, %s70
    %p76 = scmp.eq.s32.totalorder %s10, 0
    %p77 = por %p75, %p76
    %p78 = scmp.ne.s32.totalorder %s67, %s70
    %p79 = scmp.eq.s32.totalorder %s15, 1
    %p80 = por %p78, %p79
    %p81 = scmp.ne.s32.totalorder %s70, %s71
    %p82 = scmp.eq.s32.totalorder %s15, 0
    %p83 = por %p81, %p82
    %p84 = scmp.ne.s32.totalorder %s70, %s71
    %p85 = scmp.eq.s32.totalorder %s16, 1
    %p86 = por %p84, %p85
    %p88 = scmp.ne.s32.totalorder %s71, %s87
    %p89 = scmp.eq.s32.totalorder %s16, 0
    %p90 = por %p88, %p89
    %s91 = ssub.s32 %s10, %s17
    %p92 = scmp.eq.s32.totalorder %s91, 0
    %s94 = sadd.s32 %s93, 1
    %s95 = scalar_select %p92, %s93, %s94
    %p98 = pneg %p92
    %p99 = scmp.eq.s32.totalorder %s10, 1
    %p100 = por %p98, %p99
    %p101 = scmp.ne.s32.totalorder %s93, %s96
    %p102 = scmp.eq.s32.totalorder %s10, 0
    %p103 = por %p101, %p102
    %p104 = scmp.ne.s32.totalorder %s93, %s96
    %p105 = scmp.eq.s32.totalorder %s15, 1
    %p106 = por %p104, %p105
    %p107 = scmp.ne.s32.totalorder %s96, %s97
    %p108 = scmp.eq.s32.totalorder %s15, 0
    %p109 = por %p107, %p108
    %p110 = scmp.ne.s32.totalorder %s96, %s97
    %p111 = scmp.eq.s32.totalorder %s16, 1
    %p112 = por %p110, %p111
    %p114 = scmp.ne.s32.totalorder %s97, %s113
    %p115 = scmp.eq.s32.totalorder %s16, 0
    %p116 = por %p114, %p115
    %p117 = scmp.le.s32.totalorder 1, %s10
    %p118 = scmp.lt.s32.totalorder %s10, 3
    %p119 = pnand %p117, %p118
    %p120 = pneg %p119
    // Predicated region
    $region9: #{down_forward.2} parent=5 // pred_check
      _
    $region10: #{down_forward.2} parent=5 // pred_check_branch
      %122 = sbr.rel (%p119) target = $region12
    $region11: #{down_forward.2} parent=5 // pred_region
      %s123 = ssub.s32 %s10, 1
      // Predicated region
      $region13: #{down_forward.2} parent=11 // pred_check
        %p124 = pneg %p57
      $region14: #{down_forward.2} parent=11 // pred_check_branch
        %126 = sbr.rel (%p124) target = $region16
      $region15: #{down_forward.2} parent=11 // pred_region
        _
      $region16: #{down_forward.2} parent=11 // pred_fallthru
        _
    $region12: #{down_forward.2} parent=5 // pred_fallthru
      _
    %p127 = scmp.lt.s32.totalorder %s10, 2
    // Predicated region
    $region17: #{down_forward.2} parent=5 // pred_check
      %p128 = pneg %p127
    $region18: #{down_forward.2} parent=5 // pred_check_branch
      %130 = sbr.rel (%p128) target = $region20
    $region19: #{down_forward.2} parent=5 // pred_region
      // Predicated region
      $region21: #{down_forward.2} parent=19 // pred_check
        %p131 = pneg %p30
      $region22: #{down_forward.2} parent=19 // pred_check_branch
        %133 = sbr.rel (%p131) target = $region24
      $region23: #{down_forward.2} parent=19 // pred_region
        %p134 = scmp.lt.s32.totalorder %s10, 1
        %s135 = scalar_select %p134, %s10, 1
        %s136 = smul.addr %s135, 16
        %s137 = smul.addr %s136, 8
        %s138 = scalar_lea.vmem %s0, %s137
      $region24: #{down_forward.2} parent=19 // pred_fallthru
        _
    $region20: #{down_forward.2} parent=5 // pred_fallthru
      _
    %p139 = scmp.le.s32.totalorder 1, %s10
    %p140 = scmp.lt.s32.totalorder %s10, 3
    %p141 = pnand %p139, %p140
    %p142 = pneg %p141
    // Predicated region
    $region25: #{down_forward.2} parent=5 // pred_check
      _
    $region26: #{down_forward.2} parent=5 // pred_check_branch
      %144 = sbr.rel (%p141) target = $region28
    $region27: #{down_forward.2} parent=5 // pred_region
      %s145 = ssub.s32 %s10, 1
      %p146 = scmp.lt.s32.totalorder %s15, 1
      %s147 = scalar_select %p146, %s15, 1
      %s148 = smul.addr %s147, 16
      %s149 = smul.addr %s148, 8
      %s150 = scalar_lea.vmem %s0, %s149
      %p151 = pneg %p36
      %p152 = pneg %p33
      %p153 = pneg %p57
      %p154 = pneg %p54
      %p155 = pneg %p83
      %p156 = pneg %p80
      %p157 = scmp.lt.s32.totalorder %s15, 1
      %s158 = scalar_select %p157, %s15, 1
      %s159 = smul.addr %s158, 8
      %s160 = smul.addr %s159, 4
      %s161 = scalar_lea.vmem %s2, %s160
      %p162 = pneg %p109
      %p163 = pneg %p106
      %p164 = scmp.lt.s32.totalorder %s15, 1
      %s165 = scalar_select %p164, %s15, 1
      %s166 = smul.addr %s165, 2
      %s167 = scalar_lea.vmem %s3, %s166
      %p168 = scmp.lt.s32.totalorder %s15, 1
      %s169 = scalar_select %p168, %s15, 1
      %s170 = smul.addr %s169, 16
      %s171 = smul.addr %s170, 8
      %s172 = scalar_lea.vmem %s0, %s171
      %p173 = scmp.lt.s32.totalorder %s15, 1
      %s174 = scalar_select %p173, %s15, 1
      %s175 = smul.addr %s174, 8
      %s176 = smul.addr %s175, 4
      %s177 = scalar_lea.vmem %s2, %s176
      %p178 = scmp.lt.s32.totalorder %s15, 1
      %s179 = scalar_select %p178, %s15, 1
      %s180 = smul.addr %s179, 2
      %s181 = scalar_lea.vmem %s3, %s180
      %v183 = vld [vmem:[%s172] sm:$0xff]
      %v184 = vld [vmem:[%s172 + $0x8] sm:$0xff]
      %v185 = vld [vmem:[%s172 + $0x10] sm:$0xff]
      %v186 = vld [vmem:[%s172 + $0x18] sm:$0xff]
      %v187 = vld [vmem:[%s172 + $0x20] sm:$0xff]
      %v188 = vld [vmem:[%s172 + $0x28] sm:$0xff]
      %v189 = vld [vmem:[%s172 + $0x30] sm:$0xff]
      %v190 = vld [vmem:[%s172 + $0x38] sm:$0xff]
      %v191 = vld [vmem:[%s172 + $0x40] sm:$0xff]
      %v192 = vld [vmem:[%s172 + $0x48] sm:$0xff]
      %v193 = vld [vmem:[%s172 + $0x50] sm:$0xff]
      %v194 = vld [vmem:[%s172 + $0x58] sm:$0xff]
      %v195 = vld [vmem:[%s172 + $0x60] sm:$0xff]
      %v196 = vld [vmem:[%s172 + $0x68] sm:$0xff]
      %v197 = vld [vmem:[%s172 + $0x70] sm:$0xff]
      %v198 = vld [vmem:[%s172 + $0x78] sm:$0xff]
      %v199 = vmax.f32 %v183, %v184
      %v200 = vmax.f32 %v185, %v186
      %v201 = vmax.f32 %v187, %v188
      %v202 = vmax.f32 %v189, %v190
      %v203 = vmax.f32 %v191, %v192
      %v204 = vmax.f32 %v193, %v194
      %v205 = vmax.f32 %v195, %v196
      %v206 = vmax.f32 %v197, %v198
      %215 = vrot.lane.b32.xlu0 %v199, 124
      %v216 = vpop.permute.xlu0 %215
      %217 = vrot.lane.b32.xlu0 %v200, 124
      %v218 = vpop.permute.xlu0 %217
      %219 = vrot.lane.b32.xlu0 %v201, 124
      %v220 = vpop.permute.xlu0 %219
      %221 = vrot.lane.b32.xlu0 %v202, 124
      %v222 = vpop.permute.xlu0 %221
      %223 = vrot.lane.b32.xlu0 %v203, 124
      %v224 = vpop.permute.xlu0 %223
      %225 = vrot.lane.b32.xlu0 %v204, 124
      %v226 = vpop.permute.xlu0 %225
      %227 = vrot.lane.b32.xlu0 %v205, 124
      %v228 = vpop.permute.xlu0 %227
      %229 = vrot.lane.b32.xlu0 %v206, 124
      %v230 = vpop.permute.xlu0 %229
      %v239 = vmax.f32 %v199, %v216
      %v240 = vmax.f32 %v200, %v218
      %v241 = vmax.f32 %v201, %v220
      %v242 = vmax.f32 %v202, %v222
      %v243 = vmax.f32 %v203, %v224
      %v244 = vmax.f32 %v204, %v226
      %v245 = vmax.f32 %v205, %v228
      %v246 = vmax.f32 %v206, %v230
      %vm247 = vcmask 27648
      %248 = vst.msk [vmem:[#allocation2] sm:$0xf] %vm247, 0
      %vm249 = vcmask 24576
      %250 = vst.msk [vmem:[#allocation2 + $0x4] sm:$0x1] %vm249, 0
      %251 = vst.msk [vmem:[#allocation2 + $0x8] sm:$0xf] %vm247, 0
      %252 = vst.msk [vmem:[#allocation2 + $0xc] sm:$0x1] %vm249, 0
      %253 = vst.msk [vmem:[#allocation2 + $0x10] sm:$0xf] %vm247, 0
      %254 = vst.msk [vmem:[#allocation2 + $0x14] sm:$0x1] %vm249, 0
      %255 = vst.msk [vmem:[#allocation2 + $0x18] sm:$0xf] %vm247, 0
      %256 = vst.msk [vmem:[#allocation2 + $0x1c] sm:$0x1] %vm249, 0
      %257 = vst.msk [vmem:[#allocation2 + $0x20] sm:$0xf] %vm247, 0
      %258 = vst.msk [vmem:[#allocation2 + $0x24] sm:$0x1] %vm249, 0
      %259 = vst.msk [vmem:[#allocation2 + $0x28] sm:$0xf] %vm247, 0
      %260 = vst.msk [vmem:[#allocation2 + $0x2c] sm:$0x1] %vm249, 0
      %261 = vst.msk [vmem:[#allocation2 + $0x30] sm:$0xf] %vm247, 0
      %262 = vst.msk [vmem:[#allocation2 + $0x34] sm:$0x1] %vm249, 0
      %263 = vst.msk [vmem:[#allocation2 + $0x38] sm:$0xf] %vm247, 0
      %264 = vst.msk [vmem:[#allocation2 + $0x3c] sm:$0x1] %vm249, 0
      %265 = vst.msk [vmem:[#allocation2 + $0x40] sm:$0xf] %vm247, 0
      %266 = vst.msk [vmem:[#allocation2 + $0x44] sm:$0x1] %vm249, 0
      %267 = vst.msk [vmem:[#allocation2 + $0x48] sm:$0xf] %vm247, 0
      %268 = vst.msk [vmem:[#allocation2 + $0x4c] sm:$0x1] %vm249, 0
      %v269 = vpack.c.bf16 %v239, %v239
      %v270 = vpack.c.bf16 %v240, %v240
      %v271 = vpack.c.bf16 %v241, %v241
      %v272 = vpack.c.bf16 %v242, %v242
      %v273 = vpack.c.bf16 %v243, %v243
      %v274 = vpack.c.bf16 %v244, %v244
      %v275 = vpack.c.bf16 %v245, %v245
      %v276 = vpack.c.bf16 %v246, %v246
      %v285 = vunpack.c.l.b16 %v269
      %v286 = vunpack.c.l.b16 %v270
      %v287 = vunpack.c.l.b16 %v271
      %v288 = vunpack.c.l.b16 %v272
      %v289 = vunpack.c.l.b16 %v273
      %v290 = vunpack.c.l.b16 %v274
      %v291 = vunpack.c.l.b16 %v275
      %v292 = vunpack.c.l.b16 %v276
      %v293 = vpack.c.b16 %v285, %v285
      %v294 = vpack.c.b16 %v286, %v286
      %v295 = vpack.c.b16 %v287, %v287
      %v296 = vpack.c.b16 %v288, %v288
      %v297 = vpack.c.b16 %v289, %v289
      %v298 = vpack.c.b16 %v290, %v290
      %v299 = vpack.c.b16 %v291, %v291
      %v300 = vpack.c.b16 %v292, %v292
      %v302 = vshrl.u32 %v293, 16
      %v304 = vrot.slane %v302, 7
      %v305 = vshll.u32 %v293, 16
      %v307 = vor.u32 %v304, %v305
      %v308 = vrot.slane %v304, 4
      %v310 = vshrl.u32 %v294, 16
      %v312 = vrot.slane %v310, 7
      %v313 = vshll.u32 %v294, 16
      %v315 = vor.u32 %v312, %v313
      %v316 = vrot.slane %v312, 4
      %v318 = vshrl.u32 %v295, 16
      %v320 = vrot.slane %v318, 7
      %v321 = vshll.u32 %v295, 16
      %v323 = vor.u32 %v320, %v321
      %v324 = vrot.slane %v320, 4
      %v326 = vshrl.u32 %v296, 16
      %v328 = vrot.slane %v326, 7
      %v329 = vshll.u32 %v296, 16
      %v331 = vor.u32 %v328, %v329
      %v332 = vrot.slane %v328, 4
      %v334 = vshrl.u32 %v297, 16
      %v336 = vrot.slane %v334, 7
      %v337 = vshll.u32 %v297, 16
      %v339 = vor.u32 %v336, %v337
      %v340 = vrot.slane %v336, 4
      %v342 = vshrl.u32 %v298, 16
      %v344 = vrot.slane %v342, 7
      %v345 = vshll.u32 %v298, 16
      %v347 = vor.u32 %v344, %v345
      %v348 = vrot.slane %v344, 4
      %v350 = vshrl.u32 %v299, 16
      %v352 = vrot.slane %v350, 7
      %v353 = vshll.u32 %v299, 16
      %v355 = vor.u32 %v352, %v353
      %v356 = vrot.slane %v352, 4
      %v358 = vshrl.u32 %v300, 16
      %v360 = vrot.slane %v358, 7
      %v361 = vshll.u32 %v300, 16
      %v363 = vor.u32 %v360, %v361
      %v364 = vrot.slane %v360, 4
      %s381 = scalar_lea.vmem [#allocation2], 8
      %vm382 = vcmask 27648
      %vm383 = vsmask.f32 7938
      %vm384 = vmand %vm382, %vm383
      %v385 = vld [vmem:[%s381] sm:$0xf]
      %v386 = vsel %vm384, %v307, %v385
      %387 = vst [vmem:[%s381] sm:$0xf] %v386
      %vm388 = vcmask 24576
      %vm389 = vsmask.f32 256
      %vm390 = vmand %vm388, %vm389
      %v391 = vld [vmem:[%s381 + $0x4] sm:$0x1]
      %v392 = vsel %vm390, %v308, %v391
      %393 = vst [vmem:[%s381 + $0x4] sm:$0x1] %v392
      %v394 = vld [vmem:[%s381 + $0x8] sm:$0xf]
      %v395 = vsel %vm384, %v315, %v394
      %396 = vst [vmem:[%s381 + $0x8] sm:$0xf] %v395
      %v397 = vld [vmem:[%s381 + $0xc] sm:$0x1]
      %v398 = vsel %vm390, %v316, %v397
      %399 = vst [vmem:[%s381 + $0xc] sm:$0x1] %v398
      %v400 = vld [vmem:[%s381 + $0x10] sm:$0xf]
      %v401 = vsel %vm384, %v323, %v400
      %402 = vst [vmem:[%s381 + $0x10] sm:$0xf] %v401
      %v403 = vld [vmem:[%s381 + $0x14] sm:$0x1]
      %v404 = vsel %vm390, %v324, %v403
      %405 = vst [vmem:[%s381 + $0x14] sm:$0x1] %v404
      %v406 = vld [vmem:[%s381 + $0x18] sm:$0xf]
      %v407 = vsel %vm384, %v331, %v406
      %408 = vst [vmem:[%s381 + $0x18] sm:$0xf] %v407
      %v409 = vld [vmem:[%s381 + $0x1c] sm:$0x1]
      %v410 = vsel %vm390, %v332, %v409
      %411 = vst [vmem:[%s381 + $0x1c] sm:$0x1] %v410
      %v412 = vld [vmem:[%s381 + $0x20] sm:$0xf]
      %v413 = vsel %vm384, %v339, %v412
      %414 = vst [vmem:[%s381 + $0x20] sm:$0xf] %v413
      %v415 = vld [vmem:[%s381 + $0x24] sm:$0x1]
      %v416 = vsel %vm390, %v340, %v415
      %417 = vst [vmem:[%s381 + $0x24] sm:$0x1] %v416
      %v418 = vld [vmem:[%s381 + $0x28] sm:$0xf]
      %v419 = vsel %vm384, %v347, %v418
      %420 = vst [vmem:[%s381 + $0x28] sm:$0xf] %v419
      %v421 = vld [vmem:[%s381 + $0x2c] sm:$0x1]
      %v422 = vsel %vm390, %v348, %v421
      %423 = vst [vmem:[%s381 + $0x2c] sm:$0x1] %v422
      %v424 = vld [vmem:[%s381 + $0x30] sm:$0xf]
      %v425 = vsel %vm384, %v355, %v424
      %426 = vst [vmem:[%s381 + $0x30] sm:$0xf] %v425
      %v427 = vld [vmem:[%s381 + $0x34] sm:$0x1]
      %v428 = vsel %vm390, %v356, %v427
      %429 = vst [vmem:[%s381 + $0x34] sm:$0x1] %v428
      %v430 = vld [vmem:[%s381 + $0x38] sm:$0xf]
      %v431 = vsel %vm384, %v363, %v430
      %432 = vst [vmem:[%s381 + $0x38] sm:$0xf] %v431
      %v433 = vld [vmem:[%s381 + $0x3c] sm:$0x1]
      %v434 = vsel %vm390, %v364, %v433
      %435 = vst [vmem:[%s381 + $0x3c] sm:$0x1] %v434
      %v436 = vld [vmem:[#allocation2] sm:$0xf]
      %v437 = vld [vmem:[#allocation2 + $0x8] sm:$0xf]
      %v438 = vld [vmem:[#allocation2 + $0x10] sm:$0xf]
      %v439 = vld [vmem:[#allocation2 + $0x18] sm:$0xf]
      %v440 = vld [vmem:[#allocation2 + $0x20] sm:$0xf]
      %v441 = vld [vmem:[#allocation2 + $0x28] sm:$0xf]
      %v442 = vld [vmem:[#allocation2 + $0x30] sm:$0xf]
      %v443 = vld [vmem:[#allocation2 + $0x38] sm:$0xf]
      %v444 = vld [vmem:[%s1] sm:$0x3]
      %v445 = vld [vmem:[#allocation2 + $0x4] sm:$0x1]
      %v446 = vld [vmem:[#allocation2 + $0xc] sm:$0x1]
      %v447 = vld [vmem:[#allocation2 + $0x14] sm:$0x1]
      %v448 = vld [vmem:[#allocation2 + $0x1c] sm:$0x1]
      %v449 = vld [vmem:[#allocation2 + $0x24] sm:$0x1]
      %v450 = vld [vmem:[#allocation2 + $0x2c] sm:$0x1]
      %v451 = vld [vmem:[#allocation2 + $0x34] sm:$0x1]
      %v452 = vld [vmem:[#allocation2 + $0x3c] sm:$0x1]
      %vm453 = vsmask.f32 3328
      %vm454 = vsmask.f32 7440
      %vm455 = vmor %vm453, %vm454
      %v457 = vshrl.u32 %v436, 16
      %v459 = vrot.slane %v457, 4
      %v460 = vshll.u32 %v436, 16
      %v462 = vrot.slane %v460, 5
      %v463 = vor.u32 %v459, %v462
      %v464 = vrot.slane %v463, 4
      %v466 = vshll.u32 %v445, 16
      %v468 = vrot.slane %v466, 5
      %v469 = vsel %vm455, %v464, %v468
      %v471 = vshrl.u32 %v437, 16
      %v473 = vrot.slane %v471, 4
      %v474 = vshll.u32 %v437, 16
      %v476 = vrot.slane %v474, 5
      %v477 = vor.u32 %v473, %v476
      %v478 = vrot.slane %v477, 4
      %v480 = vshll.u32 %v446, 16
      %v482 = vrot.slane %v480, 5
      %v483 = vsel %vm455, %v478, %v482
      %v485 = vshrl.u32 %v438, 16
      %v487 = vrot.slane %v485, 4
      %v488 = vshll.u32 %v438, 16
      %v490 = vrot.slane %v488, 5
      %v491 = vor.u32 %v487, %v490
      %v492 = vrot.slane %v491, 4
      %v494 = vshll.u32 %v447, 16
      %v496 = vrot.slane %v494, 5
      %v497 = vsel %vm455, %v492, %v496
      %v499 = vshrl.u32 %v439, 16
      %v501 = vrot.slane %v499, 4
      %v502 = vshll.u32 %v439, 16
      %v504 = vrot.slane %v502, 5
      %v505 = vor.u32 %v501, %v504
      %v506 = vrot.slane %v505, 4
      %v508 = vshll.u32 %v448, 16
      %v510 = vrot.slane %v508, 5
      %v511 = vsel %vm455, %v506, %v510
      %v513 = vshrl.u32 %v440, 16
      %v515 = vrot.slane %v513, 4
      %v516 = vshll.u32 %v440, 16
      %v518 = vrot.slane %v516, 5
      %v519 = vor.u32 %v515, %v518
      %v520 = vrot.slane %v519, 4
      %v522 = vshll.u32 %v449, 16
      %v524 = vrot.slane %v522, 5
      %v525 = vsel %vm455, %v520, %v524
      %v527 = vshrl.u32 %v441, 16
      %v529 = vrot.slane %v527, 4
      %v530 = vshll.u32 %v441, 16
      %v532 = vrot.slane %v530, 5
      %v533 = vor.u32 %v529, %v532
      %v534 = vrot.slane %v533, 4
      %v536 = vshll.u32 %v450, 16
      %v538 = vrot.slane %v536, 5
      %v539 = vsel %vm455, %v534, %v538
      %v541 = vshrl.u32 %v442, 16
      %v543 = vrot.slane %v541, 4
      %v544 = vshll.u32 %v442, 16
      %v546 = vrot.slane %v544, 5
      %v547 = vor.u32 %v543, %v546
      %v548 = vrot.slane %v547, 4
      %v550 = vshll.u32 %v451, 16
      %v552 = vrot.slane %v550, 5
      %v553 = vsel %vm455, %v548, %v552
      %v555 = vshrl.u32 %v443, 16
      %v557 = vrot.slane %v555, 4
      %v558 = vshll.u32 %v443, 16
      %v560 = vrot.slane %v558, 5
      %v561 = vor.u32 %v557, %v560
      %v562 = vrot.slane %v561, 4
      %v564 = vshll.u32 %v452, 16
      %v566 = vrot.slane %v564, 5
      %v567 = vsel %vm455, %v562, %v566
      %v568 = vld [vmem:[%s1] sm:$0xc]
      %v569 = vunpack.c.l.b16 %v469
      %v570 = vunpack.c.l.b16 %v483
      %v571 = vunpack.c.l.b16 %v497
      %v572 = vunpack.c.l.b16 %v511
      %v573 = vunpack.c.l.b16 %v525
      %v574 = vunpack.c.l.b16 %v539
      %v575 = vunpack.c.l.b16 %v553
      %v576 = vunpack.c.l.b16 %v567
      %v577 = vpack.c.b16 %v570, %v569
      %v578 = vpack.c.b16 %v572, %v571
      %v579 = vpack.c.b16 %v574, %v573
      %v580 = vpack.c.b16 %v576, %v575
      %v582 = vunpack.c.l.b16 %v568
      %v583 = vpack.c.b16 %v582, %v582
      %v584 = vrot.slane %v583, 2
      %vm585 = vcmask 31744
      %v587 = vsel %vm585, %v577, 0
      %v590 = vsel %vm585, %v578, 0
      %v593 = vsel %vm585, %v579, 0
      %v596 = vsel %vm585, %v580, 0
      %vm598 = vcmask 1041408
      %v600 = vsel %vm598, %v584, 0
      %602 = vmatprep.subr.bf16.mxu0 0
      %603 = vmatpush1.bf16.msra.mxu0 0
      %604 = vmatprep.subr.bf16.mxu0 0
      %605 = vmatpush1.bf16.msra.mxu0 0
      %606 = vmatprep.subr.bf16.mxu0 0
      %607 = vmatpush1.bf16.msra.mxu0 0
      %608 = vmatprep.subr.bf16.mxu0 0
      %609 = vmatpush1.bf16.msra.mxu0 0
      %610 = vmatprep.subr.bf16.mxu0 0
      %611 = vmatpush1.bf16.msra.mxu0 0
      %612 = vmatprep.subr.bf16.mxu0 0
      %613 = vmatpush1.bf16.msra.mxu0 0
      %614 = vmatprep.subr.bf16.mxu0 0
      %615 = vmatpush1.bf16.msra.mxu0 0
      %616 = vmatprep.subr.bf16.mxu0 0
      %617 = vmatpush1.bf16.msra.mxu0 %v600
      %618 = vmatprep.subr.bf16.mxu0 0
      %619 = vmatpush2.bf16.msra.mxu0 0
      %620 = vmatprep.subr.bf16.mxu0 0
      %621 = vmatpush2.bf16.msra.mxu0 0
      %622 = vmatprep.subr.bf16.mxu0 0
      %623 = vmatpush2.bf16.msra.mxu0 0
      %624 = vmatprep.subr.bf16.mxu0 0
      %625 = vmatpush2.bf16.msra.mxu0 0
      %626 = vmatprep.subr.bf16.mxu0 0
      %627 = vmatpush2.bf16.msra.mxu0 0
      %628 = vmatprep.subr.bf16.mxu0 0
      %629 = vmatpush2.bf16.msra.mxu0 0
      %630 = vmatprep.subr.bf16.mxu0 0
      %631 = vmatpush2.bf16.msra.mxu0 0
      %632 = vmatprep.subr.bf16.mxu0 0
      %633 = vmatpush2.bf16.msra.mxu0 0
      %634 = vmatprep.mubr.bf16.mxu0 0
      %635 = vmatmul.mubr.bf16.gmra.mxu0 %v587
      %v636 = vpop.f32.mrf.mxu0
      %v637 = vadd.f32 0.0, %v636
      %v638 = vpop.f32.mrf.mxu0
      %v639 = vpop.f32.mrf.mxu0
      %v640 = vadd.f32 0.0, %v639
      %v641 = vpop.f32.mrf.mxu0
      %642 = vmatprep.mubr.bf16.mxu0 0
      %643 = vmatmul.mubr.bf16.gmra.mxu0 %v590
      %v644 = vpop.f32.mrf.mxu0
      %v645 = vadd.f32 0.0, %v644
      %v646 = vpop.f32.mrf.mxu0
      %v647 = vpop.f32.mrf.mxu0
      %v648 = vadd.f32 0.0, %v647
      %v649 = vpop.f32.mrf.mxu0
      %650 = vmatprep.mubr.bf16.mxu0 0
      %651 = vmatmul.mubr.bf16.gmra.mxu0 %v593
      %v652 = vpop.f32.mrf.mxu0
      %v653 = vadd.f32 0.0, %v652
      %v654 = vpop.f32.mrf.mxu0
      %v655 = vpop.f32.mrf.mxu0
      %v656 = vadd.f32 0.0, %v655
      %v657 = vpop.f32.mrf.mxu0
      %658 = vmatprep.mubr.bf16.mxu0 0
      %659 = vmatmul.mubr.bf16.gmra.mxu0 %v596
      %v660 = vpop.f32.mrf.mxu0
      %v661 = vadd.f32 0.0, %v660
      %v662 = vpop.f32.mrf.mxu0
      %v663 = vpop.f32.mrf.mxu0
      %v664 = vadd.f32 0.0, %v663
      %v665 = vpop.f32.mrf.mxu0
      %666 = vdwg.mxu0
      %v675 = vunpack.c.l.b16 %v436
      %v676 = vunpack.c.l.b16 %v437
      %v677 = vunpack.c.l.b16 %v438
      %v678 = vunpack.c.l.b16 %v439
      %v679 = vunpack.c.l.b16 %v440
      %v680 = vunpack.c.l.b16 %v441
      %v681 = vunpack.c.l.b16 %v442
      %v682 = vunpack.c.l.b16 %v443
      %v683 = vpack.c.b16 %v676, %v675
      %v684 = vpack.c.b16 %v678, %v677
      %v685 = vpack.c.b16 %v680, %v679
      %v686 = vpack.c.b16 %v682, %v681
      %v688 = vsel %vm585, %v683, 0
      %v691 = vsel %vm585, %v684, 0
      %v694 = vsel %vm585, %v685, 0
      %v697 = vsel %vm585, %v686, 0
      %v700 = vsel %vm598, %v444, 0
      %702 = vmatprep.subr.bf16.mxu0 0
      %703 = vmatpush1.bf16.msra.mxu0 0
      %704 = vmatprep.subr.bf16.mxu0 0
      %705 = vmatpush1.bf16.msra.mxu0 0
      %706 = vmatprep.subr.bf16.mxu0 0
      %707 = vmatpush1.bf16.msra.mxu0 0
      %708 = vmatprep.subr.bf16.mxu0 0
      %709 = vmatpush1.bf16.msra.mxu0 0
      %710 = vmatprep.subr.bf16.mxu0 0
      %711 = vmatpush1.bf16.msra.mxu0 0
      %712 = vmatprep.subr.bf16.mxu0 0
      %713 = vmatpush1.bf16.msra.mxu0 0
      %714 = vmatprep.subr.bf16.mxu0 0
      %715 = vmatpush1.bf16.msra.mxu0 0
      %716 = vmatprep.subr.bf16.mxu0 0
      %717 = vmatpush1.bf16.msra.mxu0 %v700
      %718 = vmatprep.subr.bf16.mxu0 0
      %719 = vmatpush2.bf16.msra.mxu0 0
      %720 = vmatprep.subr.bf16.mxu0 0
      %721 = vmatpush2.bf16.msra.mxu0 0
      %722 = vmatprep.subr.bf16.mxu0 0
      %723 = vmatpush2.bf16.msra.mxu0 0
      %724 = vmatprep.subr.bf16.mxu0 0
      %725 = vmatpush2.bf16.msra.mxu0 0
      %726 = vmatprep.subr.bf16.mxu0 0
      %727 = vmatpush2.bf16.msra.mxu0 0
      %728 = vmatprep.subr.bf16.mxu0 0
      %729 = vmatpush2.bf16.msra.mxu0 0
      %730 = vmatprep.subr.bf16.mxu0 0
      %731 = vmatpush2.bf16.msra.mxu0 0
      %732 = vmatprep.subr.bf16.mxu0 0
      %733 = vmatpush2.bf16.msra.mxu0 0
      %734 = vmatprep.mubr.bf16.mxu0 0
      %735 = vmatmul.mubr.bf16.gmra.mxu0 %v688
      %v736 = vpop.f32.mrf.mxu0
      %v737 = vadd.f32 %v637, %v736
      %v738 = vpop.f32.mrf.mxu0
      %v739 = vpop.f32.mrf.mxu0
      %v740 = vadd.f32 %v640, %v739
      %v741 = vpop.f32.mrf.mxu0
      %742 = vmatprep.mubr.bf16.mxu0 0
      %743 = vmatmul.mubr.bf16.gmra.mxu0 %v691
      %v744 = vpop.f32.mrf.mxu0
      %v745 = vadd.f32 %v645, %v744
      %v746 = vpop.f32.mrf.mxu0
      %v747 = vpop.f32.mrf.mxu0
      %v748 = vadd.f32 %v648, %v747
      %v749 = vpop.f32.mrf.mxu0
      %750 = vmatprep.mubr.bf16.mxu0 0
      %751 = vmatmul.mubr.bf16.gmra.mxu0 %v694
      %v752 = vpop.f32.mrf.mxu0
      %v753 = vadd.f32 %v653, %v752
      %v754 = vpop.f32.mrf.mxu0
      %v755 = vpop.f32.mrf.mxu0
      %v756 = vadd.f32 %v656, %v755
      %v757 = vpop.f32.mrf.mxu0
      %758 = vmatprep.mubr.bf16.mxu0 0
      %759 = vmatmul.mubr.bf16.gmra.mxu0 %v697
      %v760 = vpop.f32.mrf.mxu0
      %v761 = vadd.f32 %v661, %v760
      %v762 = vpop.f32.mrf.mxu0
      %v763 = vpop.f32.mrf.mxu0
      %v764 = vadd.f32 %v664, %v763
      %v765 = vpop.f32.mrf.mxu0
      %766 = vdwg.mxu0
      %v767 = vld [vmem:[#allocation2] sm:$0xe]
      %v768 = vld [vmem:[#allocation2 + $0x8] sm:$0xe]
      %v769 = vld [vmem:[#allocation2 + $0x10] sm:$0xe]
      %v770 = vld [vmem:[#allocation2 + $0x18] sm:$0xe]
      %v771 = vld [vmem:[#allocation2 + $0x20] sm:$0xe]
      %v772 = vld [vmem:[#allocation2 + $0x28] sm:$0xe]
      %v773 = vld [vmem:[#allocation2 + $0x30] sm:$0xe]
      %v774 = vld [vmem:[#allocation2 + $0x38] sm:$0xe]
      %vm791 = vcmask 1042432
      %vm792 = vcmask 1046532
      %vm793 = vmor %vm791, %vm792
      %v794 = vrot.slane %v767, 5
      %v795 = vrot.slane %v794, 4
      %v796 = vrot.slane %v445, 5
      %v797 = vsel %vm793, %v795, %v796
      %v798 = vrot.slane %v768, 5
      %v799 = vrot.slane %v798, 4
      %v800 = vrot.slane %v446, 5
      %v801 = vsel %vm793, %v799, %v800
      %v802 = vrot.slane %v769, 5
      %v803 = vrot.slane %v802, 4
      %v804 = vrot.slane %v447, 5
      %v805 = vsel %vm793, %v803, %v804
      %v806 = vrot.slane %v770, 5
      %v807 = vrot.slane %v806, 4
      %v808 = vrot.slane %v448, 5
      %v809 = vsel %vm793, %v807, %v808
      %v810 = vrot.slane %v771, 5
      %v811 = vrot.slane %v810, 4
      %v812 = vrot.slane %v449, 5
      %v813 = vsel %vm793, %v811, %v812
      %v814 = vrot.slane %v772, 5
      %v815 = vrot.slane %v814, 4
      %v816 = vrot.slane %v450, 5
      %v817 = vsel %vm793, %v815, %v816
      %v818 = vrot.slane %v773, 5
      %v819 = vrot.slane %v818, 4
      %v820 = vrot.slane %v451, 5
      %v821 = vsel %vm793, %v819, %v820
      %v822 = vrot.slane %v774, 5
      %v823 = vrot.slane %v822, 4
      %v824 = vrot.slane %v452, 5
      %v825 = vsel %vm793, %v823, %v824
      %v826 = vld [vmem:[%s1 + $0x4] sm:$0x3]
      %v827 = vunpack.c.l.b16 %v797
      %v828 = vunpack.c.l.b16 %v801
      %v829 = vunpack.c.l.b16 %v805
      %v830 = vunpack.c.l.b16 %v809
      %v831 = vunpack.c.l.b16 %v813
      %v832 = vunpack.c.l.b16 %v817
      %v833 = vunpack.c.l.b16 %v821
      %v834 = vunpack.c.l.b16 %v825
      %v835 = vpack.c.b16 %v828, %v827
      %v836 = vpack.c.b16 %v830, %v829
      %v837 = vpack.c.b16 %v832, %v831
      %v838 = vpack.c.b16 %v834, %v833
      %v840 = vsel %vm585, %v835, 0
      %v843 = vsel %vm585, %v836, 0
      %v846 = vsel %vm585, %v837, 0
      %v849 = vsel %vm585, %v838, 0
      %v852 = vsel %vm598, %v826, 0
      %854 = vmatprep.subr.bf16.mxu0 0
      %855 = vmatpush1.bf16.msra.mxu0 0
      %856 = vmatprep.subr.bf16.mxu0 0
      %857 = vmatpush1.bf16.msra.mxu0 0
      %858 = vmatprep.subr.bf16.mxu0 0
      %859 = vmatpush1.bf16.msra.mxu0 0
      %860 = vmatprep.subr.bf16.mxu0 0
      %861 = vmatpush1.bf16.msra.mxu0 0
      %862 = vmatprep.subr.bf16.mxu0 0
      %863 = vmatpush1.bf16.msra.mxu0 0
      %864 = vmatprep.subr.bf16.mxu0 0
      %865 = vmatpush1.bf16.msra.mxu0 0
      %866 = vmatprep.subr.bf16.mxu0 0
      %867 = vmatpush1.bf16.msra.mxu0 0
      %868 = vmatprep.subr.bf16.mxu0 0
      %869 = vmatpush1.bf16.msra.mxu0 %v852
      %870 = vmatprep.subr.bf16.mxu0 0
      %871 = vmatpush2.bf16.msra.mxu0 0
      %872 = vmatprep.subr.bf16.mxu0 0
      %873 = vmatpush2.bf16.msra.mxu0 0
      %874 = vmatprep.subr.bf16.mxu0 0
      %875 = vmatpush2.bf16.msra.mxu0 0
      %876 = vmatprep.subr.bf16.mxu0 0
      %877 = vmatpush2.bf16.msra.mxu0 0
      %878 = vmatprep.subr.bf16.mxu0 0
      %879 = vmatpush2.bf16.msra.mxu0 0
      %880 = vmatprep.subr.bf16.mxu0 0
      %881 = vmatpush2.bf16.msra.mxu0 0
      %882 = vmatprep.subr.bf16.mxu0 0
      %883 = vmatpush2.bf16.msra.mxu0 0
      %884 = vmatprep.subr.bf16.mxu0 0
      %885 = vmatpush2.bf16.msra.mxu0 0
      %886 = vmatprep.mubr.bf16.mxu0 0
      %887 = vmatmul.mubr.bf16.gmra.mxu0 %v840
      %v888 = vpop.f32.mrf.mxu0
      %v889 = vadd.f32 0.0, %v888
      %v890 = vpop.f32.mrf.mxu0
      %v891 = vpop.f32.mrf.mxu0
      %v892 = vadd.f32 0.0, %v891
      %v893 = vpop.f32.mrf.mxu0
      %894 = vmatprep.mubr.bf16.mxu0 0
      %895 = vmatmul.mubr.bf16.gmra.mxu0 %v843
      %v896 = vpop.f32.mrf.mxu0
      %v897 = vadd.f32 0.0, %v896
      %v898 = vpop.f32.mrf.mxu0
      %v899 = vpop.f32.mrf.mxu0
      %v900 = vadd.f32 0.0, %v899
      %v901 = vpop.f32.mrf.mxu0
      %902 = vmatprep.mubr.bf16.mxu0 0
      %903 = vmatmul.mubr.bf16.gmra.mxu0 %v846
      %v904 = vpop.f32.mrf.mxu0
      %v905 = vadd.f32 0.0, %v904
      %v906 = vpop.f32.mrf.mxu0
      %v907 = vpop.f32.mrf.mxu0
      %v908 = vadd.f32 0.0, %v907
      %v909 = vpop.f32.mrf.mxu0
      %910 = vmatprep.mubr.bf16.mxu0 0
      %911 = vmatmul.mubr.bf16.gmra.mxu0 %v849
      %v912 = vpop.f32.mrf.mxu0
      %v913 = vadd.f32 0.0, %v912
      %v914 = vpop.f32.mrf.mxu0
      %v915 = vpop.f32.mrf.mxu0
      %v916 = vadd.f32 0.0, %v915
      %v917 = vpop.f32.mrf.mxu0
      %918 = vdwg.mxu0
      %v919 = vadd.f32 %v737, %v889
      %v920 = vadd.f32 %v740, %v892
      %v921 = vadd.f32 %v745, %v897
      %v922 = vadd.f32 %v748, %v900
      %v923 = vadd.f32 %v753, %v905
      %v924 = vadd.f32 %v756, %v908
      %v925 = vadd.f32 %v761, %v913
      %v926 = vadd.f32 %v764, %v916
      %v927 = vld [vmem:[%s381] sm:$0xf]
      %v928 = vld [vmem:[%s381 + $0x8] sm:$0xf]
      %v929 = vld [vmem:[%s381 + $0x10] sm:$0xf]
      %v930 = vld [vmem:[%s381 + $0x18] sm:$0xf]
      %v931 = vld [vmem:[%s381 + $0x20] sm:$0xf]
      %v932 = vld [vmem:[%s381 + $0x28] sm:$0xf]
      %v933 = vld [vmem:[%s381 + $0x30] sm:$0xf]
      %v934 = vld [vmem:[%s381 + $0x38] sm:$0xf]
      %v935 = vld [vmem:[%s1 + $0x4] sm:$0xc]
      %v944 = vunpack.c.l.b16 %v927
      %v945 = vunpack.c.l.b16 %v928
      %v946 = vunpack.c.l.b16 %v929
      %v947 = vunpack.c.l.b16 %v930
      %v948 = vunpack.c.l.b16 %v931
      %v949 = vunpack.c.l.b16 %v932
      %v950 = vunpack.c.l.b16 %v933
      %v951 = vunpack.c.l.b16 %v934
      %v952 = vpack.c.b16 %v945, %v944
      %v953 = vpack.c.b16 %v947, %v946
      %v954 = vpack.c.b16 %v949, %v948
      %v955 = vpack.c.b16 %v951, %v950
      %v957 = vunpack.c.l.b16 %v935
      %v958 = vpack.c.b16 %v957, %v957
      %v959 = vrot.slane %v958, 2
      %v961 = vsel %vm585, %v952, 0
      %v964 = vsel %vm585, %v953, 0
      %v967 = vsel %vm585, %v954, 0
      %v970 = vsel %vm585, %v955, 0
      %v973 = vsel %vm598, %v959, 0
      %975 = vmatprep.subr.bf16.mxu0 0
      %976 = vmatpush1.bf16.msra.mxu0 0
      %977 = vmatprep.subr.bf16.mxu0 0
      %978 = vmatpush1.bf16.msra.mxu0 0
      %979 = vmatprep.subr.bf16.mxu0 0
      %980 = vmatpush1.bf16.msra.mxu0 0
      %981 = vmatprep.subr.bf16.mxu0 0
      %982 = vmatpush1.bf16.msra.mxu0 0
      %983 = vmatprep.subr.bf16.mxu0 0
      %984 = vmatpush1.bf16.msra.mxu0 0
      %985 = vmatprep.subr.bf16.mxu0 0
      %986 = vmatpush1.bf16.msra.mxu0 0
      %987 = vmatprep.subr.bf16.mxu0 0
      %988 = vmatpush1.bf16.msra.mxu0 0
      %989 = vmatprep.subr.bf16.mxu0 0
      %990 = vmatpush1.bf16.msra.mxu0 %v973
      %991 = vmatprep.subr.bf16.mxu0 0
      %992 = vmatpush2.bf16.msra.mxu0 0
      %993 = vmatprep.subr.bf16.mxu0 0
      %994 = vmatpush2.bf16.msra.mxu0 0
      %995 = vmatprep.subr.bf16.mxu0 0
      %996 = vmatpush2.bf16.msra.mxu0 0
      %997 = vmatprep.subr.bf16.mxu0 0
      %998 = vmatpush2.bf16.msra.mxu0 0
      %999 = vmatprep.subr.bf16.mxu0 0
      %1000 = vmatpush2.bf16.msra.mxu0 0
      %1001 = vmatprep.subr.bf16.mxu0 0
      %1002 = vmatpush2.bf16.msra.mxu0 0
      %1003 = vmatprep.subr.bf16.mxu0 0
      %1004 = vmatpush2.bf16.msra.mxu0 0
      %1005 = vmatprep.subr.bf16.mxu0 0
      %1006 = vmatpush2.bf16.msra.mxu0 0
      %1007 = vmatprep.mubr.bf16.mxu0 0
      %1008 = vmatmul.mubr.bf16.gmra.mxu0 %v961
      %v1009 = vpop.f32.mrf.mxu0
      %v1010 = vadd.f32 0.0, %v1009
      %v1011 = vpop.f32.mrf.mxu0
      %v1012 = vpop.f32.mrf.mxu0
      %v1013 = vadd.f32 0.0, %v1012
      %v1014 = vpop.f32.mrf.mxu0
      %1015 = vmatprep.mubr.bf16.mxu0 0
      %1016 = vmatmul.mubr.bf16.gmra.mxu0 %v964
      %v1017 = vpop.f32.mrf.mxu0
      %v1018 = vadd.f32 0.0, %v1017
      %v1019 = vpop.f32.mrf.mxu0
      %v1020 = vpop.f32.mrf.mxu0
      %v1021 = vadd.f32 0.0, %v1020
      %v1022 = vpop.f32.mrf.mxu0
      %1023 = vmatprep.mubr.bf16.mxu0 0
      %1024 = vmatmul.mubr.bf16.gmra.mxu0 %v967
      %v1025 = vpop.f32.mrf.mxu0
      %v1026 = vadd.f32 0.0, %v1025
      %v1027 = vpop.f32.mrf.mxu0
      %v1028 = vpop.f32.mrf.mxu0
      %v1029 = vadd.f32 0.0, %v1028
      %v1030 = vpop.f32.mrf.mxu0
      %1031 = vmatprep.mubr.bf16.mxu0 0
      %1032 = vmatmul.mubr.bf16.gmra.mxu0 %v970
      %v1033 = vpop.f32.mrf.mxu0
      %v1034 = vadd.f32 0.0, %v1033
      %v1035 = vpop.f32.mrf.mxu0
      %v1036 = vpop.f32.mrf.mxu0
      %v1037 = vadd.f32 0.0, %v1036
      %v1038 = vpop.f32.mrf.mxu0
      %1039 = vdwg.mxu0
      %v1040 = vadd.f32 %v919, %v1010
      %v1041 = vadd.f32 %v920, %v1013
      %v1042 = vadd.f32 %v921, %v1018
      %v1043 = vadd.f32 %v922, %v1021
      %v1044 = vadd.f32 %v923, %v1026
      %v1045 = vadd.f32 %v924, %v1029
      %v1046 = vadd.f32 %v925, %v1034
      %v1047 = vadd.f32 %v926, %v1037
      %v1048 = vld [vmem:[%s381] sm:$0xf]
      %v1049 = vld [vmem:[%s381 + $0x4] sm:$0x1]
      %v1050 = vld [vmem:[%s381 + $0x8] sm:$0xf]
      %v1051 = vld [vmem:[%s381 + $0xc] sm:$0x1]
      %v1052 = vld [vmem:[%s381 + $0x10] sm:$0xf]
      %v1053 = vld [vmem:[%s381 + $0x14] sm:$0x1]
      %v1054 = vld [vmem:[%s381 + $0x18] sm:$0xf]
      %v1055 = vld [vmem:[%s381 + $0x1c] sm:$0x1]
      %v1056 = vld [vmem:[%s381 + $0x20] sm:$0xf]
      %v1057 = vld [vmem:[%s381 + $0x24] sm:$0x1]
      %v1058 = vld [vmem:[%s381 + $0x28] sm:$0xf]
      %v1059 = vld [vmem:[%s381 + $0x2c] sm:$0x1]
      %v1060 = vld [vmem:[%s381 + $0x30] sm:$0xf]
      %v1061 = vld [vmem:[%s381 + $0x34] sm:$0x1]
      %v1062 = vld [vmem:[%s381 + $0x38] sm:$0xf]
      %v1063 = vld [vmem:[%s381 + $0x3c] sm:$0x1]
      %v1065 = vshrl.u32 %v1048, 16
      %v1067 = vrot.slane %v1065, 4
      %v1068 = vshll.u32 %v1048, 16
      %v1070 = vrot.slane %v1068, 5
      %v1071 = vor.u32 %v1067, %v1070
      %v1072 = vrot.slane %v1071, 4
      %v1074 = vshll.u32 %v1049, 16
      %v1076 = vrot.slane %v1074, 5
      %v1077 = vsel %vm455, %v1072, %v1076
      %v1079 = vshrl.u32 %v1050, 16
      %v1081 = vrot.slane %v1079, 4
      %v1082 = vshll.u32 %v1050, 16
      %v1084 = vrot.slane %v1082, 5
      %v1085 = vor.u32 %v1081, %v1084
      %v1086 = vrot.slane %v1085, 4
      %v1088 = vshll.u32 %v1051, 16
      %v1090 = vrot.slane %v1088, 5
      %v1091 = vsel %vm455, %v1086, %v1090
      %v1093 = vshrl.u32 %v1052, 16
      %v1095 = vrot.slane %v1093, 4
      %v1096 = vshll.u32 %v1052, 16
      %v1098 = vrot.slane %v1096, 5
      %v1099 = vor.u32 %v1095, %v1098
      %v1100 = vrot.slane %v1099, 4
      %v1102 = vshll.u32 %v1053, 16
      %v1104 = vrot.slane %v1102, 5
      %v1105 = vsel %vm455, %v1100, %v1104
      %v1107 = vshrl.u32 %v1054, 16
      %v1109 = vrot.slane %v1107, 4
      %v1110 = vshll.u32 %v1054, 16
      %v1112 = vrot.slane %v1110, 5
      %v1113 = vor.u32 %v1109, %v1112
      %v1114 = vrot.slane %v1113, 4
      %v1116 = vshll.u32 %v1055, 16
      %v1118 = vrot.slane %v1116, 5
      %v1119 = vsel %vm455, %v1114, %v1118
      %v1121 = vshrl.u32 %v1056, 16
      %v1123 = vrot.slane %v1121, 4
      %v1124 = vshll.u32 %v1056, 16
      %v1126 = vrot.slane %v1124, 5
      %v1127 = vor.u32 %v1123, %v1126
      %v1128 = vrot.slane %v1127, 4
      %v1130 = vshll.u32 %v1057, 16
      %v1132 = vrot.slane %v1130, 5
      %v1133 = vsel %vm455, %v1128, %v1132
      %v1135 = vshrl.u32 %v1058, 16
      %v1137 = vrot.slane %v1135, 4
      %v1138 = vshll.u32 %v1058, 16
      %v1140 = vrot.slane %v1138, 5
      %v1141 = vor.u32 %v1137, %v1140
      %v1142 = vrot.slane %v1141, 4
      %v1144 = vshll.u32 %v1059, 16
      %v1146 = vrot.slane %v1144, 5
      %v1147 = vsel %vm455, %v1142, %v1146
      %v1149 = vshrl.u32 %v1060, 16
      %v1151 = vrot.slane %v1149, 4
      %v1152 = vshll.u32 %v1060, 16
      %v1154 = vrot.slane %v1152, 5
      %v1155 = vor.u32 %v1151, %v1154
      %v1156 = vrot.slane %v1155, 4
      %v1158 = vshll.u32 %v1061, 16
      %v1160 = vrot.slane %v1158, 5
      %v1161 = vsel %vm455, %v1156, %v1160
      %v1163 = vshrl.u32 %v1062, 16
      %v1165 = vrot.slane %v1163, 4
      %v1166 = vshll.u32 %v1062, 16
      %v1168 = vrot.slane %v1166, 5
      %v1169 = vor.u32 %v1165, %v1168
      %v1170 = vrot.slane %v1169, 4
      %v1172 = vshll.u32 %v1063, 16
      %v1174 = vrot.slane %v1172, 5
      %v1175 = vsel %vm455, %v1170, %v1174
      %v1176 = vld [vmem:[%s1 + $0x8] sm:$0x3]
      %v1177 = vunpack.c.l.b16 %v1077
      %v1178 = vunpack.c.l.b16 %v1091
      %v1179 = vunpack.c.l.b16 %v1105
      %v1180 = vunpack.c.l.b16 %v1119
      %v1181 = vunpack.c.l.b16 %v1133
      %v1182 = vunpack.c.l.b16 %v1147
      %v1183 = vunpack.c.l.b16 %v1161
      %v1184 = vunpack.c.l.b16 %v1175
      %v1185 = vpack.c.b16 %v1178, %v1177
      %v1186 = vpack.c.b16 %v1180, %v1179
      %v1187 = vpack.c.b16 %v1182, %v1181
      %v1188 = vpack.c.b16 %v1184, %v1183
      %v1190 = vsel %vm585, %v1185, 0
      %v1193 = vsel %vm585, %v1186, 0
      %v1196 = vsel %vm585, %v1187, 0
      %v1199 = vsel %vm585, %v1188, 0
      %v1202 = vsel %vm598, %v1176, 0
      %1204 = vmatprep.subr.bf16.mxu0 0
      %1205 = vmatpush1.bf16.msra.mxu0 0
      %1206 = vmatprep.subr.bf16.mxu0 0
      %1207 = vmatpush1.bf16.msra.mxu0 0
      %1208 = vmatprep.subr.bf16.mxu0 0
      %1209 = vmatpush1.bf16.msra.mxu0 0
      %1210 = vmatprep.subr.bf16.mxu0 0
      %1211 = vmatpush1.bf16.msra.mxu0 0
      %1212 = vmatprep.subr.bf16.mxu0 0
      %1213 = vmatpush1.bf16.msra.mxu0 0
      %1214 = vmatprep.subr.bf16.mxu0 0
      %1215 = vmatpush1.bf16.msra.mxu0 0
      %1216 = vmatprep.subr.bf16.mxu0 0
      %1217 = vmatpush1.bf16.msra.mxu0 0
      %1218 = vmatprep.subr.bf16.mxu0 0
      %1219 = vmatpush1.bf16.msra.mxu0 %v1202
      %1220 = vmatprep.subr.bf16.mxu0 0
      %1221 = vmatpush2.bf16.msra.mxu0 0
      %1222 = vmatprep.subr.bf16.mxu0 0
      %1223 = vmatpush2.bf16.msra.mxu0 0
      %1224 = vmatprep.subr.bf16.mxu0 0
      %1225 = vmatpush2.bf16.msra.mxu0 0
      %1226 = vmatprep.subr.bf16.mxu0 0
      %1227 = vmatpush2.bf16.msra.mxu0 0
      %1228 = vmatprep.subr.bf16.mxu0 0
      %1229 = vmatpush2.bf16.msra.mxu0 0
      %1230 = vmatprep.subr.bf16.mxu0 0
      %1231 = vmatpush2.bf16.msra.mxu0 0
      %1232 = vmatprep.subr.bf16.mxu0 0
      %1233 = vmatpush2.bf16.msra.mxu0 0
      %1234 = vmatprep.subr.bf16.mxu0 0
      %1235 = vmatpush2.bf16.msra.mxu0 0
      %1236 = vmatprep.mubr.bf16.mxu0 0
      %1237 = vmatmul.mubr.bf16.gmra.mxu0 %v1190
      %v1238 = vpop.f32.mrf.mxu0
      %v1239 = vadd.f32 0.0, %v1238
      %v1240 = vpop.f32.mrf.mxu0
      %v1241 = vpop.f32.mrf.mxu0
      %v1242 = vadd.f32 0.0, %v1241
      %v1243 = vpop.f32.mrf.mxu0
      %1244 = vmatprep.mubr.bf16.mxu0 0
      %1245 = vmatmul.mubr.bf16.gmra.mxu0 %v1193
      %v1246 = vpop.f32.mrf.mxu0
      %v1247 = vadd.f32 0.0, %v1246
      %v1248 = vpop.f32.mrf.mxu0
      %v1249 = vpop.f32.mrf.mxu0
      %v1250 = vadd.f32 0.0, %v1249
      %v1251 = vpop.f32.mrf.mxu0
      %1252 = vmatprep.mubr.bf16.mxu0 0
      %1253 = vmatmul.mubr.bf16.gmra.mxu0 %v1196
      %v1254 = vpop.f32.mrf.mxu0
      %v1255 = vadd.f32 0.0, %v1254
      %v1256 = vpop.f32.mrf.mxu0
      %v1257 = vpop.f32.mrf.mxu0
      %v1258 = vadd.f32 0.0, %v1257
      %v1259 = vpop.f32.mrf.mxu0
      %1260 = vmatprep.mubr.bf16.mxu0 0
      %1261 = vmatmul.mubr.bf16.gmra.mxu0 %v1199
      %v1262 = vpop.f32.mrf.mxu0
      %v1263 = vadd.f32 0.0, %v1262
      %v1264 = vpop.f32.mrf.mxu0
      %v1265 = vpop.f32.mrf.mxu0
      %v1266 = vadd.f32 0.0, %v1265
      %v1267 = vpop.f32.mrf.mxu0
      %1268 = vdwg.mxu0
      %v1269 = vadd.f32 %v1040, %v1239
      %v1270 = vadd.f32 %v1041, %v1242
      %v1271 = vadd.f32 %v1042, %v1247
      %v1272 = vadd.f32 %v1043, %v1250
      %v1273 = vadd.f32 %v1044, %v1255
      %v1274 = vadd.f32 %v1045, %v1258
      %v1275 = vadd.f32 %v1046, %v1263
      %v1276 = vadd.f32 %v1047, %v1266
      %v1277 = vld [vmem:[%s381] sm:$0xe]
      %v1278 = vld [vmem:[%s381 + $0x8] sm:$0xe]
      %v1279 = vld [vmem:[%s381 + $0x10] sm:$0xe]
      %v1280 = vld [vmem:[%s381 + $0x18] sm:$0xe]
      %v1281 = vld [vmem:[%s381 + $0x20] sm:$0xe]
      %v1282 = vld [vmem:[%s381 + $0x28] sm:$0xe]
      %v1283 = vld [vmem:[%s381 + $0x30] sm:$0xe]
      %v1284 = vld [vmem:[%s381 + $0x38] sm:$0xe]
      %v1301 = vrot.slane %v1277, 5
      %v1302 = vrot.slane %v1301, 4
      %v1303 = vrot.slane %v1049, 5
      %v1304 = vsel %vm793, %v1302, %v1303
      %v1305 = vrot.slane %v1278, 5
      %v1306 = vrot.slane %v1305, 4
      %v1307 = vrot.slane %v1051, 5
      %v1308 = vsel %vm793, %v1306, %v1307
      %v1309 = vrot.slane %v1279, 5
      %v1310 = vrot.slane %v1309, 4
      %v1311 = vrot.slane %v1053, 5
      %v1312 = vsel %vm793, %v1310, %v1311
      %v1313 = vrot.slane %v1280, 5
      %v1314 = vrot.slane %v1313, 4
      %v1315 = vrot.slane %v1055, 5
      %v1316 = vsel %vm793, %v1314, %v1315
      %v1317 = vrot.slane %v1281, 5
      %v1318 = vrot.slane %v1317, 4
      %v1319 = vrot.slane %v1057, 5
      %v1320 = vsel %vm793, %v1318, %v1319
      %v1321 = vrot.slane %v1282, 5
      %v1322 = vrot.slane %v1321, 4
      %v1323 = vrot.slane %v1059, 5
      %v1324 = vsel %vm793, %v1322, %v1323
      %v1325 = vrot.slane %v1283, 5
      %v1326 = vrot.slane %v1325, 4
      %v1327 = vrot.slane %v1061, 5
      %v1328 = vsel %vm793, %v1326, %v1327
      %v1329 = vrot.slane %v1284, 5
      %v1330 = vrot.slane %v1329, 4
      %v1331 = vrot.slane %v1063, 5
      %v1332 = vsel %vm793, %v1330, %v1331
      %v1333 = vld [vmem:[%s1 + $0x8] sm:$0xc]
      %v1334 = vunpack.c.l.b16 %v1304
      %v1335 = vunpack.c.l.b16 %v1308
      %v1336 = vunpack.c.l.b16 %v1312
      %v1337 = vunpack.c.l.b16 %v1316
      %v1338 = vunpack.c.l.b16 %v1320
      %v1339 = vunpack.c.l.b16 %v1324
      %v1340 = vunpack.c.l.b16 %v1328
      %v1341 = vunpack.c.l.b16 %v1332
      %v1342 = vpack.c.b16 %v1335, %v1334
      %v1343 = vpack.c.b16 %v1337, %v1336
      %v1344 = vpack.c.b16 %v1339, %v1338
      %v1345 = vpack.c.b16 %v1341, %v1340
      %v1347 = vunpack.c.l.b16 %v1333
      %v1348 = vpack.c.b16 %v1347, %v1347
      %v1349 = vrot.slane %v1348, 2
      %v1351 = vsel %vm585, %v1342, 0
      %v1354 = vsel %vm585, %v1343, 0
      %v1357 = vsel %vm585, %v1344, 0
      %v1360 = vsel %vm585, %v1345, 0
      %v1363 = vsel %vm598, %v1349, 0
      %1365 = vmatprep.subr.bf16.mxu0 0
      %1366 = vmatpush1.bf16.msra.mxu0 0
      %1367 = vmatprep.subr.bf16.mxu0 0
      %1368 = vmatpush1.bf16.msra.mxu0 0
      %1369 = vmatprep.subr.bf16.mxu0 0
      %1370 = vmatpush1.bf16.msra.mxu0 0
      %1371 = vmatprep.subr.bf16.mxu0 0
      %1372 = vmatpush1.bf16.msra.mxu0 0
      %1373 = vmatprep.subr.bf16.mxu0 0
      %1374 = vmatpush1.bf16.msra.mxu0 0
      %1375 = vmatprep.subr.bf16.mxu0 0
      %1376 = vmatpush1.bf16.msra.mxu0 0
      %1377 = vmatprep.subr.bf16.mxu0 0
      %1378 = vmatpush1.bf16.msra.mxu0 0
      %1379 = vmatprep.subr.bf16.mxu0 0
      %1380 = vmatpush1.bf16.msra.mxu0 %v1363
      %1381 = vmatprep.subr.bf16.mxu0 0
      %1382 = vmatpush2.bf16.msra.mxu0 0
      %1383 = vmatprep.subr.bf16.mxu0 0
      %1384 = vmatpush2.bf16.msra.mxu0 0
      %1385 = vmatprep.subr.bf16.mxu0 0
      %1386 = vmatpush2.bf16.msra.mxu0 0
      %1387 = vmatprep.subr.bf16.mxu0 0
      %1388 = vmatpush2.bf16.msra.mxu0 0
      %1389 = vmatprep.subr.bf16.mxu0 0
      %1390 = vmatpush2.bf16.msra.mxu0 0
      %1391 = vmatprep.subr.bf16.mxu0 0
      %1392 = vmatpush2.bf16.msra.mxu0 0
      %1393 = vmatprep.subr.bf16.mxu0 0
      %1394 = vmatpush2.bf16.msra.mxu0 0
      %1395 = vmatprep.subr.bf16.mxu0 0
      %1396 = vmatpush2.bf16.msra.mxu0 0
      %1397 = vmatprep.mubr.bf16.mxu0 0
      %1398 = vmatmul.mubr.bf16.gmra.mxu0 %v1351
      %v1399 = vpop.f32.mrf.mxu0
      %v1400 = vadd.f32 0.0, %v1399
      %v1401 = vpop.f32.mrf.mxu0
      %v1402 = vpop.f32.mrf.mxu0
      %v1403 = vadd.f32 0.0, %v1402
      %v1404 = vpop.f32.mrf.mxu0
      %1405 = vmatprep.mubr.bf16.mxu0 0
      %1406 = vmatmul.mubr.bf16.gmra.mxu0 %v1354
      %v1407 = vpop.f32.mrf.mxu0
      %v1408 = vadd.f32 0.0, %v1407
      %v1409 = vpop.f32.mrf.mxu0
      %v1410 = vpop.f32.mrf.mxu0
      %v1411 = vadd.f32 0.0, %v1410
      %v1412 = vpop.f32.mrf.mxu0
      %1413 = vmatprep.mubr.bf16.mxu0 0
      %1414 = vmatmul.mubr.bf16.gmra.mxu0 %v1357
      %v1415 = vpop.f32.mrf.mxu0
      %v1416 = vadd.f32 0.0, %v1415
      %v1417 = vpop.f32.mrf.mxu0
      %v1418 = vpop.f32.mrf.mxu0
      %v1419 = vadd.f32 0.0, %v1418
      %v1420 = vpop.f32.mrf.mxu0
      %1421 = vmatprep.mubr.bf16.mxu0 0
      %1422 = vmatmul.mubr.bf16.gmra.mxu0 %v1360
      %v1423 = vpop.f32.mrf.mxu0
      %v1424 = vadd.f32 0.0, %v1423
      %v1425 = vpop.f32.mrf.mxu0
      %v1426 = vpop.f32.mrf.mxu0
      %v1427 = vadd.f32 0.0, %v1426
      %v1428 = vpop.f32.mrf.mxu0
      %1429 = vdwg.mxu0
      %v1430 = vadd.f32 %v1269, %v1400
      %v1431 = vadd.f32 %v1270, %v1403
      %v1432 = vadd.f32 %v1271, %v1408
      %v1433 = vadd.f32 %v1272, %v1411
      %v1434 = vadd.f32 %v1273, %v1416
      %v1435 = vadd.f32 %v1274, %v1419
      %v1436 = vadd.f32 %v1275, %v1424
      %v1437 = vadd.f32 %v1276, %v1427
      %s1438 = scalar_lea.vmem [#allocation2], 16
      %v1439 = vld [vmem:[%s1438] sm:$0xf]
      %v1440 = vld [vmem:[%s1438 + $0x8] sm:$0xf]
      %v1441 = vld [vmem:[%s1438 + $0x10] sm:$0xf]
      %v1442 = vld [vmem:[%s1438 + $0x18] sm:$0xf]
      %v1443 = vld [vmem:[%s1438 + $0x20] sm:$0xf]
      %v1444 = vld [vmem:[%s1438 + $0x28] sm:$0xf]
      %v1445 = vld [vmem:[%s1438 + $0x30] sm:$0xf]
      %v1446 = vld [vmem:[%s1438 + $0x38] sm:$0xf]
      %v1447 = vld [vmem:[%s1 + $0xc] sm:$0x3]
      %v1456 = vunpack.c.l.b16 %v1439
      %v1457 = vunpack.c.l.b16 %v1440
      %v1458 = vunpack.c.l.b16 %v1441
      %v1459 = vunpack.c.l.b16 %v1442
      %v1460 = vunpack.c.l.b16 %v1443
      %v1461 = vunpack.c.l.b16 %v1444
      %v1462 = vunpack.c.l.b16 %v1445
      %v1463 = vunpack.c.l.b16 %v1446
      %v1464 = vpack.c.b16 %v1457, %v1456
      %v1465 = vpack.c.b16 %v1459, %v1458
      %v1466 = vpack.c.b16 %v1461, %v1460
      %v1467 = vpack.c.b16 %v1463, %v1462
      %v1469 = vsel %vm585, %v1464, 0
      %v1472 = vsel %vm585, %v1465, 0
      %v1475 = vsel %vm585, %v1466, 0
      %v1478 = vsel %vm585, %v1467, 0
      %v1481 = vsel %vm598, %v1447, 0
      %1483 = vmatprep.subr.bf16.mxu0 0
      %1484 = vmatpush1.bf16.msra.mxu0 0
      %1485 = vmatprep.subr.bf16.mxu0 0
      %1486 = vmatpush1.bf16.msra.mxu0 0
      %1487 = vmatprep.subr.bf16.mxu0 0
      %1488 = vmatpush1.bf16.msra.mxu0 0
      %1489 = vmatprep.subr.bf16.mxu0 0
      %1490 = vmatpush1.bf16.msra.mxu0 0
      %1491 = vmatprep.subr.bf16.mxu0 0
      %1492 = vmatpush1.bf16.msra.mxu0 0
      %1493 = vmatprep.subr.bf16.mxu0 0
      %1494 = vmatpush1.bf16.msra.mxu0 0
      %1495 = vmatprep.subr.bf16.mxu0 0
      %1496 = vmatpush1.bf16.msra.mxu0 0
      %1497 = vmatprep.subr.bf16.mxu0 0
      %1498 = vmatpush1.bf16.msra.mxu0 %v1481
      %1499 = vmatprep.subr.bf16.mxu0 0
      %1500 = vmatpush2.bf16.msra.mxu0 0
      %1501 = vmatprep.subr.bf16.mxu0 0
      %1502 = vmatpush2.bf16.msra.mxu0 0
      %1503 = vmatprep.subr.bf16.mxu0 0
      %1504 = vmatpush2.bf16.msra.mxu0 0
      %1505 = vmatprep.subr.bf16.mxu0 0
      %1506 = vmatpush2.bf16.msra.mxu0 0
      %1507 = vmatprep.subr.bf16.mxu0 0
      %1508 = vmatpush2.bf16.msra.mxu0 0
      %1509 = vmatprep.subr.bf16.mxu0 0
      %1510 = vmatpush2.bf16.msra.mxu0 0
      %1511 = vmatprep.subr.bf16.mxu0 0
      %1512 = vmatpush2.bf16.msra.mxu0 0
      %1513 = vmatprep.subr.bf16.mxu0 0
      %1514 = vmatpush2.bf16.msra.mxu0 0
      %1515 = vmatprep.mubr.bf16.mxu0 0
      %1516 = vmatmul.mubr.bf16.gmra.mxu0 %v1469
      %v1517 = vpop.f32.mrf.mxu0
      %v1518 = vadd.f32 0.0, %v1517
      %v1519 = vpop.f32.mrf.mxu0
      %v1520 = vpop.f32.mrf.mxu0
      %v1521 = vadd.f32 0.0, %v1520
      %v1522 = vpop.f32.mrf.mxu0
      %1523 = vmatprep.mubr.bf16.mxu0 0
      %1524 = vmatmul.mubr.bf16.gmra.mxu0 %v1472
      %v1525 = vpop.f32.mrf.mxu0
      %v1526 = vadd.f32 0.0, %v1525
      %v1527 = vpop.f32.mrf.mxu0
      %v1528 = vpop.f32.mrf.mxu0
      %v1529 = vadd.f32 0.0, %v1528
      %v1530 = vpop.f32.mrf.mxu0
      %1531 = vmatprep.mubr.bf16.mxu0 0
      %1532 = vmatmul.mubr.bf16.gmra.mxu0 %v1475
      %v1533 = vpop.f32.mrf.mxu0
      %v1534 = vadd.f32 0.0, %v1533
      %v1535 = vpop.f32.mrf.mxu0
      %v1536 = vpop.f32.mrf.mxu0
      %v1537 = vadd.f32 0.0, %v1536
      %v1538 = vpop.f32.mrf.mxu0
      %1539 = vmatprep.mubr.bf16.mxu0 0
      %1540 = vmatmul.mubr.bf16.gmra.mxu0 %v1478
      %v1541 = vpop.f32.mrf.mxu0
      %v1542 = vadd.f32 0.0, %v1541
      %v1543 = vpop.f32.mrf.mxu0
      %v1544 = vpop.f32.mrf.mxu0
      %v1545 = vadd.f32 0.0, %v1544
      %v1546 = vpop.f32.mrf.mxu0
      %1547 = vdwg.mxu0
      %v1548 = vadd.f32 %v1430, %v1518
      %v1549 = vadd.f32 %v1431, %v1521
      %v1550 = vadd.f32 %v1432, %v1526
      %v1551 = vadd.f32 %v1433, %v1529
      %v1552 = vadd.f32 %v1434, %v1534
      %v1553 = vadd.f32 %v1435, %v1537
      %v1554 = vadd.f32 %v1436, %v1542
      %v1555 = vadd.f32 %v1437, %v1545
      %v1556 = vld [vmem:[%s1438] sm:$0xf]
      %v1557 = vld [vmem:[%s1438 + $0x4] sm:$0x1]
      %v1558 = vld [vmem:[%s1438 + $0x8] sm:$0xf]
      %v1559 = vld [vmem:[%s1438 + $0xc] sm:$0x1]
      %v1560 = vld [vmem:[%s1438 + $0x10] sm:$0xf]
      %v1561 = vld [vmem:[%s1438 + $0x14] sm:$0x1]
      %v1562 = vld [vmem:[%s1438 + $0x18] sm:$0xf]
      %v1563 = vld [vmem:[%s1438 + $0x1c] sm:$0x1]
      %v1564 = vld [vmem:[%s1438 + $0x20] sm:$0xf]
      %v1565 = vld [vmem:[%s1438 + $0x24] sm:$0x1]
      %v1566 = vld [vmem:[%s1438 + $0x28] sm:$0xf]
      %v1567 = vld [vmem:[%s1438 + $0x2c] sm:$0x1]
      %v1568 = vld [vmem:[%s1438 + $0x30] sm:$0xf]
      %v1569 = vld [vmem:[%s1438 + $0x34] sm:$0x1]
      %v1570 = vld [vmem:[%s1438 + $0x38] sm:$0xf]
      %v1571 = vld [vmem:[%s1438 + $0x3c] sm:$0x1]
      %v1573 = vshrl.u32 %v1556, 16
      %v1575 = vrot.slane %v1573, 4
      %v1576 = vshll.u32 %v1556, 16
      %v1578 = vrot.slane %v1576, 5
      %v1579 = vor.u32 %v1575, %v1578
      %v1580 = vrot.slane %v1579, 4
      %v1582 = vshll.u32 %v1557, 16
      %v1584 = vrot.slane %v1582, 5
      %v1585 = vsel %vm455, %v1580, %v1584
      %v1587 = vshrl.u32 %v1558, 16
      %v1589 = vrot.slane %v1587, 4
      %v1590 = vshll.u32 %v1558, 16
      %v1592 = vrot.slane %v1590, 5
      %v1593 = vor.u32 %v1589, %v1592
      %v1594 = vrot.slane %v1593, 4
      %v1596 = vshll.u32 %v1559, 16
      %v1598 = vrot.slane %v1596, 5
      %v1599 = vsel %vm455, %v1594, %v1598
      %v1601 = vshrl.u32 %v1560, 16
      %v1603 = vrot.slane %v1601, 4
      %v1604 = vshll.u32 %v1560, 16
      %v1606 = vrot.slane %v1604, 5
      %v1607 = vor.u32 %v1603, %v1606
      %v1608 = vrot.slane %v1607, 4
      %v1610 = vshll.u32 %v1561, 16
      %v1612 = vrot.slane %v1610, 5
      %v1613 = vsel %vm455, %v1608, %v1612
      %v1615 = vshrl.u32 %v1562, 16
      %v1617 = vrot.slane %v1615, 4
      %v1618 = vshll.u32 %v1562, 16
      %v1620 = vrot.slane %v1618, 5
      %v1621 = vor.u32 %v1617, %v1620
      %v1622 = vrot.slane %v1621, 4
      %v1624 = vshll.u32 %v1563, 16
      %v1626 = vrot.slane %v1624, 5
      %v1627 = vsel %vm455, %v1622, %v1626
      %v1629 = vshrl.u32 %v1564, 16
      %v1631 = vrot.slane %v1629, 4
      %v1632 = vshll.u32 %v1564, 16
      %v1634 = vrot.slane %v1632, 5
      %v1635 = vor.u32 %v1631, %v1634
      %v1636 = vrot.slane %v1635, 4
      %v1638 = vshll.u32 %v1565, 16
      %v1640 = vrot.slane %v1638, 5
      %v1641 = vsel %vm455, %v1636, %v1640
      %v1643 = vshrl.u32 %v1566, 16
      %v1645 = vrot.slane %v1643, 4
      %v1646 = vshll.u32 %v1566, 16
      %v1648 = vrot.slane %v1646, 5
      %v1649 = vor.u32 %v1645, %v1648
      %v1650 = vrot.slane %v1649, 4
      %v1652 = vshll.u32 %v1567, 16
      %v1654 = vrot.slane %v1652, 5
      %v1655 = vsel %vm455, %v1650, %v1654
      %v1657 = vshrl.u32 %v1568, 16
      %v1659 = vrot.slane %v1657, 4
      %v1660 = vshll.u32 %v1568, 16
      %v1662 = vrot.slane %v1660, 5
      %v1663 = vor.u32 %v1659, %v1662
      %v1664 = vrot.slane %v1663, 4
      %v1666 = vshll.u32 %v1569, 16
      %v1668 = vrot.slane %v1666, 5
      %v1669 = vsel %vm455, %v1664, %v1668
      %v1671 = vshrl.u32 %v1570, 16
      %v1673 = vrot.slane %v1671, 4
      %v1674 = vshll.u32 %v1570, 16
      %v1676 = vrot.slane %v1674, 5
      %v1677 = vor.u32 %v1673, %v1676
      %v1678 = vrot.slane %v1677, 4
      %v1680 = vshll.u32 %v1571, 16
      %v1682 = vrot.slane %v1680, 5
      %v1683 = vsel %vm455, %v1678, %v1682
      %v1684 = vld [vmem:[%s1 + $0xc] sm:$0xc]
      %v1685 = vunpack.c.l.b16 %v1585
      %v1686 = vunpack.c.l.b16 %v1599
      %v1687 = vunpack.c.l.b16 %v1613
      %v1688 = vunpack.c.l.b16 %v1627
      %v1689 = vunpack.c.l.b16 %v1641
      %v1690 = vunpack.c.l.b16 %v1655
      %v1691 = vunpack.c.l.b16 %v1669
      %v1692 = vunpack.c.l.b16 %v1683
      %v1693 = vpack.c.b16 %v1686, %v1685
      %v1694 = vpack.c.b16 %v1688, %v1687
      %v1695 = vpack.c.b16 %v1690, %v1689
      %v1696 = vpack.c.b16 %v1692, %v1691
      %v1698 = vunpack.c.l.b16 %v1684
      %v1699 = vpack.c.b16 %v1698, %v1698
      %v1700 = vrot.slane %v1699, 2
      %v1702 = vsel %vm585, %v1693, 0
      %v1705 = vsel %vm585, %v1694, 0
      %v1708 = vsel %vm585, %v1695, 0
      %v1711 = vsel %vm585, %v1696, 0
      %v1714 = vsel %vm598, %v1700, 0
      %1716 = vmatprep.subr.bf16.mxu0 0
      %1717 = vmatpush1.bf16.msra.mxu0 0
      %1718 = vmatprep.subr.bf16.mxu0 0
      %1719 = vmatpush1.bf16.msra.mxu0 0
      %1720 = vmatprep.subr.bf16.mxu0 0
      %1721 = vmatpush1.bf16.msra.mxu0 0
      %1722 = vmatprep.subr.bf16.mxu0 0
      %1723 = vmatpush1.bf16.msra.mxu0 0
      %1724 = vmatprep.subr.bf16.mxu0 0
      %1725 = vmatpush1.bf16.msra.mxu0 0
      %1726 = vmatprep.subr.bf16.mxu0 0
      %1727 = vmatpush1.bf16.msra.mxu0 0
      %1728 = vmatprep.subr.bf16.mxu0 0
      %1729 = vmatpush1.bf16.msra.mxu0 0
      %1730 = vmatprep.subr.bf16.mxu0 0
      %1731 = vmatpush1.bf16.msra.mxu0 %v1714
      %1732 = vmatprep.subr.bf16.mxu0 0
      %1733 = vmatpush2.bf16.msra.mxu0 0
      %1734 = vmatprep.subr.bf16.mxu0 0
      %1735 = vmatpush2.bf16.msra.mxu0 0
      %1736 = vmatprep.subr.bf16.mxu0 0
      %1737 = vmatpush2.bf16.msra.mxu0 0
      %1738 = vmatprep.subr.bf16.mxu0 0
      %1739 = vmatpush2.bf16.msra.mxu0 0
      %1740 = vmatprep.subr.bf16.mxu0 0
      %1741 = vmatpush2.bf16.msra.mxu0 0
      %1742 = vmatprep.subr.bf16.mxu0 0
      %1743 = vmatpush2.bf16.msra.mxu0 0
      %1744 = vmatprep.subr.bf16.mxu0 0
      %1745 = vmatpush2.bf16.msra.mxu0 0
      %1746 = vmatprep.subr.bf16.mxu0 0
      %1747 = vmatpush2.bf16.msra.mxu0 0
      %1748 = vmatprep.mubr.bf16.mxu0 0
      %1749 = vmatmul.mubr.bf16.gmra.mxu0 %v1702
      %v1750 = vpop.f32.mrf.mxu0
      %v1751 = vadd.f32 0.0, %v1750
      %v1752 = vpop.f32.mrf.mxu0
      %v1753 = vpop.f32.mrf.mxu0
      %v1754 = vadd.f32 0.0, %v1753
      %v1755 = vpop.f32.mrf.mxu0
      %1756 = vmatprep.mubr.bf16.mxu0 0
      %1757 = vmatmul.mubr.bf16.gmra.mxu0 %v1705
      %v1758 = vpop.f32.mrf.mxu0
      %v1759 = vadd.f32 0.0, %v1758
      %v1760 = vpop.f32.mrf.mxu0
      %v1761 = vpop.f32.mrf.mxu0
      %v1762 = vadd.f32 0.0, %v1761
      %v1763 = vpop.f32.mrf.mxu0
      %1764 = vmatprep.mubr.bf16.mxu0 0
      %1765 = vmatmul.mubr.bf16.gmra.mxu0 %v1708
      %v1766 = vpop.f32.mrf.mxu0
      %v1767 = vadd.f32 0.0, %v1766
      %v1768 = vpop.f32.mrf.mxu0
      %v1769 = vpop.f32.mrf.mxu0
      %v1770 = vadd.f32 0.0, %v1769
      %v1771 = vpop.f32.mrf.mxu0
      %1772 = vmatprep.mubr.bf16.mxu0 0
      %1773 = vmatmul.mubr.bf16.gmra.mxu0 %v1711
      %v1774 = vpop.f32.mrf.mxu0
      %v1775 = vadd.f32 0.0, %v1774
      %v1776 = vpop.f32.mrf.mxu0
      %v1777 = vpop.f32.mrf.mxu0
      %v1778 = vadd.f32 0.0, %v1777
      %v1779 = vpop.f32.mrf.mxu0
      %1780 = vdwg.mxu0
      %v1781 = vadd.f32 %v1548, %v1751
      %v1782 = vadd.f32 %v1549, %v1754
      %v1783 = vadd.f32 %v1550, %v1759
      %v1784 = vadd.f32 %v1551, %v1762
      %v1785 = vadd.f32 %v1552, %v1767
      %v1786 = vadd.f32 %v1553, %v1770
      %v1787 = vadd.f32 %v1554, %v1775
      %v1788 = vadd.f32 %v1555, %v1778
      %v1789 = vld [vmem:[%s1438] sm:$0xe]
      %v1790 = vld [vmem:[%s1438 + $0x8] sm:$0xe]
      %v1791 = vld [vmem:[%s1438 + $0x10] sm:$0xe]
      %v1792 = vld [vmem:[%s1438 + $0x18] sm:$0xe]
      %v1793 = vld [vmem:[%s1438 + $0x20] sm:$0xe]
      %v1794 = vld [vmem:[%s1438 + $0x28] sm:$0xe]
      %v1795 = vld [vmem:[%s1438 + $0x30] sm:$0xe]
      %v1796 = vld [vmem:[%s1438 + $0x38] sm:$0xe]
      %v1813 = vrot.slane %v1789, 5
      %v1814 = vrot.slane %v1813, 4
      %v1815 = vrot.slane %v1557, 5
      %v1816 = vsel %vm793, %v1814, %v1815
      %v1817 = vrot.slane %v1790, 5
      %v1818 = vrot.slane %v1817, 4
      %v1819 = vrot.slane %v1559, 5
      %v1820 = vsel %vm793, %v1818, %v1819
      %v1821 = vrot.slane %v1791, 5
      %v1822 = vrot.slane %v1821, 4
      %v1823 = vrot.slane %v1561, 5
      %v1824 = vsel %vm793, %v1822, %v1823
      %v1825 = vrot.slane %v1792, 5
      %v1826 = vrot.slane %v1825, 4
      %v1827 = vrot.slane %v1563, 5
      %v1828 = vsel %vm793, %v1826, %v1827
      %v1829 = vrot.slane %v1793, 5
      %v1830 = vrot.slane %v1829, 4
      %v1831 = vrot.slane %v1565, 5
      %v1832 = vsel %vm793, %v1830, %v1831
      %v1833 = vrot.slane %v1794, 5
      %v1834 = vrot.slane %v1833, 4
      %v1835 = vrot.slane %v1567, 5
      %v1836 = vsel %vm793, %v1834, %v1835
      %v1837 = vrot.slane %v1795, 5
      %v1838 = vrot.slane %v1837, 4
      %v1839 = vrot.slane %v1569, 5
      %v1840 = vsel %vm793, %v1838, %v1839
      %v1841 = vrot.slane %v1796, 5
      %v1842 = vrot.slane %v1841, 4
      %v1843 = vrot.slane %v1571, 5
      %v1844 = vsel %vm793, %v1842, %v1843
      %v1845 = vld [vmem:[%s1 + $0x10] sm:$0x3]
      %v1846 = vunpack.c.l.b16 %v1816
      %v1847 = vunpack.c.l.b16 %v1820
      %v1848 = vunpack.c.l.b16 %v1824
      %v1849 = vunpack.c.l.b16 %v1828
      %v1850 = vunpack.c.l.b16 %v1832
      %v1851 = vunpack.c.l.b16 %v1836
      %v1852 = vunpack.c.l.b16 %v1840
      %v1853 = vunpack.c.l.b16 %v1844
      %v1854 = vpack.c.b16 %v1847, %v1846
      %v1855 = vpack.c.b16 %v1849, %v1848
      %v1856 = vpack.c.b16 %v1851, %v1850
      %v1857 = vpack.c.b16 %v1853, %v1852
      %v1859 = vsel %vm585, %v1854, 0
      %v1862 = vsel %vm585, %v1855, 0
      %v1865 = vsel %vm585, %v1856, 0
      %v1868 = vsel %vm585, %v1857, 0
      %v1871 = vsel %vm598, %v1845, 0
      %1873 = vmatprep.subr.bf16.mxu0 0
      %1874 = vmatpush1.bf16.msra.mxu0 0
      %1875 = vmatprep.subr.bf16.mxu0 0
      %1876 = vmatpush1.bf16.msra.mxu0 0
      %1877 = vmatprep.subr.bf16.mxu0 0
      %1878 = vmatpush1.bf16.msra.mxu0 0
      %1879 = vmatprep.subr.bf16.mxu0 0
      %1880 = vmatpush1.bf16.msra.mxu0 0
      %1881 = vmatprep.subr.bf16.mxu0 0
      %1882 = vmatpush1.bf16.msra.mxu0 0
      %1883 = vmatprep.subr.bf16.mxu0 0
      %1884 = vmatpush1.bf16.msra.mxu0 0
      %1885 = vmatprep.subr.bf16.mxu0 0
      %1886 = vmatpush1.bf16.msra.mxu0 0
      %1887 = vmatprep.subr.bf16.mxu0 0
      %1888 = vmatpush1.bf16.msra.mxu0 %v1871
      %1889 = vmatprep.subr.bf16.mxu0 0
      %1890 = vmatpush2.bf16.msra.mxu0 0
      %1891 = vmatprep.subr.bf16.mxu0 0
      %1892 = vmatpush2.bf16.msra.mxu0 0
      %1893 = vmatprep.subr.bf16.mxu0 0
      %1894 = vmatpush2.bf16.msra.mxu0 0
      %1895 = vmatprep.subr.bf16.mxu0 0
      %1896 = vmatpush2.bf16.msra.mxu0 0
      %1897 = vmatprep.subr.bf16.mxu0 0
      %1898 = vmatpush2.bf16.msra.mxu0 0
      %1899 = vmatprep.subr.bf16.mxu0 0
      %1900 = vmatpush2.bf16.msra.mxu0 0
      %1901 = vmatprep.subr.bf16.mxu0 0
      %1902 = vmatpush2.bf16.msra.mxu0 0
      %1903 = vmatprep.subr.bf16.mxu0 0
      %1904 = vmatpush2.bf16.msra.mxu0 0
      %1905 = vmatprep.mubr.bf16.mxu0 0
      %1906 = vmatmul.mubr.bf16.gmra.mxu0 %v1859
      %v1907 = vpop.f32.mrf.mxu0
      %v1908 = vadd.f32 0.0, %v1907
      %v1909 = vpop.f32.mrf.mxu0
      %v1910 = vpop.f32.mrf.mxu0
      %v1911 = vadd.f32 0.0, %v1910
      %v1912 = vpop.f32.mrf.mxu0
      %1913 = vmatprep.mubr.bf16.mxu0 0
      %1914 = vmatmul.mubr.bf16.gmra.mxu0 %v1862
      %v1915 = vpop.f32.mrf.mxu0
      %v1916 = vadd.f32 0.0, %v1915
      %v1917 = vpop.f32.mrf.mxu0
      %v1918 = vpop.f32.mrf.mxu0
      %v1919 = vadd.f32 0.0, %v1918
      %v1920 = vpop.f32.mrf.mxu0
      %1921 = vmatprep.mubr.bf16.mxu0 0
      %1922 = vmatmul.mubr.bf16.gmra.mxu0 %v1865
      %v1923 = vpop.f32.mrf.mxu0
      %v1924 = vadd.f32 0.0, %v1923
      %v1925 = vpop.f32.mrf.mxu0
      %v1926 = vpop.f32.mrf.mxu0
      %v1927 = vadd.f32 0.0, %v1926
      %v1928 = vpop.f32.mrf.mxu0
      %1929 = vmatprep.mubr.bf16.mxu0 0
      %1930 = vmatmul.mubr.bf16.gmra.mxu0 %v1868
      %v1931 = vpop.f32.mrf.mxu0
      %v1932 = vadd.f32 0.0, %v1931
      %v1933 = vpop.f32.mrf.mxu0
      %v1934 = vpop.f32.mrf.mxu0
      %v1935 = vadd.f32 0.0, %v1934
      %v1936 = vpop.f32.mrf.mxu0
      %1937 = vdwg.mxu0
      %v1938 = vadd.f32 %v1781, %v1908
      %v1939 = vadd.f32 %v1782, %v1911
      %v1940 = vadd.f32 %v1783, %v1916
      %v1941 = vadd.f32 %v1784, %v1919
      %v1942 = vadd.f32 %v1785, %v1924
      %v1943 = vadd.f32 %v1786, %v1927
      %v1944 = vadd.f32 %v1787, %v1932
      %v1945 = vadd.f32 %v1788, %v1935
      %v1946 = vpack.c.bf16 %v1938, %v1938
      %v1947 = vpack.c.bf16 %v1939, %v1939
      %v1948 = vpack.c.bf16 %v1940, %v1940
      %v1949 = vpack.c.bf16 %v1941, %v1941
      %v1950 = vpack.c.bf16 %v1942, %v1942
      %v1951 = vpack.c.bf16 %v1943, %v1943
      %v1952 = vpack.c.bf16 %v1944, %v1944
      %v1953 = vpack.c.bf16 %v1945, %v1945
      %vm1954 = vcmask 60416
      %1955 = vst.msk [vmem:[%s177] sm:$0xf] %vm1954, %v1946
      %1956 = vst.msk [vmem:[%s177 + $0x4] sm:$0xf] %vm1954, %v1947
      %1957 = vst.msk [vmem:[%s177 + $0x8] sm:$0xf] %vm1954, %v1948
      %1958 = vst.msk [vmem:[%s177 + $0xc] sm:$0xf] %vm1954, %v1949
      %1959 = vst.msk [vmem:[%s177 + $0x10] sm:$0xf] %vm1954, %v1950
      %1960 = vst.msk [vmem:[%s177 + $0x14] sm:$0xf] %vm1954, %v1951
      %1961 = vst.msk [vmem:[%s177 + $0x18] sm:$0xf] %vm1954, %v1952
      %1962 = vst.msk [vmem:[%s177 + $0x1c] sm:$0xf] %vm1954, %v1953
      %vm1963 = vcmask 64512
      %v1964 = vsel %vm1963, %v1938, 0.0
      %v1965 = vsel %vm1963, %v1939, 0.0
      %v1966 = vadd.f32 %v1964, %v1965
      %v1967 = vsel %vm1963, %v1940, 0.0
      %v1968 = vadd.f32 %v1966, %v1967
      %v1969 = vsel %vm1963, %v1941, 0.0
      %v1970 = vadd.f32 %v1968, %v1969
      %v1971 = vsel %vm1963, %v1942, 0.0
      %v1972 = vadd.f32 %v1970, %v1971
      %v1973 = vsel %vm1963, %v1943, 0.0
      %v1974 = vadd.f32 %v1972, %v1973
      %v1975 = vsel %vm1963, %v1944, 0.0
      %v1976 = vadd.f32 %v1974, %v1975
      %v1977 = vsel %vm1963, %v1945, 0.0
      %v1978 = vadd.f32 %v1976, %v1977
      %v1979 = vrot.slane %v1978, 4
      %v1980 = vadd.f32 %v1978, %v1979
      %v1981 = vrot.slane %v1980, 2
      %v1982 = vadd.f32 %v1980, %v1981
      %v1983 = vrot.slane %v1982, 1
      %v1984 = vadd.f32 %v1982, %v1983
      %v1985 = vmul.f32 %v1938, %v1938
      %v1986 = vmul.f32 %v1939, %v1939
      %v1987 = vmul.f32 %v1940, %v1940
      %v1988 = vmul.f32 %v1941, %v1941
      %v1989 = vmul.f32 %v1942, %v1942
      %v1990 = vmul.f32 %v1943, %v1943
      %v1991 = vmul.f32 %v1944, %v1944
      %v1992 = vmul.f32 %v1945, %v1945
      %v1993 = vsel %vm1963, %v1985, 0.0
      %v1994 = vsel %vm1963, %v1986, 0.0
      %v1995 = vadd.f32 %v1993, %v1994
      %v1996 = vsel %vm1963, %v1987, 0.0
      %v1997 = vadd.f32 %v1995, %v1996
      %v1998 = vsel %vm1963, %v1988, 0.0
      %v1999 = vadd.f32 %v1997, %v1998
      %v2000 = vsel %vm1963, %v1989, 0.0
      %v2001 = vadd.f32 %v1999, %v2000
      %v2002 = vsel %vm1963, %v1990, 0.0
      %v2003 = vadd.f32 %v2001, %v2002
      %v2004 = vsel %vm1963, %v1991, 0.0
      %v2005 = vadd.f32 %v2003, %v2004
      %v2006 = vsel %vm1963, %v1992, 0.0
      %v2007 = vadd.f32 %v2005, %v2006
      %v2008 = vrot.slane %v2007, 4
      %v2009 = vadd.f32 %v2007, %v2008
      %v2010 = vrot.slane %v2009, 2
      %v2011 = vadd.f32 %v2009, %v2010
      %v2012 = vrot.slane %v2011, 1
      %v2013 = vadd.f32 %v2011, %v2012
      %vm2014 = vcmask 1040384
      %v2015 = vsel %vm2014, %v1984, %v2013
      %vm2016 = vcmask 58368
      %2017 = vst.msk [vmem:[%s181] sm:$0x3] %vm2016, %v2015
      %p2018 = scmp.lt.s32.totalorder %s15, 1
      %s2019 = scalar_select %p2018, %s15, 1
      %s2020 = smul.addr %s2019, 8
      %s2021 = smul.addr %s2020, 4
      %s2022 = scalar_lea.vmem %s2, %s2021
      %p2023 = scmp.lt.s32.totalorder %s15, 1
      %s2024 = scalar_select %p2023, %s15, 1
      %s2025 = smul.addr %s2024, 2
      %s2026 = scalar_lea.vmem %s3, %s2025
      // Predicated region
      $region29: #{down_forward.2} parent=27 // pred_check
        %p2027 = pneg %p80
      $region30: #{down_forward.2} parent=27 // pred_check_branch
        %2029 = sbr.rel (%p2027) target = $region32
      $region31: #{down_forward.2} parent=27 // pred_region
        _
      $region32: #{down_forward.2} parent=27 // pred_fallthru
        _
      // Predicated region
      $region33: #{down_forward.2} parent=27 // pred_check
        %p2030 = pneg %p106
      $region34: #{down_forward.2} parent=27 // pred_check_branch
        %2032 = sbr.rel (%p2030) target = $region36
      $region35: #{down_forward.2} parent=27 // pred_region
        _
      $region36: #{down_forward.2} parent=27 // pred_fallthru
        _
    $region28: #{down_forward.2} parent=5 // pred_fallthru
      _
    %p2033 = scmp.le.s32.totalorder 2, %s10
    // Predicated region
    $region37: #{down_forward.2} parent=5 // pred_check
      %p2034 = pneg %p2033
    $region38: #{down_forward.2} parent=5 // pred_check_branch
      %2036 = sbr.rel (%p2034) target = $region40
    $region39: #{down_forward.2} parent=5 // pred_region
      %s2037 = ssub.s32 %s10, 2
      // Predicated region
      $region41: #{down_forward.2} parent=39 // pred_check
        %p2038 = pneg %p86
      $region42: #{down_forward.2} parent=39 // pred_check_branch
        %2040 = sbr.rel (%p2038) target = $region44
      $region43: #{down_forward.2} parent=39 // pred_region
        %p2041 = scmp.lt.s32.totalorder %s16, 1
        %s2042 = scalar_select %p2041, %s16, 1
        %s2043 = smul.addr %s2042, 8
        %s2044 = smul.addr %s2043, 4
        %s2045 = scalar_lea.vmem %s2, %s2044
      $region44: #{down_forward.2} parent=39 // pred_fallthru
        _
      // Predicated region
      $region45: #{down_forward.2} parent=39 // pred_check
        %p2046 = pneg %p112
      $region46: #{down_forward.2} parent=39 // pred_check_branch
        %2048 = sbr.rel (%p2046) target = $region48
      $region47: #{down_forward.2} parent=39 // pred_region
        %p2049 = scmp.lt.s32.totalorder %s16, 1
        %s2050 = scalar_select %p2049, %s16, 1
        %s2051 = smul.addr %s2050, 2
        %s2052 = scalar_lea.vmem %s3, %s2051
      $region48: #{down_forward.2} parent=39 // pred_fallthru
        _
    $region40: #{down_forward.2} parent=5 // pred_fallthru
      _
  $region6: #{down_forward.2} parent=0 // loop_footer
    %s14 = sadd.s32 1, %s10
  $region7: #{down_forward.2} parent=0 // loop_footer_branch
    %9 = sbr.rel target = $region3
  $region8: #{down_forward.2} parent=0 // loop_exit
    _

// kernel: down_forward.3
$region0: #{down_forward.3}
  #allocation0 [shape = 'u32[]', space=smem, size = 0x4, offset = 0x4, fixed_abs, tag = 'smem constant byte address 0x4 - core index']
  #allocation1 [shape = 'u32[144,128]{1,0:T(1,128)}', space=vmem, size = 0x12000, scoped, tag = 'internal scratch']
  #allocation2 [shape = 'bf16[10,10,8]{2,1,0:T(8,128)(2,1)}', space=vmem, size = 0xa000, scoped, tag = 'scratch operand']
  %s0 = inlined_call_operand.vmem [shape: bf16[2,8,8,8], index: 0, kind: input, shape index: {}]
  %s1 = inlined_call_operand.vmem [shape: f32[1,8], index: 1, kind: input, shape index: {}]
  %s2 = inlined_call_operand.vmem [shape: f32[1,8], index: 2, kind: input, shape index: {}]
  %s3 = inlined_call_operand.vmem [shape: bf16[72,8], index: 3, kind: input, shape index: {}]
  %s4 = inlined_call_operand.vmem [shape: bf16[2,8,8,8], index: 4, kind: output, shape index: {0}]
  %s5 = inlined_call_operand.vmem [shape: f32[2,2,8], index: 5, kind: output, shape index: {1}]
  %6 = xla_tuple %s4, %s5
  %s7 = sld [smem:[#allocation0]]
  $region57: #{down_forward.3} parent=0
    _
  %s9 = ssub.s32 1, %s7
  %s10 = scalar_select 0, %s9, %s7
  loop: start=0, step=1, limit=4
  $region2: #{down_forward.3} parent=0 // loop_pre_header
    _
  $region3: #{down_forward.3} parent=0 // loop_header
    %s12 = sphi 0, %s16
    %p13 = scmp.ge.s32.totalorder %s12, 4
    %s22 = sphi 0, %s24
    %s25 = sphi 0, %s22
    %s26 = sphi 0, %s25
    %s42 = sphi 0, %s26
    %s46 = sphi 0, %s46
    %s48 = sphi 0, %s46
    %s49 = sphi 0, %s48
    %s63 = sphi 0, %s49
    %s67 = sphi 0, %s67
    %s69 = sphi 0, %s67
    %s70 = sphi 0, %s69
    %s84 = sphi 0, %s70
    %s88 = sphi 0, %s88
    %s90 = sphi 0, %s88
    %s91 = sphi 0, %s90
    %s105 = sphi 0, %s91
    %s111 = sphi 0, %s113
    %s114 = sphi 0, %s111
    %s115 = sphi 0, %s114
    %s131 = sphi 0, %s115
    %s137 = sphi 0, %s139
    %s140 = sphi 0, %s137
    %s141 = sphi 0, %s140
    %s157 = sphi 0, %s141
  $region4: #{down_forward.3} parent=0 // loop_header_branch
    %15 = sbr.rel (%p13) target = $region8
  $region5: #{down_forward.3} parent=0 // loop_body
    %s17 = ssub.s32 %s12, 1
    %s18 = ssub.s32 %s12, 2
    %s19 = sadd.s32 %s12, 1
    %s20 = ssub.s32 %s12, %s19
    %p21 = scmp.eq.s32.totalorder %s20, 0
    %s23 = sadd.s32 %s22, 1
    %s24 = scalar_select %p21, %s22, %s23
    %p27 = pneg %p21
    %p28 = scmp.eq.s32.totalorder %s12, 1
    %p29 = por %p27, %p28
    %p30 = scmp.ne.s32.totalorder %s22, %s25
    %p31 = scmp.eq.s32.totalorder %s12, 0
    %p32 = por %p30, %p31
    %p33 = scmp.ne.s32.totalorder %s22, %s25
    %p34 = scmp.eq.s32.totalorder %s17, 1
    %p35 = por %p33, %p34
    %p36 = scmp.ne.s32.totalorder %s25, %s26
    %p37 = scmp.eq.s32.totalorder %s17, 0
    %p38 = por %p36, %p37
    %p39 = scmp.ne.s32.totalorder %s25, %s26
    %p40 = scmp.eq.s32.totalorder %s18, 1
    %p41 = por %p39, %p40
    %p43 = scmp.ne.s32.totalorder %s26, %s42
    %p44 = scmp.eq.s32.totalorder %s18, 0
    %p45 = por %p43, %p44
    %s47 = sadd.s32 %s46, 1
    %p50 = scmp.eq.s32.totalorder %s12, 1
    %p51 = scmp.ne.s32.totalorder %s46, %s48
    %p52 = scmp.eq.s32.totalorder %s12, 0
    %p53 = por %p51, %p52
    %p54 = scmp.ne.s32.totalorder %s46, %s48
    %p55 = scmp.eq.s32.totalorder %s17, 1
    %p56 = por %p54, %p55
    %p57 = scmp.ne.s32.totalorder %s48, %s49
    %p58 = scmp.eq.s32.totalorder %s17, 0
    %p59 = por %p57, %p58
    %p60 = scmp.ne.s32.totalorder %s48, %s49
    %p61 = scmp.eq.s32.totalorder %s18, 1
    %p62 = por %p60, %p61
    %p64 = scmp.ne.s32.totalorder %s49, %s63
    %p65 = scmp.eq.s32.totalorder %s18, 0
    %p66 = por %p64, %p65
    %s68 = sadd.s32 %s67, 1
    %p71 = scmp.eq.s32.totalorder %s12, 1
    %p72 = scmp.ne.s32.totalorder %s67, %s69
    %p73 = scmp.eq.s32.totalorder %s12, 0
    %p74 = por %p72, %p73
    %p75 = scmp.ne.s32.totalorder %s67, %s69
    %p76 = scmp.eq.s32.totalorder %s17, 1
    %p77 = por %p75, %p76
    %p78 = scmp.ne.s32.totalorder %s69, %s70
    %p79 = scmp.eq.s32.totalorder %s17, 0
    %p80 = por %p78, %p79
    %p81 = scmp.ne.s32.totalorder %s69, %s70
    %p82 = scmp.eq.s32.totalorder %s18, 1
    %p83 = por %p81, %p82
    %p85 = scmp.ne.s32.totalorder %s70, %s84
    %p86 = scmp.eq.s32.totalorder %s18, 0
    %p87 = por %p85, %p86
    %s89 = sadd.s32 %s88, 1
    %p92 = scmp.eq.s32.totalorder %s12, 1
    %p93 = scmp.ne.s32.totalorder %s88, %s90
    %p94 = scmp.eq.s32.totalorder %s12, 0
    %p95 = por %p93, %p94
    %p96 = scmp.ne.s32.totalorder %s88, %s90
    %p97 = scmp.eq.s32.totalorder %s17, 1
    %p98 = por %p96, %p97
    %p99 = scmp.ne.s32.totalorder %s90, %s91
    %p100 = scmp.eq.s32.totalorder %s17, 0
    %p101 = por %p99, %p100
    %p102 = scmp.ne.s32.totalorder %s90, %s91
    %p103 = scmp.eq.s32.totalorder %s18, 1
    %p104 = por %p102, %p103
    %p106 = scmp.ne.s32.totalorder %s91, %s105
    %p107 = scmp.eq.s32.totalorder %s18, 0
    %p108 = por %p106, %p107
    %s109 = ssub.s32 %s12, %s19
    %p110 = scmp.eq.s32.totalorder %s109, 0
    %s112 = sadd.s32 %s111, 1
    %s113 = scalar_select %p110, %s111, %s112
    %p116 = pneg %p110
    %p117 = scmp.eq.s32.totalorder %s12, 1
    %p118 = por %p116, %p117
    %p119 = scmp.ne.s32.totalorder %s111, %s114
    %p120 = scmp.eq.s32.totalorder %s12, 0
    %p121 = por %p119, %p120
    %p122 = scmp.ne.s32.totalorder %s111, %s114
    %p123 = scmp.eq.s32.totalorder %s17, 1
    %p124 = por %p122, %p123
    %p125 = scmp.ne.s32.totalorder %s114, %s115
    %p126 = scmp.eq.s32.totalorder %s17, 0
    %p127 = por %p125, %p126
    %p128 = scmp.ne.s32.totalorder %s114, %s115
    %p129 = scmp.eq.s32.totalorder %s18, 1
    %p130 = por %p128, %p129
    %p132 = scmp.ne.s32.totalorder %s115, %s131
    %p133 = scmp.eq.s32.totalorder %s18, 0
    %p134 = por %p132, %p133
    %s135 = ssub.s32 %s12, %s19
    %p136 = scmp.eq.s32.totalorder %s135, 0
    %s138 = sadd.s32 %s137, 1
    %s139 = scalar_select %p136, %s137, %s138
    %p142 = pneg %p136
    %p143 = scmp.eq.s32.totalorder %s12, 1
    %p144 = por %p142, %p143
    %p145 = scmp.ne.s32.totalorder %s137, %s140
    %p146 = scmp.eq.s32.totalorder %s12, 0
    %p147 = por %p145, %p146
    %p148 = scmp.ne.s32.totalorder %s137, %s140
    %p149 = scmp.eq.s32.totalorder %s17, 1
    %p150 = por %p148, %p149
    %p151 = scmp.ne.s32.totalorder %s140, %s141
    %p152 = scmp.eq.s32.totalorder %s17, 0
    %p153 = por %p151, %p152
    %p154 = scmp.ne.s32.totalorder %s140, %s141
    %p155 = scmp.eq.s32.totalorder %s18, 1
    %p156 = por %p154, %p155
    %p158 = scmp.ne.s32.totalorder %s141, %s157
    %p159 = scmp.eq.s32.totalorder %s18, 0
    %p160 = por %p158, %p159
    %p161 = scmp.le.s32.totalorder 1, %s12
    %p162 = scmp.lt.s32.totalorder %s12, 3
    %p163 = pnand %p161, %p162
    %p164 = pneg %p163
    // Predicated region
    $region9: #{down_forward.3} parent=5 // pred_check
      _
    $region10: #{down_forward.3} parent=5 // pred_check_branch
      %166 = sbr.rel (%p163) target = $region12
    $region11: #{down_forward.3} parent=5 // pred_region
      %s167 = ssub.s32 %s12, 1
      // Predicated region
      $region13: #{down_forward.3} parent=11 // pred_check
        %p168 = pneg %p59
      $region14: #{down_forward.3} parent=11 // pred_check_branch
        %170 = sbr.rel (%p168) target = $region16
      $region15: #{down_forward.3} parent=11 // pred_region
        _
      $region16: #{down_forward.3} parent=11 // pred_fallthru
        _
      // Predicated region
      $region17: #{down_forward.3} parent=11 // pred_check
        %p171 = pneg %p80
      $region18: #{down_forward.3} parent=11 // pred_check_branch
        %173 = sbr.rel (%p171) target = $region20
      $region19: #{down_forward.3} parent=11 // pred_region
        _
      $region20: #{down_forward.3} parent=11 // pred_fallthru
        _
      // Predicated region
      $region21: #{down_forward.3} parent=11 // pred_check
        %p174 = pneg %p101
      $region22: #{down_forward.3} parent=11 // pred_check_branch
        %176 = sbr.rel (%p174) target = $region24
      $region23: #{down_forward.3} parent=11 // pred_region
        _
      $region24: #{down_forward.3} parent=11 // pred_fallthru
        _
    $region12: #{down_forward.3} parent=5 // pred_fallthru
      _
    %p177 = scmp.lt.s32.totalorder %s12, 2
    // Predicated region
    $region25: #{down_forward.3} parent=5 // pred_check
      %p178 = pneg %p177
    $region26: #{down_forward.3} parent=5 // pred_check_branch
      %180 = sbr.rel (%p178) target = $region28
    $region27: #{down_forward.3} parent=5 // pred_region
      // Predicated region
      $region29: #{down_forward.3} parent=27 // pred_check
        %p181 = pneg %p32
      $region30: #{down_forward.3} parent=27 // pred_check_branch
        %183 = sbr.rel (%p181) target = $region32
      $region31: #{down_forward.3} parent=27 // pred_region
        %p184 = scmp.lt.s32.totalorder %s12, 1
        %s185 = scalar_select %p184, %s12, 1
        %s186 = smul.addr %s185, 8
        %s187 = smul.addr %s186, 4
        %s188 = scalar_lea.vmem %s0, %s187
      $region32: #{down_forward.3} parent=27 // pred_fallthru
        _
    $region28: #{down_forward.3} parent=5 // pred_fallthru
      _
    %p189 = scmp.le.s32.totalorder 1, %s12
    %p190 = scmp.lt.s32.totalorder %s12, 3
    %p191 = pnand %p189, %p190
    %p192 = pneg %p191
    // Predicated region
    $region33: #{down_forward.3} parent=5 // pred_check
      _
    $region34: #{down_forward.3} parent=5 // pred_check_branch
      %194 = sbr.rel (%p191) target = $region36
    $region35: #{down_forward.3} parent=5 // pred_region
      %s195 = ssub.s32 %s12, 1
      %p196 = scmp.lt.s32.totalorder %s17, 1
      %s197 = scalar_select %p196, %s17, 1
      %s198 = smul.addr %s197, 8
      %s199 = smul.addr %s198, 4
      %s200 = scalar_lea.vmem %s0, %s199
      %p201 = pneg %p38
      %p202 = pneg %p35
      %p203 = pneg %p59
      %p204 = pneg %p56
      %p205 = pneg %p80
      %p206 = pneg %p77
      %p207 = pneg %p101
      %p208 = pneg %p98
      %p209 = pneg %p127
      %p210 = pneg %p124
      %p211 = scmp.lt.s32.totalorder %s17, 1
      %s212 = scalar_select %p211, %s17, 1
      %s213 = smul.addr %s212, 8
      %s214 = smul.addr %s213, 4
      %s215 = scalar_lea.vmem %s4, %s214
      %p216 = pneg %p153
      %p217 = pneg %p150
      %p218 = scmp.lt.s32.totalorder %s17, 1
      %s219 = scalar_select %p218, %s17, 1
      %s220 = smul.addr %s219, 2
      %s221 = scalar_lea.vmem %s5, %s220
      %p222 = scmp.lt.s32.totalorder %s17, 1
      %s223 = scalar_select %p222, %s17, 1
      %s224 = smul.addr %s223, 8
      %s225 = smul.addr %s224, 4
      %s226 = scalar_lea.vmem %s0, %s225
      %p227 = scmp.lt.s32.totalorder %s17, 1
      %s228 = scalar_select %p227, %s17, 1
      %s229 = smul.addr %s228, 8
      %s230 = smul.addr %s229, 4
      %s231 = scalar_lea.vmem %s4, %s230
      %p232 = scmp.lt.s32.totalorder %s17, 1
      %s233 = scalar_select %p232, %s17, 1
      %s234 = smul.addr %s233, 2
      %s235 = scalar_lea.vmem %s5, %s234
      %v237 = vld [vmem:[%s226] sm:$0xf]
      %v238 = vld [vmem:[%s226 + $0x4] sm:$0xf]
      %v239 = vld [vmem:[%s226 + $0x8] sm:$0xf]
      %v240 = vld [vmem:[%s226 + $0xc] sm:$0xf]
      %v241 = vld [vmem:[%s226 + $0x10] sm:$0xf]
      %v242 = vld [vmem:[%s226 + $0x14] sm:$0xf]
      %v243 = vld [vmem:[%s226 + $0x18] sm:$0xf]
      %v244 = vld [vmem:[%s226 + $0x1c] sm:$0xf]
      %v245 = vunpack.c.l.bf16 %v237
      %v246 = vunpack.c.l.bf16 %v238
      %v247 = vunpack.c.l.bf16 %v239
      %v248 = vunpack.c.l.bf16 %v240
      %v249 = vunpack.c.l.bf16 %v241
      %v250 = vunpack.c.l.bf16 %v242
      %v251 = vunpack.c.l.bf16 %v243
      %v252 = vunpack.c.l.bf16 %v244
      %v253 = vld [vmem:[%s1] sm:$0x1]
      %v255 = vlaneseq
      %v256 = vshrl.u32 %v255, 7
      %v257 = vsub.s32 0, %v256
      %v258 = vrot.slane %v253, %v257
      %v260 = vmul.f32 %v245, %v258
      %v261 = vmul.f32 %v246, %v258
      %v262 = vmul.f32 %v247, %v258
      %v263 = vmul.f32 %v248, %v258
      %v264 = vmul.f32 %v249, %v258
      %v265 = vmul.f32 %v250, %v258
      %v266 = vmul.f32 %v251, %v258
      %v267 = vmul.f32 %v252, %v258
      %v268 = vld [vmem:[%s2] sm:$0x1]
      %v270 = vlaneseq
      %v271 = vshrl.u32 %v270, 7
      %v272 = vsub.s32 0, %v271
      %v273 = vrot.slane %v268, %v272
      %v275 = vadd.f32 %v260, %v273
      %v276 = vadd.f32 %v261, %v273
      %v277 = vadd.f32 %v262, %v273
      %v278 = vadd.f32 %v263, %v273
      %v279 = vadd.f32 %v264, %v273
      %v280 = vadd.f32 %v265, %v273
      %v281 = vadd.f32 %v266, %v273
      %v282 = vadd.f32 %v267, %v273
      %v283 = vmax.f32 %v275, 0.0
      %v284 = vmax.f32 %v276, 0.0
      %v285 = vmax.f32 %v277, 0.0
      %v286 = vmax.f32 %v278, 0.0
      %v287 = vmax.f32 %v279, 0.0
      %v288 = vmax.f32 %v280, 0.0
      %v289 = vmax.f32 %v281, 0.0
      %v290 = vmax.f32 %v282, 0.0
      %vm291 = vcmask 60416
      %292 = vst.msk [vmem:[#allocation2] sm:$0xf] %vm291, 0
      %vm293 = vcmask 57344
      %294 = vst.msk [vmem:[#allocation2 + $0x4] sm:$0x1] %vm293, 0
      %295 = vst.msk [vmem:[#allocation2 + $0x8] sm:$0xf] %vm291, 0
      %296 = vst.msk [vmem:[#allocation2 + $0xc] sm:$0x1] %vm293, 0
      %297 = vst.msk [vmem:[#allocation2 + $0x10] sm:$0xf] %vm291, 0
      %298 = vst.msk [vmem:[#allocation2 + $0x14] sm:$0x1] %vm293, 0
      %299 = vst.msk [vmem:[#allocation2 + $0x18] sm:$0xf] %vm291, 0
      %300 = vst.msk [vmem:[#allocation2 + $0x1c] sm:$0x1] %vm293, 0
      %301 = vst.msk [vmem:[#allocation2 + $0x20] sm:$0xf] %vm291, 0
      %302 = vst.msk [vmem:[#allocation2 + $0x24] sm:$0x1] %vm293, 0
      %303 = vst.msk [vmem:[#allocation2 + $0x28] sm:$0xf] %vm291, 0
      %304 = vst.msk [vmem:[#allocation2 + $0x2c] sm:$0x1] %vm293, 0
      %305 = vst.msk [vmem:[#allocation2 + $0x30] sm:$0xf] %vm291, 0
      %306 = vst.msk [vmem:[#allocation2 + $0x34] sm:$0x1] %vm293, 0
      %307 = vst.msk [vmem:[#allocation2 + $0x38] sm:$0xf] %vm291, 0
      %308 = vst.msk [vmem:[#allocation2 + $0x3c] sm:$0x1] %vm293, 0
      %309 = vst.msk [vmem:[#allocation2 + $0x40] sm:$0xf] %vm291, 0
      %310 = vst.msk [vmem:[#allocation2 + $0x44] sm:$0x1] %vm293, 0
      %311 = vst.msk [vmem:[#allocation2 + $0x48] sm:$0xf] %vm291, 0
      %312 = vst.msk [vmem:[#allocation2 + $0x4c] sm:$0x1] %vm293, 0
      %v313 = vpack.c.bf16 %v283, %v283
      %v314 = vpack.c.bf16 %v284, %v284
      %v315 = vpack.c.bf16 %v285, %v285
      %v316 = vpack.c.bf16 %v286, %v286
      %v317 = vpack.c.bf16 %v287, %v287
      %v318 = vpack.c.bf16 %v288, %v288
      %v319 = vpack.c.bf16 %v289, %v289
      %v320 = vpack.c.bf16 %v290, %v290
      %v329 = vunpack.c.l.b16 %v313
      %v330 = vunpack.c.l.b16 %v314
      %v331 = vunpack.c.l.b16 %v315
      %v332 = vunpack.c.l.b16 %v316
      %v333 = vunpack.c.l.b16 %v317
      %v334 = vunpack.c.l.b16 %v318
      %v335 = vunpack.c.l.b16 %v319
      %v336 = vunpack.c.l.b16 %v320
      %v337 = vpack.c.b16 %v329, %v329
      %v338 = vpack.c.b16 %v330, %v330
      %v339 = vpack.c.b16 %v331, %v331
      %v340 = vpack.c.b16 %v332, %v332
      %v341 = vpack.c.b16 %v333, %v333
      %v342 = vpack.c.b16 %v334, %v334
      %v343 = vpack.c.b16 %v335, %v335
      %v344 = vpack.c.b16 %v336, %v336
      %v346 = vshrl.u32 %v337, 16
      %v348 = vrot.slane %v346, 7
      %v349 = vshll.u32 %v337, 16
      %v351 = vor.u32 %v348, %v349
      %v352 = vrot.slane %v348, 4
      %v354 = vshrl.u32 %v338, 16
      %v356 = vrot.slane %v354, 7
      %v357 = vshll.u32 %v338, 16
      %v359 = vor.u32 %v356, %v357
      %v360 = vrot.slane %v356, 4
      %v362 = vshrl.u32 %v339, 16
      %v364 = vrot.slane %v362, 7
      %v365 = vshll.u32 %v339, 16
      %v367 = vor.u32 %v364, %v365
      %v368 = vrot.slane %v364, 4
      %v370 = vshrl.u32 %v340, 16
      %v372 = vrot.slane %v370, 7
      %v373 = vshll.u32 %v340, 16
      %v375 = vor.u32 %v372, %v373
      %v376 = vrot.slane %v372, 4
      %v378 = vshrl.u32 %v341, 16
      %v380 = vrot.slane %v378, 7
      %v381 = vshll.u32 %v341, 16
      %v383 = vor.u32 %v380, %v381
      %v384 = vrot.slane %v380, 4
      %v386 = vshrl.u32 %v342, 16
      %v388 = vrot.slane %v386, 7
      %v389 = vshll.u32 %v342, 16
      %v391 = vor.u32 %v388, %v389
      %v392 = vrot.slane %v388, 4
      %v394 = vshrl.u32 %v343, 16
      %v396 = vrot.slane %v394, 7
      %v397 = vshll.u32 %v343, 16
      %v399 = vor.u32 %v396, %v397
      %v400 = vrot.slane %v396, 4
      %v402 = vshrl.u32 %v344, 16
      %v404 = vrot.slane %v402, 7
      %v405 = vshll.u32 %v344, 16
      %v407 = vor.u32 %v404, %v405
      %v408 = vrot.slane %v404, 4
      %s425 = scalar_lea.vmem [#allocation2], 8
      %vm426 = vcmask 60416
      %vm427 = vsmask.f32 7938
      %vm428 = vmand %vm426, %vm427
      %v429 = vld [vmem:[%s425] sm:$0xf]
      %v430 = vsel %vm428, %v351, %v429
      %431 = vst [vmem:[%s425] sm:$0xf] %v430
      %vm432 = vcmask 57344
      %vm433 = vsmask.f32 256
      %vm434 = vmand %vm432, %vm433
      %v435 = vld [vmem:[%s425 + $0x4] sm:$0x1]
      %v436 = vsel %vm434, %v352, %v435
      %437 = vst [vmem:[%s425 + $0x4] sm:$0x1] %v436
      %v438 = vld [vmem:[%s425 + $0x8] sm:$0xf]
      %v439 = vsel %vm428, %v359, %v438
      %440 = vst [vmem:[%s425 + $0x8] sm:$0xf] %v439
      %v441 = vld [vmem:[%s425 + $0xc] sm:$0x1]
      %v442 = vsel %vm434, %v360, %v441
      %443 = vst [vmem:[%s425 + $0xc] sm:$0x1] %v442
      %v444 = vld [vmem:[%s425 + $0x10] sm:$0xf]
      %v445 = vsel %vm428, %v367, %v444
      %446 = vst [vmem:[%s425 + $0x10] sm:$0xf] %v445
      %v447 = vld [vmem:[%s425 + $0x14] sm:$0x1]
      %v448 = vsel %vm434, %v368, %v447
      %449 = vst [vmem:[%s425 + $0x14] sm:$0x1] %v448
      %v450 = vld [vmem:[%s425 + $0x18] sm:$0xf]
      %v451 = vsel %vm428, %v375, %v450
      %452 = vst [vmem:[%s425 + $0x18] sm:$0xf] %v451
      %v453 = vld [vmem:[%s425 + $0x1c] sm:$0x1]
      %v454 = vsel %vm434, %v376, %v453
      %455 = vst [vmem:[%s425 + $0x1c] sm:$0x1] %v454
      %v456 = vld [vmem:[%s425 + $0x20] sm:$0xf]
      %v457 = vsel %vm428, %v383, %v456
      %458 = vst [vmem:[%s425 + $0x20] sm:$0xf] %v457
      %v459 = vld [vmem:[%s425 + $0x24] sm:$0x1]
      %v460 = vsel %vm434, %v384, %v459
      %461 = vst [vmem:[%s425 + $0x24] sm:$0x1] %v460
      %v462 = vld [vmem:[%s425 + $0x28] sm:$0xf]
      %v463 = vsel %vm428, %v391, %v462
      %464 = vst [vmem:[%s425 + $0x28] sm:$0xf] %v463
      %v465 = vld [vmem:[%s425 + $0x2c] sm:$0x1]
      %v466 = vsel %vm434, %v392, %v465
      %467 = vst [vmem:[%s425 + $0x2c] sm:$0x1] %v466
      %v468 = vld [vmem:[%s425 + $0x30] sm:$0xf]
      %v469 = vsel %vm428, %v399, %v468
      %470 = vst [vmem:[%s425 + $0x30] sm:$0xf] %v469
      %v471 = vld [vmem:[%s425 + $0x34] sm:$0x1]
      %v472 = vsel %vm434, %v400, %v471
      %473 = vst [vmem:[%s425 + $0x34] sm:$0x1] %v472
      %v474 = vld [vmem:[%s425 + $0x38] sm:$0xf]
      %v475 = vsel %vm428, %v407, %v474
      %476 = vst [vmem:[%s425 + $0x38] sm:$0xf] %v475
      %v477 = vld [vmem:[%s425 + $0x3c] sm:$0x1]
      %v478 = vsel %vm434, %v408, %v477
      %479 = vst [vmem:[%s425 + $0x3c] sm:$0x1] %v478
      %v480 = vld [vmem:[#allocation2] sm:$0xf]
      %v481 = vld [vmem:[#allocation2 + $0x8] sm:$0xf]
      %v482 = vld [vmem:[#allocation2 + $0x10] sm:$0xf]
      %v483 = vld [vmem:[#allocation2 + $0x18] sm:$0xf]
      %v484 = vld [vmem:[#allocation2 + $0x20] sm:$0xf]
      %v485 = vld [vmem:[#allocation2 + $0x28] sm:$0xf]
      %v486 = vld [vmem:[#allocation2 + $0x30] sm:$0xf]
      %v487 = vld [vmem:[#allocation2 + $0x38] sm:$0xf]
      %v488 = vld [vmem:[%s3] sm:$0xf]
      %v489 = vld [vmem:[#allocation2 + $0x4] sm:$0x1]
      %v490 = vld [vmem:[#allocation2 + $0xc] sm:$0x1]
      %v491 = vld [vmem:[#allocation2 + $0x14] sm:$0x1]
      %v492 = vld [vmem:[#allocation2 + $0x1c] sm:$0x1]
      %v493 = vld [vmem:[#allocation2 + $0x24] sm:$0x1]
      %v494 = vld [vmem:[#allocation2 + $0x2c] sm:$0x1]
      %v495 = vld [vmem:[#allocation2 + $0x34] sm:$0x1]
      %v496 = vld [vmem:[#allocation2 + $0x3c] sm:$0x1]
      %vm497 = vsmask.f32 3328
      %vm498 = vsmask.f32 7440
      %vm499 = vmor %vm497, %vm498
      %v501 = vshrl.u32 %v480, 16
      %v503 = vrot.slane %v501, 4
      %v504 = vshll.u32 %v480, 16
      %v506 = vrot.slane %v504, 5
      %v507 = vor.u32 %v503, %v506
      %v508 = vrot.slane %v507, 4
      %v510 = vshll.u32 %v489, 16
      %v512 = vrot.slane %v510, 5
      %v513 = vsel %vm499, %v508, %v512
      %v515 = vshrl.u32 %v481, 16
      %v517 = vrot.slane %v515, 4
      %v518 = vshll.u32 %v481, 16
      %v520 = vrot.slane %v518, 5
      %v521 = vor.u32 %v517, %v520
      %v522 = vrot.slane %v521, 4
      %v524 = vshll.u32 %v490, 16
      %v526 = vrot.slane %v524, 5
      %v527 = vsel %vm499, %v522, %v526
      %v529 = vshrl.u32 %v482, 16
      %v531 = vrot.slane %v529, 4
      %v532 = vshll.u32 %v482, 16
      %v534 = vrot.slane %v532, 5
      %v535 = vor.u32 %v531, %v534
      %v536 = vrot.slane %v535, 4
      %v538 = vshll.u32 %v491, 16
      %v540 = vrot.slane %v538, 5
      %v541 = vsel %vm499, %v536, %v540
      %v543 = vshrl.u32 %v483, 16
      %v545 = vrot.slane %v543, 4
      %v546 = vshll.u32 %v483, 16
      %v548 = vrot.slane %v546, 5
      %v549 = vor.u32 %v545, %v548
      %v550 = vrot.slane %v549, 4
      %v552 = vshll.u32 %v492, 16
      %v554 = vrot.slane %v552, 5
      %v555 = vsel %vm499, %v550, %v554
      %v557 = vshrl.u32 %v484, 16
      %v559 = vrot.slane %v557, 4
      %v560 = vshll.u32 %v484, 16
      %v562 = vrot.slane %v560, 5
      %v563 = vor.u32 %v559, %v562
      %v564 = vrot.slane %v563, 4
      %v566 = vshll.u32 %v493, 16
      %v568 = vrot.slane %v566, 5
      %v569 = vsel %vm499, %v564, %v568
      %v571 = vshrl.u32 %v485, 16
      %v573 = vrot.slane %v571, 4
      %v574 = vshll.u32 %v485, 16
      %v576 = vrot.slane %v574, 5
      %v577 = vor.u32 %v573, %v576
      %v578 = vrot.slane %v577, 4
      %v580 = vshll.u32 %v494, 16
      %v582 = vrot.slane %v580, 5
      %v583 = vsel %vm499, %v578, %v582
      %v585 = vshrl.u32 %v486, 16
      %v587 = vrot.slane %v585, 4
      %v588 = vshll.u32 %v486, 16
      %v590 = vrot.slane %v588, 5
      %v591 = vor.u32 %v587, %v590
      %v592 = vrot.slane %v591, 4
      %v594 = vshll.u32 %v495, 16
      %v596 = vrot.slane %v594, 5
      %v597 = vsel %vm499, %v592, %v596
      %v599 = vshrl.u32 %v487, 16
      %v601 = vrot.slane %v599, 4
      %v602 = vshll.u32 %v487, 16
      %v604 = vrot.slane %v602, 5
      %v605 = vor.u32 %v601, %v604
      %v606 = vrot.slane %v605, 4
      %v608 = vshll.u32 %v496, 16
      %v610 = vrot.slane %v608, 5
      %v611 = vsel %vm499, %v606, %v610
      %v612 = vld [vmem:[%s3 + $0x4] sm:$0xf]
      %v613 = vunpack.c.l.b16 %v513
      %v614 = vunpack.c.l.b16 %v527
      %v615 = vunpack.c.l.b16 %v541
      %v616 = vunpack.c.l.b16 %v555
      %v617 = vunpack.c.l.b16 %v569
      %v618 = vunpack.c.l.b16 %v583
      %v619 = vunpack.c.l.b16 %v597
      %v620 = vunpack.c.l.b16 %v611
      %v621 = vpack.c.b16 %v614, %v613
      %v622 = vpack.c.b16 %v616, %v615
      %v623 = vpack.c.b16 %v618, %v617
      %v624 = vpack.c.b16 %v620, %v619
      %vm625 = vcmask 64512
      %v627 = vsel %vm625, %v621, 0
      %v630 = vsel %vm625, %v622, 0
      %v633 = vsel %vm625, %v623, 0
      %v636 = vsel %vm625, %v624, 0
      %vm638 = vcmask 1043456
      %v640 = vsel %vm638, %v612, 0
      %642 = vmatprep.subr.bf16.mxu0 0
      %643 = vmatpush1.bf16.msra.mxu0 0
      %644 = vmatprep.subr.bf16.mxu0 0
      %645 = vmatpush1.bf16.msra.mxu0 0
      %646 = vmatprep.subr.bf16.mxu0 0
      %647 = vmatpush1.bf16.msra.mxu0 0
      %648 = vmatprep.subr.bf16.mxu0 0
      %649 = vmatpush1.bf16.msra.mxu0 0
      %650 = vmatprep.subr.bf16.mxu0 0
      %651 = vmatpush1.bf16.msra.mxu0 0
      %652 = vmatprep.subr.bf16.mxu0 0
      %653 = vmatpush1.bf16.msra.mxu0 0
      %654 = vmatprep.subr.bf16.mxu0 0
      %655 = vmatpush1.bf16.msra.mxu0 0
      %656 = vmatprep.subr.bf16.mxu0 0
      %657 = vmatpush1.bf16.msra.mxu0 %v640
      %658 = vmatprep.subr.bf16.mxu0 0
      %659 = vmatpush2.bf16.msra.mxu0 0
      %660 = vmatprep.subr.bf16.mxu0 0
      %661 = vmatpush2.bf16.msra.mxu0 0
      %662 = vmatprep.subr.bf16.mxu0 0
      %663 = vmatpush2.bf16.msra.mxu0 0
      %664 = vmatprep.subr.bf16.mxu0 0
      %665 = vmatpush2.bf16.msra.mxu0 0
      %666 = vmatprep.subr.bf16.mxu0 0
      %667 = vmatpush2.bf16.msra.mxu0 0
      %668 = vmatprep.subr.bf16.mxu0 0
      %669 = vmatpush2.bf16.msra.mxu0 0
      %670 = vmatprep.subr.bf16.mxu0 0
      %671 = vmatpush2.bf16.msra.mxu0 0
      %672 = vmatprep.subr.bf16.mxu0 0
      %673 = vmatpush2.bf16.msra.mxu0 0
      %674 = vmatprep.mubr.bf16.mxu0 0
      %675 = vmatmul.mubr.bf16.gmra.mxu0 %v627
      %v676 = vpop.f32.mrf.mxu0
      %v677 = vadd.f32 0.0, %v676
      %v678 = vpop.f32.mrf.mxu0
      %v679 = vpop.f32.mrf.mxu0
      %v680 = vadd.f32 0.0, %v679
      %v681 = vpop.f32.mrf.mxu0
      %682 = vmatprep.mubr.bf16.mxu0 0
      %683 = vmatmul.mubr.bf16.gmra.mxu0 %v630
      %v684 = vpop.f32.mrf.mxu0
      %v685 = vadd.f32 0.0, %v684
      %v686 = vpop.f32.mrf.mxu0
      %v687 = vpop.f32.mrf.mxu0
      %v688 = vadd.f32 0.0, %v687
      %v689 = vpop.f32.mrf.mxu0
      %690 = vmatprep.mubr.bf16.mxu0 0
      %691 = vmatmul.mubr.bf16.gmra.mxu0 %v633
      %v692 = vpop.f32.mrf.mxu0
      %v693 = vadd.f32 0.0, %v692
      %v694 = vpop.f32.mrf.mxu0
      %v695 = vpop.f32.mrf.mxu0
      %v696 = vadd.f32 0.0, %v695
      %v697 = vpop.f32.mrf.mxu0
      %698 = vmatprep.mubr.bf16.mxu0 0
      %699 = vmatmul.mubr.bf16.gmra.mxu0 %v636
      %v700 = vpop.f32.mrf.mxu0
      %v701 = vadd.f32 0.0, %v700
      %v702 = vpop.f32.mrf.mxu0
      %v703 = vpop.f32.mrf.mxu0
      %v704 = vadd.f32 0.0, %v703
      %v705 = vpop.f32.mrf.mxu0
      %706 = vdwg.mxu0
      %v715 = vunpack.c.l.b16 %v480
      %v716 = vunpack.c.l.b16 %v481
      %v717 = vunpack.c.l.b16 %v482
      %v718 = vunpack.c.l.b16 %v483
      %v719 = vunpack.c.l.b16 %v484
      %v720 = vunpack.c.l.b16 %v485
      %v721 = vunpack.c.l.b16 %v486
      %v722 = vunpack.c.l.b16 %v487
      %v723 = vpack.c.b16 %v716, %v715
      %v724 = vpack.c.b16 %v718, %v717
      %v725 = vpack.c.b16 %v720, %v719
      %v726 = vpack.c.b16 %v722, %v721
      %v728 = vsel %vm625, %v723, 0
      %v731 = vsel %vm625, %v724, 0
      %v734 = vsel %vm625, %v725, 0
      %v737 = vsel %vm625, %v726, 0
      %v740 = vsel %vm638, %v488, 0
      %742 = vmatprep.subr.bf16.mxu0 0
      %743 = vmatpush1.bf16.msra.mxu0 0
      %744 = vmatprep.subr.bf16.mxu0 0
      %745 = vmatpush1.bf16.msra.mxu0 0
      %746 = vmatprep.subr.bf16.mxu0 0
      %747 = vmatpush1.bf16.msra.mxu0 0
      %748 = vmatprep.subr.bf16.mxu0 0
      %749 = vmatpush1.bf16.msra.mxu0 0
      %750 = vmatprep.subr.bf16.mxu0 0
      %751 = vmatpush1.bf16.msra.mxu0 0
      %752 = vmatprep.subr.bf16.mxu0 0
      %753 = vmatpush1.bf16.msra.mxu0 0
      %754 = vmatprep.subr.bf16.mxu0 0
      %755 = vmatpush1.bf16.msra.mxu0 0
      %756 = vmatprep.subr.bf16.mxu0 0
      %757 = vmatpush1.bf16.msra.mxu0 %v740
      %758 = vmatprep.subr.bf16.mxu0 0
      %759 = vmatpush2.bf16.msra.mxu0 0
      %760 = vmatprep.subr.bf16.mxu0 0
      %761 = vmatpush2.bf16.msra.mxu0 0
      %762 = vmatprep.subr.bf16.mxu0 0
      %763 = vmatpush2.bf16.msra.mxu0 0
      %764 = vmatprep.subr.bf16.mxu0 0
      %765 = vmatpush2.bf16.msra.mxu0 0
      %766 = vmatprep.subr.bf16.mxu0 0
      %767 = vmatpush2.bf16.msra.mxu0 0
      %768 = vmatprep.subr.bf16.mxu0 0
      %769 = vmatpush2.bf16.msra.mxu0 0
      %770 = vmatprep.subr.bf16.mxu0 0
      %771 = vmatpush2.bf16.msra.mxu0 0
      %772 = vmatprep.subr.bf16.mxu0 0
      %773 = vmatpush2.bf16.msra.mxu0 0
      %774 = vmatprep.mubr.bf16.mxu0 0
      %775 = vmatmul.mubr.bf16.gmra.mxu0 %v728
      %v776 = vpop.f32.mrf.mxu0
      %v777 = vadd.f32 %v677, %v776
      %v778 = vpop.f32.mrf.mxu0
      %v779 = vpop.f32.mrf.mxu0
      %v780 = vadd.f32 %v680, %v779
      %v781 = vpop.f32.mrf.mxu0
      %782 = vmatprep.mubr.bf16.mxu0 0
      %783 = vmatmul.mubr.bf16.gmra.mxu0 %v731
      %v784 = vpop.f32.mrf.mxu0
      %v785 = vadd.f32 %v685, %v784
      %v786 = vpop.f32.mrf.mxu0
      %v787 = vpop.f32.mrf.mxu0
      %v788 = vadd.f32 %v688, %v787
      %v789 = vpop.f32.mrf.mxu0
      %790 = vmatprep.mubr.bf16.mxu0 0
      %791 = vmatmul.mubr.bf16.gmra.mxu0 %v734
      %v792 = vpop.f32.mrf.mxu0
      %v793 = vadd.f32 %v693, %v792
      %v794 = vpop.f32.mrf.mxu0
      %v795 = vpop.f32.mrf.mxu0
      %v796 = vadd.f32 %v696, %v795
      %v797 = vpop.f32.mrf.mxu0
      %798 = vmatprep.mubr.bf16.mxu0 0
      %799 = vmatmul.mubr.bf16.gmra.mxu0 %v737
      %v800 = vpop.f32.mrf.mxu0
      %v801 = vadd.f32 %v701, %v800
      %v802 = vpop.f32.mrf.mxu0
      %v803 = vpop.f32.mrf.mxu0
      %v804 = vadd.f32 %v704, %v803
      %v805 = vpop.f32.mrf.mxu0
      %806 = vdwg.mxu0
      %v807 = vld [vmem:[#allocation2] sm:$0xe]
      %v808 = vld [vmem:[#allocation2 + $0x8] sm:$0xe]
      %v809 = vld [vmem:[#allocation2 + $0x10] sm:$0xe]
      %v810 = vld [vmem:[#allocation2 + $0x18] sm:$0xe]
      %v811 = vld [vmem:[#allocation2 + $0x20] sm:$0xe]
      %v812 = vld [vmem:[#allocation2 + $0x28] sm:$0xe]
      %v813 = vld [vmem:[#allocation2 + $0x30] sm:$0xe]
      %v814 = vld [vmem:[#allocation2 + $0x38] sm:$0xe]
      %vm831 = vcmask 1042432
      %vm832 = vcmask 1046532
      %vm833 = vmor %vm831, %vm832
      %v834 = vrot.slane %v807, 5
      %v835 = vrot.slane %v834, 4
      %v836 = vrot.slane %v489, 5
      %v837 = vsel %vm833, %v835, %v836
      %v838 = vrot.slane %v808, 5
      %v839 = vrot.slane %v838, 4
      %v840 = vrot.slane %v490, 5
      %v841 = vsel %vm833, %v839, %v840
      %v842 = vrot.slane %v809, 5
      %v843 = vrot.slane %v842, 4
      %v844 = vrot.slane %v491, 5
      %v845 = vsel %vm833, %v843, %v844
      %v846 = vrot.slane %v810, 5
      %v847 = vrot.slane %v846, 4
      %v848 = vrot.slane %v492, 5
      %v849 = vsel %vm833, %v847, %v848
      %v850 = vrot.slane %v811, 5
      %v851 = vrot.slane %v850, 4
      %v852 = vrot.slane %v493, 5
      %v853 = vsel %vm833, %v851, %v852
      %v854 = vrot.slane %v812, 5
      %v855 = vrot.slane %v854, 4
      %v856 = vrot.slane %v494, 5
      %v857 = vsel %vm833, %v855, %v856
      %v858 = vrot.slane %v813, 5
      %v859 = vrot.slane %v858, 4
      %v860 = vrot.slane %v495, 5
      %v861 = vsel %vm833, %v859, %v860
      %v862 = vrot.slane %v814, 5
      %v863 = vrot.slane %v862, 4
      %v864 = vrot.slane %v496, 5
      %v865 = vsel %vm833, %v863, %v864
      %v866 = vld [vmem:[%s3 + $0x8] sm:$0xf]
      %v867 = vunpack.c.l.b16 %v837
      %v868 = vunpack.c.l.b16 %v841
      %v869 = vunpack.c.l.b16 %v845
      %v870 = vunpack.c.l.b16 %v849
      %v871 = vunpack.c.l.b16 %v853
      %v872 = vunpack.c.l.b16 %v857
      %v873 = vunpack.c.l.b16 %v861
      %v874 = vunpack.c.l.b16 %v865
      %v875 = vpack.c.b16 %v868, %v867
      %v876 = vpack.c.b16 %v870, %v869
      %v877 = vpack.c.b16 %v872, %v871
      %v878 = vpack.c.b16 %v874, %v873
      %v880 = vsel %vm625, %v875, 0
      %v883 = vsel %vm625, %v876, 0
      %v886 = vsel %vm625, %v877, 0
      %v889 = vsel %vm625, %v878, 0
      %v892 = vsel %vm638, %v866, 0
      %894 = vmatprep.subr.bf16.mxu0 0
      %895 = vmatpush1.bf16.msra.mxu0 0
      %896 = vmatprep.subr.bf16.mxu0 0
      %897 = vmatpush1.bf16.msra.mxu0 0
      %898 = vmatprep.subr.bf16.mxu0 0
      %899 = vmatpush1.bf16.msra.mxu0 0
      %900 = vmatprep.subr.bf16.mxu0 0
      %901 = vmatpush1.bf16.msra.mxu0 0
      %902 = vmatprep.subr.bf16.mxu0 0
      %903 = vmatpush1.bf16.msra.mxu0 0
      %904 = vmatprep.subr.bf16.mxu0 0
      %905 = vmatpush1.bf16.msra.mxu0 0
      %906 = vmatprep.subr.bf16.mxu0 0
      %907 = vmatpush1.bf16.msra.mxu0 0
      %908 = vmatprep.subr.bf16.mxu0 0
      %909 = vmatpush1.bf16.msra.mxu0 %v892
      %910 = vmatprep.subr.bf16.mxu0 0
      %911 = vmatpush2.bf16.msra.mxu0 0
      %912 = vmatprep.subr.bf16.mxu0 0
      %913 = vmatpush2.bf16.msra.mxu0 0
      %914 = vmatprep.subr.bf16.mxu0 0
      %915 = vmatpush2.bf16.msra.mxu0 0
      %916 = vmatprep.subr.bf16.mxu0 0
      %917 = vmatpush2.bf16.msra.mxu0 0
      %918 = vmatprep.subr.bf16.mxu0 0
      %919 = vmatpush2.bf16.msra.mxu0 0
      %920 = vmatprep.subr.bf16.mxu0 0
      %921 = vmatpush2.bf16.msra.mxu0 0
      %922 = vmatprep.subr.bf16.mxu0 0
      %923 = vmatpush2.bf16.msra.mxu0 0
      %924 = vmatprep.subr.bf16.mxu0 0
      %925 = vmatpush2.bf16.msra.mxu0 0
      %926 = vmatprep.mubr.bf16.mxu0 0
      %927 = vmatmul.mubr.bf16.gmra.mxu0 %v880
      %v928 = vpop.f32.mrf.mxu0
      %v929 = vadd.f32 0.0, %v928
      %v930 = vpop.f32.mrf.mxu0
      %v931 = vpop.f32.mrf.mxu0
      %v932 = vadd.f32 0.0, %v931
      %v933 = vpop.f32.mrf.mxu0
      %934 = vmatprep.mubr.bf16.mxu0 0
      %935 = vmatmul.mubr.bf16.gmra.mxu0 %v883
      %v936 = vpop.f32.mrf.mxu0
      %v937 = vadd.f32 0.0, %v936
      %v938 = vpop.f32.mrf.mxu0
      %v939 = vpop.f32.mrf.mxu0
      %v940 = vadd.f32 0.0, %v939
      %v941 = vpop.f32.mrf.mxu0
      %942 = vmatprep.mubr.bf16.mxu0 0
      %943 = vmatmul.mubr.bf16.gmra.mxu0 %v886
      %v944 = vpop.f32.mrf.mxu0
      %v945 = vadd.f32 0.0, %v944
      %v946 = vpop.f32.mrf.mxu0
      %v947 = vpop.f32.mrf.mxu0
      %v948 = vadd.f32 0.0, %v947
      %v949 = vpop.f32.mrf.mxu0
      %950 = vmatprep.mubr.bf16.mxu0 0
      %951 = vmatmul.mubr.bf16.gmra.mxu0 %v889
      %v952 = vpop.f32.mrf.mxu0
      %v953 = vadd.f32 0.0, %v952
      %v954 = vpop.f32.mrf.mxu0
      %v955 = vpop.f32.mrf.mxu0
      %v956 = vadd.f32 0.0, %v955
      %v957 = vpop.f32.mrf.mxu0
      %958 = vdwg.mxu0
      %v959 = vadd.f32 %v777, %v929
      %v960 = vadd.f32 %v780, %v932
      %v961 = vadd.f32 %v785, %v937
      %v962 = vadd.f32 %v788, %v940
      %v963 = vadd.f32 %v793, %v945
      %v964 = vadd.f32 %v796, %v948
      %v965 = vadd.f32 %v801, %v953
      %v966 = vadd.f32 %v804, %v956
      %v967 = vld [vmem:[%s425] sm:$0xf]
      %v968 = vld [vmem:[%s425 + $0x8] sm:$0xf]
      %v969 = vld [vmem:[%s425 + $0x10] sm:$0xf]
      %v970 = vld [vmem:[%s425 + $0x18] sm:$0xf]
      %v971 = vld [vmem:[%s425 + $0x20] sm:$0xf]
      %v972 = vld [vmem:[%s425 + $0x28] sm:$0xf]
      %v973 = vld [vmem:[%s425 + $0x30] sm:$0xf]
      %v974 = vld [vmem:[%s425 + $0x38] sm:$0xf]
      %v975 = vld [vmem:[%s3 + $0xc] sm:$0xf]
      %v984 = vunpack.c.l.b16 %v967
      %v985 = vunpack.c.l.b16 %v968
      %v986 = vunpack.c.l.b16 %v969
      %v987 = vunpack.c.l.b16 %v970
      %v988 = vunpack.c.l.b16 %v971
      %v989 = vunpack.c.l.b16 %v972
      %v990 = vunpack.c.l.b16 %v973
      %v991 = vunpack.c.l.b16 %v974
      %v992 = vpack.c.b16 %v985, %v984
      %v993 = vpack.c.b16 %v987, %v986
      %v994 = vpack.c.b16 %v989, %v988
      %v995 = vpack.c.b16 %v991, %v990
      %v997 = vsel %vm625, %v992, 0
      %v1000 = vsel %vm625, %v993, 0
      %v1003 = vsel %vm625, %v994, 0
      %v1006 = vsel %vm625, %v995, 0
      %v1009 = vsel %vm638, %v975, 0
      %1011 = vmatprep.subr.bf16.mxu0 0
      %1012 = vmatpush1.bf16.msra.mxu0 0
      %1013 = vmatprep.subr.bf16.mxu0 0
      %1014 = vmatpush1.bf16.msra.mxu0 0
      %1015 = vmatprep.subr.bf16.mxu0 0
      %1016 = vmatpush1.bf16.msra.mxu0 0
      %1017 = vmatprep.subr.bf16.mxu0 0
      %1018 = vmatpush1.bf16.msra.mxu0 0
      %1019 = vmatprep.subr.bf16.mxu0 0
      %1020 = vmatpush1.bf16.msra.mxu0 0
      %1021 = vmatprep.subr.bf16.mxu0 0
      %1022 = vmatpush1.bf16.msra.mxu0 0
      %1023 = vmatprep.subr.bf16.mxu0 0
      %1024 = vmatpush1.bf16.msra.mxu0 0
      %1025 = vmatprep.subr.bf16.mxu0 0
      %1026 = vmatpush1.bf16.msra.mxu0 %v1009
      %1027 = vmatprep.subr.bf16.mxu0 0
      %1028 = vmatpush2.bf16.msra.mxu0 0
      %1029 = vmatprep.subr.bf16.mxu0 0
      %1030 = vmatpush2.bf16.msra.mxu0 0
      %1031 = vmatprep.subr.bf16.mxu0 0
      %1032 = vmatpush2.bf16.msra.mxu0 0
      %1033 = vmatprep.subr.bf16.mxu0 0
      %1034 = vmatpush2.bf16.msra.mxu0 0
      %1035 = vmatprep.subr.bf16.mxu0 0
      %1036 = vmatpush2.bf16.msra.mxu0 0
      %1037 = vmatprep.subr.bf16.mxu0 0
      %1038 = vmatpush2.bf16.msra.mxu0 0
      %1039 = vmatprep.subr.bf16.mxu0 0
      %1040 = vmatpush2.bf16.msra.mxu0 0
      %1041 = vmatprep.subr.bf16.mxu0 0
      %1042 = vmatpush2.bf16.msra.mxu0 0
      %1043 = vmatprep.mubr.bf16.mxu0 0
      %1044 = vmatmul.mubr.bf16.gmra.mxu0 %v997
      %v1045 = vpop.f32.mrf.mxu0
      %v1046 = vadd.f32 0.0, %v1045
      %v1047 = vpop.f32.mrf.mxu0
      %v1048 = vpop.f32.mrf.mxu0
      %v1049 = vadd.f32 0.0, %v1048
      %v1050 = vpop.f32.mrf.mxu0
      %1051 = vmatprep.mubr.bf16.mxu0 0
      %1052 = vmatmul.mubr.bf16.gmra.mxu0 %v1000
      %v1053 = vpop.f32.mrf.mxu0
      %v1054 = vadd.f32 0.0, %v1053
      %v1055 = vpop.f32.mrf.mxu0
      %v1056 = vpop.f32.mrf.mxu0
      %v1057 = vadd.f32 0.0, %v1056
      %v1058 = vpop.f32.mrf.mxu0
      %1059 = vmatprep.mubr.bf16.mxu0 0
      %1060 = vmatmul.mubr.bf16.gmra.mxu0 %v1003
      %v1061 = vpop.f32.mrf.mxu0
      %v1062 = vadd.f32 0.0, %v1061
      %v1063 = vpop.f32.mrf.mxu0
      %v1064 = vpop.f32.mrf.mxu0
      %v1065 = vadd.f32 0.0, %v1064
      %v1066 = vpop.f32.mrf.mxu0
      %1067 = vmatprep.mubr.bf16.mxu0 0
      %1068 = vmatmul.mubr.bf16.gmra.mxu0 %v1006
      %v1069 = vpop.f32.mrf.mxu0
      %v1070 = vadd.f32 0.0, %v1069
      %v1071 = vpop.f32.mrf.mxu0
      %v1072 = vpop.f32.mrf.mxu0
      %v1073 = vadd.f32 0.0, %v1072
      %v1074 = vpop.f32.mrf.mxu0
      %1075 = vdwg.mxu0
      %v1076 = vadd.f32 %v959, %v1046
      %v1077 = vadd.f32 %v960, %v1049
      %v1078 = vadd.f32 %v961, %v1054
      %v1079 = vadd.f32 %v962, %v1057
      %v1080 = vadd.f32 %v963, %v1062
      %v1081 = vadd.f32 %v964, %v1065
      %v1082 = vadd.f32 %v965, %v1070
      %v1083 = vadd.f32 %v966, %v1073
      %v1084 = vld [vmem:[%s425] sm:$0xf]
      %v1085 = vld [vmem:[%s425 + $0x4] sm:$0x1]
      %v1086 = vld [vmem:[%s425 + $0x8] sm:$0xf]
      %v1087 = vld [vmem:[%s425 + $0xc] sm:$0x1]
      %v1088 = vld [vmem:[%s425 + $0x10] sm:$0xf]
      %v1089 = vld [vmem:[%s425 + $0x14] sm:$0x1]
      %v1090 = vld [vmem:[%s425 + $0x18] sm:$0xf]
      %v1091 = vld [vmem:[%s425 + $0x1c] sm:$0x1]
      %v1092 = vld [vmem:[%s425 + $0x20] sm:$0xf]
      %v1093 = vld [vmem:[%s425 + $0x24] sm:$0x1]
      %v1094 = vld [vmem:[%s425 + $0x28] sm:$0xf]
      %v1095 = vld [vmem:[%s425 + $0x2c] sm:$0x1]
      %v1096 = vld [vmem:[%s425 + $0x30] sm:$0xf]
      %v1097 = vld [vmem:[%s425 + $0x34] sm:$0x1]
      %v1098 = vld [vmem:[%s425 + $0x38] sm:$0xf]
      %v1099 = vld [vmem:[%s425 + $0x3c] sm:$0x1]
      %v1101 = vshrl.u32 %v1084, 16
      %v1103 = vrot.slane %v1101, 4
      %v1104 = vshll.u32 %v1084, 16
      %v1106 = vrot.slane %v1104, 5
      %v1107 = vor.u32 %v1103, %v1106
      %v1108 = vrot.slane %v1107, 4
      %v1110 = vshll.u32 %v1085, 16
      %v1112 = vrot.slane %v1110, 5
      %v1113 = vsel %vm499, %v1108, %v1112
      %v1115 = vshrl.u32 %v1086, 16
      %v1117 = vrot.slane %v1115, 4
      %v1118 = vshll.u32 %v1086, 16
      %v1120 = vrot.slane %v1118, 5
      %v1121 = vor.u32 %v1117, %v1120
      %v1122 = vrot.slane %v1121, 4
      %v1124 = vshll.u32 %v1087, 16
      %v1126 = vrot.slane %v1124, 5
      %v1127 = vsel %vm499, %v1122, %v1126
      %v1129 = vshrl.u32 %v1088, 16
      %v1131 = vrot.slane %v1129, 4
      %v1132 = vshll.u32 %v1088, 16
      %v1134 = vrot.slane %v1132, 5
      %v1135 = vor.u32 %v1131, %v1134
      %v1136 = vrot.slane %v1135, 4
      %v1138 = vshll.u32 %v1089, 16
      %v1140 = vrot.slane %v1138, 5
      %v1141 = vsel %vm499, %v1136, %v1140
      %v1143 = vshrl.u32 %v1090, 16
      %v1145 = vrot.slane %v1143, 4
      %v1146 = vshll.u32 %v1090, 16
      %v1148 = vrot.slane %v1146, 5
      %v1149 = vor.u32 %v1145, %v1148
      %v1150 = vrot.slane %v1149, 4
      %v1152 = vshll.u32 %v1091, 16
      %v1154 = vrot.slane %v1152, 5
      %v1155 = vsel %vm499, %v1150, %v1154
      %v1157 = vshrl.u32 %v1092, 16
      %v1159 = vrot.slane %v1157, 4
      %v1160 = vshll.u32 %v1092, 16
      %v1162 = vrot.slane %v1160, 5
      %v1163 = vor.u32 %v1159, %v1162
      %v1164 = vrot.slane %v1163, 4
      %v1166 = vshll.u32 %v1093, 16
      %v1168 = vrot.slane %v1166, 5
      %v1169 = vsel %vm499, %v1164, %v1168
      %v1171 = vshrl.u32 %v1094, 16
      %v1173 = vrot.slane %v1171, 4
      %v1174 = vshll.u32 %v1094, 16
      %v1176 = vrot.slane %v1174, 5
      %v1177 = vor.u32 %v1173, %v1176
      %v1178 = vrot.slane %v1177, 4
      %v1180 = vshll.u32 %v1095, 16
      %v1182 = vrot.slane %v1180, 5
      %v1183 = vsel %vm499, %v1178, %v1182
      %v1185 = vshrl.u32 %v1096, 16
      %v1187 = vrot.slane %v1185, 4
      %v1188 = vshll.u32 %v1096, 16
      %v1190 = vrot.slane %v1188, 5
      %v1191 = vor.u32 %v1187, %v1190
      %v1192 = vrot.slane %v1191, 4
      %v1194 = vshll.u32 %v1097, 16
      %v1196 = vrot.slane %v1194, 5
      %v1197 = vsel %vm499, %v1192, %v1196
      %v1199 = vshrl.u32 %v1098, 16
      %v1201 = vrot.slane %v1199, 4
      %v1202 = vshll.u32 %v1098, 16
      %v1204 = vrot.slane %v1202, 5
      %v1205 = vor.u32 %v1201, %v1204
      %v1206 = vrot.slane %v1205, 4
      %v1208 = vshll.u32 %v1099, 16
      %v1210 = vrot.slane %v1208, 5
      %v1211 = vsel %vm499, %v1206, %v1210
      %v1212 = vld [vmem:[%s3 + $0x10] sm:$0xf]
      %v1213 = vunpack.c.l.b16 %v1113
      %v1214 = vunpack.c.l.b16 %v1127
      %v1215 = vunpack.c.l.b16 %v1141
      %v1216 = vunpack.c.l.b16 %v1155
      %v1217 = vunpack.c.l.b16 %v1169
      %v1218 = vunpack.c.l.b16 %v1183
      %v1219 = vunpack.c.l.b16 %v1197
      %v1220 = vunpack.c.l.b16 %v1211
      %v1221 = vpack.c.b16 %v1214, %v1213
      %v1222 = vpack.c.b16 %v1216, %v1215
      %v1223 = vpack.c.b16 %v1218, %v1217
      %v1224 = vpack.c.b16 %v1220, %v1219
      %v1226 = vsel %vm625, %v1221, 0
      %v1229 = vsel %vm625, %v1222, 0
      %v1232 = vsel %vm625, %v1223, 0
      %v1235 = vsel %vm625, %v1224, 0
      %v1238 = vsel %vm638, %v1212, 0
      %1240 = vmatprep.subr.bf16.mxu0 0
      %1241 = vmatpush1.bf16.msra.mxu0 0
      %1242 = vmatprep.subr.bf16.mxu0 0
      %1243 = vmatpush1.bf16.msra.mxu0 0
      %1244 = vmatprep.subr.bf16.mxu0 0
      %1245 = vmatpush1.bf16.msra.mxu0 0
      %1246 = vmatprep.subr.bf16.mxu0 0
      %1247 = vmatpush1.bf16.msra.mxu0 0
      %1248 = vmatprep.subr.bf16.mxu0 0
      %1249 = vmatpush1.bf16.msra.mxu0 0
      %1250 = vmatprep.subr.bf16.mxu0 0
      %1251 = vmatpush1.bf16.msra.mxu0 0
      %1252 = vmatprep.subr.bf16.mxu0 0
      %1253 = vmatpush1.bf16.msra.mxu0 0
      %1254 = vmatprep.subr.bf16.mxu0 0
      %1255 = vmatpush1.bf16.msra.mxu0 %v1238
      %1256 = vmatprep.subr.bf16.mxu0 0
      %1257 = vmatpush2.bf16.msra.mxu0 0
      %1258 = vmatprep.subr.bf16.mxu0 0
      %1259 = vmatpush2.bf16.msra.mxu0 0
      %1260 = vmatprep.subr.bf16.mxu0 0
      %1261 = vmatpush2.bf16.msra.mxu0 0
      %1262 = vmatprep.subr.bf16.mxu0 0
      %1263 = vmatpush2.bf16.msra.mxu0 0
      %1264 = vmatprep.subr.bf16.mxu0 0
      %1265 = vmatpush2.bf16.msra.mxu0 0
      %1266 = vmatprep.subr.bf16.mxu0 0
      %1267 = vmatpush2.bf16.msra.mxu0 0
      %1268 = vmatprep.subr.bf16.mxu0 0
      %1269 = vmatpush2.bf16.msra.mxu0 0
      %1270 = vmatprep.subr.bf16.mxu0 0
      %1271 = vmatpush2.bf16.msra.mxu0 0
      %1272 = vmatprep.mubr.bf16.mxu0 0
      %1273 = vmatmul.mubr.bf16.gmra.mxu0 %v1226
      %v1274 = vpop.f32.mrf.mxu0
      %v1275 = vadd.f32 0.0, %v1274
      %v1276 = vpop.f32.mrf.mxu0
      %v1277 = vpop.f32.mrf.mxu0
      %v1278 = vadd.f32 0.0, %v1277
      %v1279 = vpop.f32.mrf.mxu0
      %1280 = vmatprep.mubr.bf16.mxu0 0
      %1281 = vmatmul.mubr.bf16.gmra.mxu0 %v1229
      %v1282 = vpop.f32.mrf.mxu0
      %v1283 = vadd.f32 0.0, %v1282
      %v1284 = vpop.f32.mrf.mxu0
      %v1285 = vpop.f32.mrf.mxu0
      %v1286 = vadd.f32 0.0, %v1285
      %v1287 = vpop.f32.mrf.mxu0
      %1288 = vmatprep.mubr.bf16.mxu0 0
      %1289 = vmatmul.mubr.bf16.gmra.mxu0 %v1232
      %v1290 = vpop.f32.mrf.mxu0
      %v1291 = vadd.f32 0.0, %v1290
      %v1292 = vpop.f32.mrf.mxu0
      %v1293 = vpop.f32.mrf.mxu0
      %v1294 = vadd.f32 0.0, %v1293
      %v1295 = vpop.f32.mrf.mxu0
      %1296 = vmatprep.mubr.bf16.mxu0 0
      %1297 = vmatmul.mubr.bf16.gmra.mxu0 %v1235
      %v1298 = vpop.f32.mrf.mxu0
      %v1299 = vadd.f32 0.0, %v1298
      %v1300 = vpop.f32.mrf.mxu0
      %v1301 = vpop.f32.mrf.mxu0
      %v1302 = vadd.f32 0.0, %v1301
      %v1303 = vpop.f32.mrf.mxu0
      %1304 = vdwg.mxu0
      %v1305 = vadd.f32 %v1076, %v1275
      %v1306 = vadd.f32 %v1077, %v1278
      %v1307 = vadd.f32 %v1078, %v1283
      %v1308 = vadd.f32 %v1079, %v1286
      %v1309 = vadd.f32 %v1080, %v1291
      %v1310 = vadd.f32 %v1081, %v1294
      %v1311 = vadd.f32 %v1082, %v1299
      %v1312 = vadd.f32 %v1083, %v1302
      %v1313 = vld [vmem:[%s425] sm:$0xe]
      %v1314 = vld [vmem:[%s425 + $0x8] sm:$0xe]
      %v1315 = vld [vmem:[%s425 + $0x10] sm:$0xe]
      %v1316 = vld [vmem:[%s425 + $0x18] sm:$0xe]
      %v1317 = vld [vmem:[%s425 + $0x20] sm:$0xe]
      %v1318 = vld [vmem:[%s425 + $0x28] sm:$0xe]
      %v1319 = vld [vmem:[%s425 + $0x30] sm:$0xe]
      %v1320 = vld [vmem:[%s425 + $0x38] sm:$0xe]
      %v1337 = vrot.slane %v1313, 5
      %v1338 = vrot.slane %v1337, 4
      %v1339 = vrot.slane %v1085, 5
      %v1340 = vsel %vm833, %v1338, %v1339
      %v1341 = vrot.slane %v1314, 5
      %v1342 = vrot.slane %v1341, 4
      %v1343 = vrot.slane %v1087, 5
      %v1344 = vsel %vm833, %v1342, %v1343
      %v1345 = vrot.slane %v1315, 5
      %v1346 = vrot.slane %v1345, 4
      %v1347 = vrot.slane %v1089, 5
      %v1348 = vsel %vm833, %v1346, %v1347
      %v1349 = vrot.slane %v1316, 5
      %v1350 = vrot.slane %v1349, 4
      %v1351 = vrot.slane %v1091, 5
      %v1352 = vsel %vm833, %v1350, %v1351
      %v1353 = vrot.slane %v1317, 5
      %v1354 = vrot.slane %v1353, 4
      %v1355 = vrot.slane %v1093, 5
      %v1356 = vsel %vm833, %v1354, %v1355
      %v1357 = vrot.slane %v1318, 5
      %v1358 = vrot.slane %v1357, 4
      %v1359 = vrot.slane %v1095, 5
      %v1360 = vsel %vm833, %v1358, %v1359
      %v1361 = vrot.slane %v1319, 5
      %v1362 = vrot.slane %v1361, 4
      %v1363 = vrot.slane %v1097, 5
      %v1364 = vsel %vm833, %v1362, %v1363
      %v1365 = vrot.slane %v1320, 5
      %v1366 = vrot.slane %v1365, 4
      %v1367 = vrot.slane %v1099, 5
      %v1368 = vsel %vm833, %v1366, %v1367
      %v1369 = vld [vmem:[%s3 + $0x14] sm:$0xf]
      %v1370 = vunpack.c.l.b16 %v1340
      %v1371 = vunpack.c.l.b16 %v1344
      %v1372 = vunpack.c.l.b16 %v1348
      %v1373 = vunpack.c.l.b16 %v1352
      %v1374 = vunpack.c.l.b16 %v1356
      %v1375 = vunpack.c.l.b16 %v1360
      %v1376 = vunpack.c.l.b16 %v1364
      %v1377 = vunpack.c.l.b16 %v1368
      %v1378 = vpack.c.b16 %v1371, %v1370
      %v1379 = vpack.c.b16 %v1373, %v1372
      %v1380 = vpack.c.b16 %v1375, %v1374
      %v1381 = vpack.c.b16 %v1377, %v1376
      %v1383 = vsel %vm625, %v1378, 0
      %v1386 = vsel %vm625, %v1379, 0
      %v1389 = vsel %vm625, %v1380, 0
      %v1392 = vsel %vm625, %v1381, 0
      %v1395 = vsel %vm638, %v1369, 0
      %1397 = vmatprep.subr.bf16.mxu0 0
      %1398 = vmatpush1.bf16.msra.mxu0 0
      %1399 = vmatprep.subr.bf16.mxu0 0
      %1400 = vmatpush1.bf16.msra.mxu0 0
      %1401 = vmatprep.subr.bf16.mxu0 0
      %1402 = vmatpush1.bf16.msra.mxu0 0
      %1403 = vmatprep.subr.bf16.mxu0 0
      %1404 = vmatpush1.bf16.msra.mxu0 0
      %1405 = vmatprep.subr.bf16.mxu0 0
      %1406 = vmatpush1.bf16.msra.mxu0 0
      %1407 = vmatprep.subr.bf16.mxu0 0
      %1408 = vmatpush1.bf16.msra.mxu0 0
      %1409 = vmatprep.subr.bf16.mxu0 0
      %1410 = vmatpush1.bf16.msra.mxu0 0
      %1411 = vmatprep.subr.bf16.mxu0 0
      %1412 = vmatpush1.bf16.msra.mxu0 %v1395
      %1413 = vmatprep.subr.bf16.mxu0 0
      %1414 = vmatpush2.bf16.msra.mxu0 0
      %1415 = vmatprep.subr.bf16.mxu0 0
      %1416 = vmatpush2.bf16.msra.mxu0 0
      %1417 = vmatprep.subr.bf16.mxu0 0
      %1418 = vmatpush2.bf16.msra.mxu0 0
      %1419 = vmatprep.subr.bf16.mxu0 0
      %1420 = vmatpush2.bf16.msra.mxu0 0
      %1421 = vmatprep.subr.bf16.mxu0 0
      %1422 = vmatpush2.bf16.msra.mxu0 0
      %1423 = vmatprep.subr.bf16.mxu0 0
      %1424 = vmatpush2.bf16.msra.mxu0 0
      %1425 = vmatprep.subr.bf16.mxu0 0
      %1426 = vmatpush2.bf16.msra.mxu0 0
      %1427 = vmatprep.subr.bf16.mxu0 0
      %1428 = vmatpush2.bf16.msra.mxu0 0
      %1429 = vmatprep.mubr.bf16.mxu0 0
      %1430 = vmatmul.mubr.bf16.gmra.mxu0 %v1383
      %v1431 = vpop.f32.mrf.mxu0
      %v1432 = vadd.f32 0.0, %v1431
      %v1433 = vpop.f32.mrf.mxu0
      %v1434 = vpop.f32.mrf.mxu0
      %v1435 = vadd.f32 0.0, %v1434
      %v1436 = vpop.f32.mrf.mxu0
      %1437 = vmatprep.mubr.bf16.mxu0 0
      %1438 = vmatmul.mubr.bf16.gmra.mxu0 %v1386
      %v1439 = vpop.f32.mrf.mxu0
      %v1440 = vadd.f32 0.0, %v1439
      %v1441 = vpop.f32.mrf.mxu0
      %v1442 = vpop.f32.mrf.mxu0
      %v1443 = vadd.f32 0.0, %v1442
      %v1444 = vpop.f32.mrf.mxu0
      %1445 = vmatprep.mubr.bf16.mxu0 0
      %1446 = vmatmul.mubr.bf16.gmra.mxu0 %v1389
      %v1447 = vpop.f32.mrf.mxu0
      %v1448 = vadd.f32 0.0, %v1447
      %v1449 = vpop.f32.mrf.mxu0
      %v1450 = vpop.f32.mrf.mxu0
      %v1451 = vadd.f32 0.0, %v1450
      %v1452 = vpop.f32.mrf.mxu0
      %1453 = vmatprep.mubr.bf16.mxu0 0
      %1454 = vmatmul.mubr.bf16.gmra.mxu0 %v1392
      %v1455 = vpop.f32.mrf.mxu0
      %v1456 = vadd.f32 0.0, %v1455
      %v1457 = vpop.f32.mrf.mxu0
      %v1458 = vpop.f32.mrf.mxu0
      %v1459 = vadd.f32 0.0, %v1458
      %v1460 = vpop.f32.mrf.mxu0
      %1461 = vdwg.mxu0
      %v1462 = vadd.f32 %v1305, %v1432
      %v1463 = vadd.f32 %v1306, %v1435
      %v1464 = vadd.f32 %v1307, %v1440
      %v1465 = vadd.f32 %v1308, %v1443
      %v1466 = vadd.f32 %v1309, %v1448
      %v1467 = vadd.f32 %v1310, %v1451
      %v1468 = vadd.f32 %v1311, %v1456
      %v1469 = vadd.f32 %v1312, %v1459
      %s1470 = scalar_lea.vmem [#allocation2], 16
      %v1471 = vld [vmem:[%s1470] sm:$0xf]
      %v1472 = vld [vmem:[%s1470 + $0x8] sm:$0xf]
      %v1473 = vld [vmem:[%s1470 + $0x10] sm:$0xf]
      %v1474 = vld [vmem:[%s1470 + $0x18] sm:$0xf]
      %v1475 = vld [vmem:[%s1470 + $0x20] sm:$0xf]
      %v1476 = vld [vmem:[%s1470 + $0x28] sm:$0xf]
      %v1477 = vld [vmem:[%s1470 + $0x30] sm:$0xf]
      %v1478 = vld [vmem:[%s1470 + $0x38] sm:$0xf]
      %v1479 = vld [vmem:[%s3 + $0x18] sm:$0xf]
      %v1488 = vunpack.c.l.b16 %v1471
      %v1489 = vunpack.c.l.b16 %v1472
      %v1490 = vunpack.c.l.b16 %v1473
      %v1491 = vunpack.c.l.b16 %v1474
      %v1492 = vunpack.c.l.b16 %v1475
      %v1493 = vunpack.c.l.b16 %v1476
      %v1494 = vunpack.c.l.b16 %v1477
      %v1495 = vunpack.c.l.b16 %v1478
      %v1496 = vpack.c.b16 %v1489, %v1488
      %v1497 = vpack.c.b16 %v1491, %v1490
      %v1498 = vpack.c.b16 %v1493, %v1492
      %v1499 = vpack.c.b16 %v1495, %v1494
      %v1501 = vsel %vm625, %v1496, 0
      %v1504 = vsel %vm625, %v1497, 0
      %v1507 = vsel %vm625, %v1498, 0
      %v1510 = vsel %vm625, %v1499, 0
      %v1513 = vsel %vm638, %v1479, 0
      %1515 = vmatprep.subr.bf16.mxu0 0
      %1516 = vmatpush1.bf16.msra.mxu0 0
      %1517 = vmatprep.subr.bf16.mxu0 0
      %1518 = vmatpush1.bf16.msra.mxu0 0
      %1519 = vmatprep.subr.bf16.mxu0 0
      %1520 = vmatpush1.bf16.msra.mxu0 0
      %1521 = vmatprep.subr.bf16.mxu0 0
      %1522 = vmatpush1.bf16.msra.mxu0 0
      %1523 = vmatprep.subr.bf16.mxu0 0
      %1524 = vmatpush1.bf16.msra.mxu0 0
      %1525 = vmatprep.subr.bf16.mxu0 0
      %1526 = vmatpush1.bf16.msra.mxu0 0
      %1527 = vmatprep.subr.bf16.mxu0 0
      %1528 = vmatpush1.bf16.msra.mxu0 0
      %1529 = vmatprep.subr.bf16.mxu0 0
      %1530 = vmatpush1.bf16.msra.mxu0 %v1513
      %1531 = vmatprep.subr.bf16.mxu0 0
      %1532 = vmatpush2.bf16.msra.mxu0 0
      %1533 = vmatprep.subr.bf16.mxu0 0
      %1534 = vmatpush2.bf16.msra.mxu0 0
      %1535 = vmatprep.subr.bf16.mxu0 0
      %1536 = vmatpush2.bf16.msra.mxu0 0
      %1537 = vmatprep.subr.bf16.mxu0 0
      %1538 = vmatpush2.bf16.msra.mxu0 0
      %1539 = vmatprep.subr.bf16.mxu0 0
      %1540 = vmatpush2.bf16.msra.mxu0 0
      %1541 = vmatprep.subr.bf16.mxu0 0
      %1542 = vmatpush2.bf16.msra.mxu0 0
      %1543 = vmatprep.subr.bf16.mxu0 0
      %1544 = vmatpush2.bf16.msra.mxu0 0
      %1545 = vmatprep.subr.bf16.mxu0 0
      %1546 = vmatpush2.bf16.msra.mxu0 0
      %1547 = vmatprep.mubr.bf16.mxu0 0
      %1548 = vmatmul.mubr.bf16.gmra.mxu0 %v1501
      %v1549 = vpop.f32.mrf.mxu0
      %v1550 = vadd.f32 0.0, %v1549
      %v1551 = vpop.f32.mrf.mxu0
      %v1552 = vpop.f32.mrf.mxu0
      %v1553 = vadd.f32 0.0, %v1552
      %v1554 = vpop.f32.mrf.mxu0
      %1555 = vmatprep.mubr.bf16.mxu0 0
      %1556 = vmatmul.mubr.bf16.gmra.mxu0 %v1504
      %v1557 = vpop.f32.mrf.mxu0
      %v1558 = vadd.f32 0.0, %v1557
      %v1559 = vpop.f32.mrf.mxu0
      %v1560 = vpop.f32.mrf.mxu0
      %v1561 = vadd.f32 0.0, %v1560
      %v1562 = vpop.f32.mrf.mxu0
      %1563 = vmatprep.mubr.bf16.mxu0 0
      %1564 = vmatmul.mubr.bf16.gmra.mxu0 %v1507
      %v1565 = vpop.f32.mrf.mxu0
      %v1566 = vadd.f32 0.0, %v1565
      %v1567 = vpop.f32.mrf.mxu0
      %v1568 = vpop.f32.mrf.mxu0
      %v1569 = vadd.f32 0.0, %v1568
      %v1570 = vpop.f32.mrf.mxu0
      %1571 = vmatprep.mubr.bf16.mxu0 0
      %1572 = vmatmul.mubr.bf16.gmra.mxu0 %v1510
      %v1573 = vpop.f32.mrf.mxu0
      %v1574 = vadd.f32 0.0, %v1573
      %v1575 = vpop.f32.mrf.mxu0
      %v1576 = vpop.f32.mrf.mxu0
      %v1577 = vadd.f32 0.0, %v1576
      %v1578 = vpop.f32.mrf.mxu0
      %1579 = vdwg.mxu0
      %v1580 = vadd.f32 %v1462, %v1550
      %v1581 = vadd.f32 %v1463, %v1553
      %v1582 = vadd.f32 %v1464, %v1558
      %v1583 = vadd.f32 %v1465, %v1561
      %v1584 = vadd.f32 %v1466, %v1566
      %v1585 = vadd.f32 %v1467, %v1569
      %v1586 = vadd.f32 %v1468, %v1574
      %v1587 = vadd.f32 %v1469, %v1577
      %v1588 = vld [vmem:[%s1470] sm:$0xf]
      %v1589 = vld [vmem:[%s1470 + $0x4] sm:$0x1]
      %v1590 = vld [vmem:[%s1470 + $0x8] sm:$0xf]
      %v1591 = vld [vmem:[%s1470 + $0xc] sm:$0x1]
      %v1592 = vld [vmem:[%s1470 + $0x10] sm:$0xf]
      %v1593 = vld [vmem:[%s1470 + $0x14] sm:$0x1]
      %v1594 = vld [vmem:[%s1470 + $0x18] sm:$0xf]
      %v1595 = vld [vmem:[%s1470 + $0x1c] sm:$0x1]
      %v1596 = vld [vmem:[%s1470 + $0x20] sm:$0xf]
      %v1597 = vld [vmem:[%s1470 + $0x24] sm:$0x1]
      %v1598 = vld [vmem:[%s1470 + $0x28] sm:$0xf]
      %v1599 = vld [vmem:[%s1470 + $0x2c] sm:$0x1]
      %v1600 = vld [vmem:[%s1470 + $0x30] sm:$0xf]
      %v1601 = vld [vmem:[%s1470 + $0x34] sm:$0x1]
      %v1602 = vld [vmem:[%s1470 + $0x38] sm:$0xf]
      %v1603 = vld [vmem:[%s1470 + $0x3c] sm:$0x1]
      %v1605 = vshrl.u32 %v1588, 16
      %v1607 = vrot.slane %v1605, 4
      %v1608 = vshll.u32 %v1588, 16
      %v1610 = vrot.slane %v1608, 5
      %v1611 = vor.u32 %v1607, %v1610
      %v1612 = vrot.slane %v1611, 4
      %v1614 = vshll.u32 %v1589, 16
      %v1616 = vrot.slane %v1614, 5
      %v1617 = vsel %vm499, %v1612, %v1616
      %v1619 = vshrl.u32 %v1590, 16
      %v1621 = vrot.slane %v1619, 4
      %v1622 = vshll.u32 %v1590, 16
      %v1624 = vrot.slane %v1622, 5
      %v1625 = vor.u32 %v1621, %v1624
      %v1626 = vrot.slane %v1625, 4
      %v1628 = vshll.u32 %v1591, 16
      %v1630 = vrot.slane %v1628, 5
      %v1631 = vsel %vm499, %v1626, %v1630
      %v1633 = vshrl.u32 %v1592, 16
      %v1635 = vrot.slane %v1633, 4
      %v1636 = vshll.u32 %v1592, 16
      %v1638 = vrot.slane %v1636, 5
      %v1639 = vor.u32 %v1635, %v1638
      %v1640 = vrot.slane %v1639, 4
      %v1642 = vshll.u32 %v1593, 16
      %v1644 = vrot.slane %v1642, 5
      %v1645 = vsel %vm499, %v1640, %v1644
      %v1647 = vshrl.u32 %v1594, 16
      %v1649 = vrot.slane %v1647, 4
      %v1650 = vshll.u32 %v1594, 16
      %v1652 = vrot.slane %v1650, 5
      %v1653 = vor.u32 %v1649, %v1652
      %v1654 = vrot.slane %v1653, 4
      %v1656 = vshll.u32 %v1595, 16
      %v1658 = vrot.slane %v1656, 5
      %v1659 = vsel %vm499, %v1654, %v1658
      %v1661 = vshrl.u32 %v1596, 16
      %v1663 = vrot.slane %v1661, 4
      %v1664 = vshll.u32 %v1596, 16
      %v1666 = vrot.slane %v1664, 5
      %v1667 = vor.u32 %v1663, %v1666
      %v1668 = vrot.slane %v1667, 4
      %v1670 = vshll.u32 %v1597, 16
      %v1672 = vrot.slane %v1670, 5
      %v1673 = vsel %vm499, %v1668, %v1672
      %v1675 = vshrl.u32 %v1598, 16
      %v1677 = vrot.slane %v1675, 4
      %v1678 = vshll.u32 %v1598, 16
      %v1680 = vrot.slane %v1678, 5
      %v1681 = vor.u32 %v1677, %v1680
      %v1682 = vrot.slane %v1681, 4
      %v1684 = vshll.u32 %v1599, 16
      %v1686 = vrot.slane %v1684, 5
      %v1687 = vsel %vm499, %v1682, %v1686
      %v1689 = vshrl.u32 %v1600, 16
      %v1691 = vrot.slane %v1689, 4
      %v1692 = vshll.u32 %v1600, 16
      %v1694 = vrot.slane %v1692, 5
      %v1695 = vor.u32 %v1691, %v1694
      %v1696 = vrot.slane %v1695, 4
      %v1698 = vshll.u32 %v1601, 16
      %v1700 = vrot.slane %v1698, 5
      %v1701 = vsel %vm499, %v1696, %v1700
      %v1703 = vshrl.u32 %v1602, 16
      %v1705 = vrot.slane %v1703, 4
      %v1706 = vshll.u32 %v1602, 16
      %v1708 = vrot.slane %v1706, 5
      %v1709 = vor.u32 %v1705, %v1708
      %v1710 = vrot.slane %v1709, 4
      %v1712 = vshll.u32 %v1603, 16
      %v1714 = vrot.slane %v1712, 5
      %v1715 = vsel %vm499, %v1710, %v1714
      %v1716 = vld [vmem:[%s3 + $0x1c] sm:$0xf]
      %v1717 = vunpack.c.l.b16 %v1617
      %v1718 = vunpack.c.l.b16 %v1631
      %v1719 = vunpack.c.l.b16 %v1645
      %v1720 = vunpack.c.l.b16 %v1659
      %v1721 = vunpack.c.l.b16 %v1673
      %v1722 = vunpack.c.l.b16 %v1687
      %v1723 = vunpack.c.l.b16 %v1701
      %v1724 = vunpack.c.l.b16 %v1715
      %v1725 = vpack.c.b16 %v1718, %v1717
      %v1726 = vpack.c.b16 %v1720, %v1719
      %v1727 = vpack.c.b16 %v1722, %v1721
      %v1728 = vpack.c.b16 %v1724, %v1723
      %v1730 = vsel %vm625, %v1725, 0
      %v1733 = vsel %vm625, %v1726, 0
      %v1736 = vsel %vm625, %v1727, 0
      %v1739 = vsel %vm625, %v1728, 0
      %v1742 = vsel %vm638, %v1716, 0
      %1744 = vmatprep.subr.bf16.mxu0 0
      %1745 = vmatpush1.bf16.msra.mxu0 0
      %1746 = vmatprep.subr.bf16.mxu0 0
      %1747 = vmatpush1.bf16.msra.mxu0 0
      %1748 = vmatprep.subr.bf16.mxu0 0
      %1749 = vmatpush1.bf16.msra.mxu0 0
      %1750 = vmatprep.subr.bf16.mxu0 0
      %1751 = vmatpush1.bf16.msra.mxu0 0
      %1752 = vmatprep.subr.bf16.mxu0 0
      %1753 = vmatpush1.bf16.msra.mxu0 0
      %1754 = vmatprep.subr.bf16.mxu0 0
      %1755 = vmatpush1.bf16.msra.mxu0 0
      %1756 = vmatprep.subr.bf16.mxu0 0
      %1757 = vmatpush1.bf16.msra.mxu0 0
      %1758 = vmatprep.subr.bf16.mxu0 0
      %1759 = vmatpush1.bf16.msra.mxu0 %v1742
      %1760 = vmatprep.subr.bf16.mxu0 0
      %1761 = vmatpush2.bf16.msra.mxu0 0
      %1762 = vmatprep.subr.bf16.mxu0 0
      %1763 = vmatpush2.bf16.msra.mxu0 0
      %1764 = vmatprep.subr.bf16.mxu0 0
      %1765 = vmatpush2.bf16.msra.mxu0 0
      %1766 = vmatprep.subr.bf16.mxu0 0
      %1767 = vmatpush2.bf16.msra.mxu0 0
      %1768 = vmatprep.subr.bf16.mxu0 0
      %1769 = vmatpush2.bf16.msra.mxu0 0
      %1770 = vmatprep.subr.bf16.mxu0 0
      %1771 = vmatpush2.bf16.msra.mxu0 0
      %1772 = vmatprep.subr.bf16.mxu0 0
      %1773 = vmatpush2.bf16.msra.mxu0 0
      %1774 = vmatprep.subr.bf16.mxu0 0
      %1775 = vmatpush2.bf16.msra.mxu0 0
      %1776 = vmatprep.mubr.bf16.mxu0 0
      %1777 = vmatmul.mubr.bf16.gmra.mxu0 %v1730
      %v1778 = vpop.f32.mrf.mxu0
      %v1779 = vadd.f32 0.0, %v1778
      %v1780 = vpop.f32.mrf.mxu0
      %v1781 = vpop.f32.mrf.mxu0
      %v1782 = vadd.f32 0.0, %v1781
      %v1783 = vpop.f32.mrf.mxu0
      %1784 = vmatprep.mubr.bf16.mxu0 0
      %1785 = vmatmul.mubr.bf16.gmra.mxu0 %v1733
      %v1786 = vpop.f32.mrf.mxu0
      %v1787 = vadd.f32 0.0, %v1786
      %v1788 = vpop.f32.mrf.mxu0
      %v1789 = vpop.f32.mrf.mxu0
      %v1790 = vadd.f32 0.0, %v1789
      %v1791 = vpop.f32.mrf.mxu0
      %1792 = vmatprep.mubr.bf16.mxu0 0
      %1793 = vmatmul.mubr.bf16.gmra.mxu0 %v1736
      %v1794 = vpop.f32.mrf.mxu0
      %v1795 = vadd.f32 0.0, %v1794
      %v1796 = vpop.f32.mrf.mxu0
      %v1797 = vpop.f32.mrf.mxu0
      %v1798 = vadd.f32 0.0, %v1797
      %v1799 = vpop.f32.mrf.mxu0
      %1800 = vmatprep.mubr.bf16.mxu0 0
      %1801 = vmatmul.mubr.bf16.gmra.mxu0 %v1739
      %v1802 = vpop.f32.mrf.mxu0
      %v1803 = vadd.f32 0.0, %v1802
      %v1804 = vpop.f32.mrf.mxu0
      %v1805 = vpop.f32.mrf.mxu0
      %v1806 = vadd.f32 0.0, %v1805
      %v1807 = vpop.f32.mrf.mxu0
      %1808 = vdwg.mxu0
      %v1809 = vadd.f32 %v1580, %v1779
      %v1810 = vadd.f32 %v1581, %v1782
      %v1811 = vadd.f32 %v1582, %v1787
      %v1812 = vadd.f32 %v1583, %v1790
      %v1813 = vadd.f32 %v1584, %v1795
      %v1814 = vadd.f32 %v1585, %v1798
      %v1815 = vadd.f32 %v1586, %v1803
      %v1816 = vadd.f32 %v1587, %v1806
      %v1817 = vld [vmem:[%s1470] sm:$0xe]
      %v1818 = vld [vmem:[%s1470 + $0x8] sm:$0xe]
      %v1819 = vld [vmem:[%s1470 + $0x10] sm:$0xe]
      %v1820 = vld [vmem:[%s1470 + $0x18] sm:$0xe]
      %v1821 = vld [vmem:[%s1470 + $0x20] sm:$0xe]
      %v1822 = vld [vmem:[%s1470 + $0x28] sm:$0xe]
      %v1823 = vld [vmem:[%s1470 + $0x30] sm:$0xe]
      %v1824 = vld [vmem:[%s1470 + $0x38] sm:$0xe]
      %v1841 = vrot.slane %v1817, 5
      %v1842 = vrot.slane %v1841, 4
      %v1843 = vrot.slane %v1589, 5
      %v1844 = vsel %vm833, %v1842, %v1843
      %v1845 = vrot.slane %v1818, 5
      %v1846 = vrot.slane %v1845, 4
      %v1847 = vrot.slane %v1591, 5
      %v1848 = vsel %vm833, %v1846, %v1847
      %v1849 = vrot.slane %v1819, 5
      %v1850 = vrot.slane %v1849, 4
      %v1851 = vrot.slane %v1593, 5
      %v1852 = vsel %vm833, %v1850, %v1851
      %v1853 = vrot.slane %v1820, 5
      %v1854 = vrot.slane %v1853, 4
      %v1855 = vrot.slane %v1595, 5
      %v1856 = vsel %vm833, %v1854, %v1855
      %v1857 = vrot.slane %v1821, 5
      %v1858 = vrot.slane %v1857, 4
      %v1859 = vrot.slane %v1597, 5
      %v1860 = vsel %vm833, %v1858, %v1859
      %v1861 = vrot.slane %v1822, 5
      %v1862 = vrot.slane %v1861, 4
      %v1863 = vrot.slane %v1599, 5
      %v1864 = vsel %vm833, %v1862, %v1863
      %v1865 = vrot.slane %v1823, 5
      %v1866 = vrot.slane %v1865, 4
      %v1867 = vrot.slane %v1601, 5
      %v1868 = vsel %vm833, %v1866, %v1867
      %v1869 = vrot.slane %v1824, 5
      %v1870 = vrot.slane %v1869, 4
      %v1871 = vrot.slane %v1603, 5
      %v1872 = vsel %vm833, %v1870, %v1871
      %v1873 = vld [vmem:[%s3 + $0x20] sm:$0xf]
      %v1874 = vunpack.c.l.b16 %v1844
      %v1875 = vunpack.c.l.b16 %v1848
      %v1876 = vunpack.c.l.b16 %v1852
      %v1877 = vunpack.c.l.b16 %v1856
      %v1878 = vunpack.c.l.b16 %v1860
      %v1879 = vunpack.c.l.b16 %v1864
      %v1880 = vunpack.c.l.b16 %v1868
      %v1881 = vunpack.c.l.b16 %v1872
      %v1882 = vpack.c.b16 %v1875, %v1874
      %v1883 = vpack.c.b16 %v1877, %v1876
      %v1884 = vpack.c.b16 %v1879, %v1878
      %v1885 = vpack.c.b16 %v1881, %v1880
      %v1887 = vsel %vm625, %v1882, 0
      %v1890 = vsel %vm625, %v1883, 0
      %v1893 = vsel %vm625, %v1884, 0
      %v1896 = vsel %vm625, %v1885, 0
      %v1899 = vsel %vm638, %v1873, 0
      %1901 = vmatprep.subr.bf16.mxu0 0
      %1902 = vmatpush1.bf16.msra.mxu0 0
      %1903 = vmatprep.subr.bf16.mxu0 0
      %1904 = vmatpush1.bf16.msra.mxu0 0
      %1905 = vmatprep.subr.bf16.mxu0 0
      %1906 = vmatpush1.bf16.msra.mxu0 0
      %1907 = vmatprep.subr.bf16.mxu0 0
      %1908 = vmatpush1.bf16.msra.mxu0 0
      %1909 = vmatprep.subr.bf16.mxu0 0
      %1910 = vmatpush1.bf16.msra.mxu0 0
      %1911 = vmatprep.subr.bf16.mxu0 0
      %1912 = vmatpush1.bf16.msra.mxu0 0
      %1913 = vmatprep.subr.bf16.mxu0 0
      %1914 = vmatpush1.bf16.msra.mxu0 0
      %1915 = vmatprep.subr.bf16.mxu0 0
      %1916 = vmatpush1.bf16.msra.mxu0 %v1899
      %1917 = vmatprep.subr.bf16.mxu0 0
      %1918 = vmatpush2.bf16.msra.mxu0 0
      %1919 = vmatprep.subr.bf16.mxu0 0
      %1920 = vmatpush2.bf16.msra.mxu0 0
      %1921 = vmatprep.subr.bf16.mxu0 0
      %1922 = vmatpush2.bf16.msra.mxu0 0
      %1923 = vmatprep.subr.bf16.mxu0 0
      %1924 = vmatpush2.bf16.msra.mxu0 0
      %1925 = vmatprep.subr.bf16.mxu0 0
      %1926 = vmatpush2.bf16.msra.mxu0 0
      %1927 = vmatprep.subr.bf16.mxu0 0
      %1928 = vmatpush2.bf16.msra.mxu0 0
      %1929 = vmatprep.subr.bf16.mxu0 0
      %1930 = vmatpush2.bf16.msra.mxu0 0
      %1931 = vmatprep.subr.bf16.mxu0 0
      %1932 = vmatpush2.bf16.msra.mxu0 0
      %1933 = vmatprep.mubr.bf16.mxu0 0
      %1934 = vmatmul.mubr.bf16.gmra.mxu0 %v1887
      %v1935 = vpop.f32.mrf.mxu0
      %v1936 = vadd.f32 0.0, %v1935
      %v1937 = vpop.f32.mrf.mxu0
      %v1938 = vpop.f32.mrf.mxu0
      %v1939 = vadd.f32 0.0, %v1938
      %v1940 = vpop.f32.mrf.mxu0
      %1941 = vmatprep.mubr.bf16.mxu0 0
      %1942 = vmatmul.mubr.bf16.gmra.mxu0 %v1890
      %v1943 = vpop.f32.mrf.mxu0
      %v1944 = vadd.f32 0.0, %v1943
      %v1945 = vpop.f32.mrf.mxu0
      %v1946 = vpop.f32.mrf.mxu0
      %v1947 = vadd.f32 0.0, %v1946
      %v1948 = vpop.f32.mrf.mxu0
      %1949 = vmatprep.mubr.bf16.mxu0 0
      %1950 = vmatmul.mubr.bf16.gmra.mxu0 %v1893
      %v1951 = vpop.f32.mrf.mxu0
      %v1952 = vadd.f32 0.0, %v1951
      %v1953 = vpop.f32.mrf.mxu0
      %v1954 = vpop.f32.mrf.mxu0
      %v1955 = vadd.f32 0.0, %v1954
      %v1956 = vpop.f32.mrf.mxu0
      %1957 = vmatprep.mubr.bf16.mxu0 0
      %1958 = vmatmul.mubr.bf16.gmra.mxu0 %v1896
      %v1959 = vpop.f32.mrf.mxu0
      %v1960 = vadd.f32 0.0, %v1959
      %v1961 = vpop.f32.mrf.mxu0
      %v1962 = vpop.f32.mrf.mxu0
      %v1963 = vadd.f32 0.0, %v1962
      %v1964 = vpop.f32.mrf.mxu0
      %1965 = vdwg.mxu0
      %v1966 = vadd.f32 %v1809, %v1936
      %v1967 = vadd.f32 %v1810, %v1939
      %v1968 = vadd.f32 %v1811, %v1944
      %v1969 = vadd.f32 %v1812, %v1947
      %v1970 = vadd.f32 %v1813, %v1952
      %v1971 = vadd.f32 %v1814, %v1955
      %v1972 = vadd.f32 %v1815, %v1960
      %v1973 = vadd.f32 %v1816, %v1963
      %v1974 = vpack.c.bf16 %v1966, %v1966
      %v1975 = vpack.c.bf16 %v1967, %v1967
      %v1976 = vpack.c.bf16 %v1968, %v1968
      %v1977 = vpack.c.bf16 %v1969, %v1969
      %v1978 = vpack.c.bf16 %v1970, %v1970
      %v1979 = vpack.c.bf16 %v1971, %v1971
      %v1980 = vpack.c.bf16 %v1972, %v1972
      %v1981 = vpack.c.bf16 %v1973, %v1973
      %1982 = vst.msk [vmem:[%s231] sm:$0xf] %vm291, %v1974
      %1983 = vst.msk [vmem:[%s231 + $0x4] sm:$0xf] %vm291, %v1975
      %1984 = vst.msk [vmem:[%s231 + $0x8] sm:$0xf] %vm291, %v1976
      %1985 = vst.msk [vmem:[%s231 + $0xc] sm:$0xf] %vm291, %v1977
      %1986 = vst.msk [vmem:[%s231 + $0x10] sm:$0xf] %vm291, %v1978
      %1987 = vst.msk [vmem:[%s231 + $0x14] sm:$0xf] %vm291, %v1979
      %1988 = vst.msk [vmem:[%s231 + $0x18] sm:$0xf] %vm291, %v1980
      %1989 = vst.msk [vmem:[%s231 + $0x1c] sm:$0xf] %vm291, %v1981
      %v1990 = vsel %vm625, %v1966, 0.0
      %v1991 = vsel %vm625, %v1967, 0.0
      %v1992 = vadd.f32 %v1990, %v1991
      %v1993 = vsel %vm625, %v1968, 0.0
      %v1994 = vadd.f32 %v1992, %v1993
      %v1995 = vsel %vm625, %v1969, 0.0
      %v1996 = vadd.f32 %v1994, %v1995
      %v1997 = vsel %vm625, %v1970, 0.0
      %v1998 = vadd.f32 %v1996, %v1997
      %v1999 = vsel %vm625, %v1971, 0.0
      %v2000 = vadd.f32 %v1998, %v1999
      %v2001 = vsel %vm625, %v1972, 0.0
      %v2002 = vadd.f32 %v2000, %v2001
      %v2003 = vsel %vm625, %v1973, 0.0
      %v2004 = vadd.f32 %v2002, %v2003
      %v2005 = vrot.slane %v2004, 4
      %v2006 = vadd.f32 %v2004, %v2005
      %v2007 = vrot.slane %v2006, 2
      %v2008 = vadd.f32 %v2006, %v2007
      %v2009 = vrot.slane %v2008, 1
      %v2010 = vadd.f32 %v2008, %v2009
      %v2011 = vmul.f32 %v1966, %v1966
      %v2012 = vmul.f32 %v1967, %v1967
      %v2013 = vmul.f32 %v1968, %v1968
      %v2014 = vmul.f32 %v1969, %v1969
      %v2015 = vmul.f32 %v1970, %v1970
      %v2016 = vmul.f32 %v1971, %v1971
      %v2017 = vmul.f32 %v1972, %v1972
      %v2018 = vmul.f32 %v1973, %v1973
      %v2019 = vsel %vm625, %v2011, 0.0
      %v2020 = vsel %vm625, %v2012, 0.0
      %v2021 = vadd.f32 %v2019, %v2020
      %v2022 = vsel %vm625, %v2013, 0.0
      %v2023 = vadd.f32 %v2021, %v2022
      %v2024 = vsel %vm625, %v2014, 0.0
      %v2025 = vadd.f32 %v2023, %v2024
      %v2026 = vsel %vm625, %v2015, 0.0
      %v2027 = vadd.f32 %v2025, %v2026
      %v2028 = vsel %vm625, %v2016, 0.0
      %v2029 = vadd.f32 %v2027, %v2028
      %v2030 = vsel %vm625, %v2017, 0.0
      %v2031 = vadd.f32 %v2029, %v2030
      %v2032 = vsel %vm625, %v2018, 0.0
      %v2033 = vadd.f32 %v2031, %v2032
      %v2034 = vrot.slane %v2033, 4
      %v2035 = vadd.f32 %v2033, %v2034
      %v2036 = vrot.slane %v2035, 2
      %v2037 = vadd.f32 %v2035, %v2036
      %v2038 = vrot.slane %v2037, 1
      %v2039 = vadd.f32 %v2037, %v2038
      %vm2040 = vcmask 1040384
      %v2041 = vsel %vm2040, %v2010, %v2039
      %vm2042 = vcmask 58368
      %2043 = vst.msk [vmem:[%s235] sm:$0x3] %vm2042, %v2041
      %p2044 = scmp.lt.s32.totalorder %s17, 1
      %s2045 = scalar_select %p2044, %s17, 1
      %s2046 = smul.addr %s2045, 8
      %s2047 = smul.addr %s2046, 4
      %s2048 = scalar_lea.vmem %s4, %s2047
      %p2049 = scmp.lt.s32.totalorder %s17, 1
      %s2050 = scalar_select %p2049, %s17, 1
      %s2051 = smul.addr %s2050, 2
      %s2052 = scalar_lea.vmem %s5, %s2051
      // Predicated region
      $region37: #{down_forward.3} parent=35 // pred_check
        %p2053 = pneg %p124
      $region38: #{down_forward.3} parent=35 // pred_check_branch
        %2055 = sbr.rel (%p2053) target = $region40
      $region39: #{down_forward.3} parent=35 // pred_region
        _
      $region40: #{down_forward.3} parent=35 // pred_fallthru
        _
      // Predicated region
      $region41: #{down_forward.3} parent=35 // pred_check
        %p2056 = pneg %p150
      $region42: #{down_forward.3} parent=35 // pred_check_branch
        %2058 = sbr.rel (%p2056) target = $region44
      $region43: #{down_forward.3} parent=35 // pred_region
        _
      $region44: #{down_forward.3} parent=35 // pred_fallthru
        _
    $region36: #{down_forward.3} parent=5 // pred_fallthru
      _
    %p2059 = scmp.le.s32.totalorder 2, %s12
    // Predicated region
    $region45: #{down_forward.3} parent=5 // pred_check
      %p2060 = pneg %p2059
    $region46: #{down_forward.3} parent=5 // pred_check_branch
      %2062 = sbr.rel (%p2060) target = $region48
    $region47: #{down_forward.3} parent=5 // pred_region
      %s2063 = ssub.s32 %s12, 2
      // Predicated region
      $region49: #{down_forward.3} parent=47 // pred_check
        %p2064 = pneg %p130
      $region50: #{down_forward.3} parent=47 // pred_check_branch
        %2066 = sbr.rel (%p2064) target = $region52
      $region51: #{down_forward.3} parent=47 // pred_region
        %p2067 = scmp.lt.s32.totalorder %s18, 1
        %s2068 = scalar_select %p2067, %s18, 1
        %s2069 = smul.addr %s2068, 8
        %s2070 = smul.addr %s2069, 4
        %s2071 = scalar_lea.vmem %s4, %s2070
      $region52: #{down_forward.3} parent=47 // pred_fallthru
        _
      // Predicated region
      $region53: #{down_forward.3} parent=47 // pred_check
        %p2072 = pneg %p156
      $region54: #{down_forward.3} parent=47 // pred_check_branch
        %2074 = sbr.rel (%p2072) target = $region56
      $region55: #{down_forward.3} parent=47 // pred_region
        %p2075 = scmp.lt.s32.totalorder %s18, 1
        %s2076 = scalar_select %p2075, %s18, 1
        %s2077 = smul.addr %s2076, 2
        %s2078 = scalar_lea.vmem %s5, %s2077
      $region56: #{down_forward.3} parent=47 // pred_fallthru
        _
    $region48: #{down_forward.3} parent=5 // pred_fallthru
      _
  $region6: #{down_forward.3} parent=0 // loop_footer
    %s16 = sadd.s32 1, %s12
  $region7: #{down_forward.3} parent=0 // loop_footer_branch
    %11 = sbr.rel target = $region3
  $region8: #{down_forward.3} parent=0 // loop_exit
    _

</llo_original>
